<compile_context>
chip_gen: v5e
topology: v5e:2x2
jax: 0.10.0
libtpu: 0.0.40
codegen_flags: <defaults>
</compile_context>

<pallas_src>
import functools

import jax
import jax.numpy as jnp
from jax import lax
from jax.experimental import pallas as pl
from jax.experimental.pallas import tpu as pltpu

BN_EPS = 1e-5
_MAX_BANDED_WEIGHT_BYTES = 8 << 20   # "few MiB" guard from the perf review


# ---------------------------------------------------------------------------
# Pallas kernel: 5 small MXU matmuls + ReLUs + one broadcast add per batch tile.
# ---------------------------------------------------------------------------
def contextual_cell_kernel(s_ref, w3_ref, w1_ref, wgap_ref, o_ref, *, inv_hw):
    """s_ref   : (NB, H+2, (W+2)*C)  zero-padded input, rows flattened to lanes
       w3_ref  : (3, (W+2)*C, W*C)   banded conv3x3 weights, one block per dy shift
       w1_ref  : ((W+2)*C, W*C)      banded conv1x1 weights (centre band)
       wgap_ref: (W*C, W*C)          GAP 1x1-conv weights, W-sum + W-broadcast folded in
       o_ref   : (NB, H, W*C)        cell output = relu(conv3x3) + broadcast(GAP branch)"""
    nb, hp, kp = s_ref.shape
    h = hp - 2
    wc = o_ref.shape[-1]

    # conv3x3: three accumulating MXU matmuls over dy-shifted views of the padded slab.
    s1 = s_ref[:, pl.ds(1, h), :].reshape(nb * h, kp)            # centre rows (reused)
    acc = jnp.dot(s1, w3_ref[1], preferred_element_type=jnp.float32)
    acc += jnp.dot(s_ref[:, pl.ds(0, h), :].reshape(nb * h, kp), w3_ref[0],
                   preferred_element_type=jnp.float32)
    acc += jnp.dot(s_ref[:, pl.ds(2, h), :].reshape(nb * h, kp), w3_ref[2],
                   preferred_element_type=jnp.float32)
    y3 = jnp.maximum(acc, 0.0)                                   # (NB*H, W*C), f32

    # conv1x1 branch: only feeds the GAP reduce, never written back to HBM.
    y1 = jnp.maximum(jnp.dot(s1, w1_ref[...], preferred_element_type=jnp.float32), 0.0)

    # GAP branch: spatial mean of relu(conv1x1) -> 1x1 conv -> ReLU -> broadcast.
    # NOTE: needs the full H extent of every image in one grid step; the grid
    # therefore tiles the batch only (never H).
    r = jnp.sum(y1.reshape(nb, h, wc), axis=1) * inv_hw          # (NB, W*C)
    gap = jnp.maximum(
        jnp.dot(r, wgap_ref[...], preferred_element_type=jnp.float32), 0.0)

    # AggregateCell (pre_transform=False, equal sizes): plain sum; broadcast over H.
    o_ref[...] = (y3.reshape(nb, h, wc) + gap[:, None, :]).astype(o_ref.dtype)


# ---------------------------------------------------------------------------
# Wrapper-side layout plumbing and constant weight construction.
# ---------------------------------------------------------------------------
def _build_fused_weights(w1, w3, wg, W, C):
    """Banded / tiled constant weights so the whole cell is a handful of matmuls.

    w3b[dy, j*C+ci,  w*C+co] = w3[dy, j-w, ci, co]   (0 <= j-w < 3)
    w1b[     j*C+ci, w*C+co] = w1[ci, co]            (j == w+1)
    wgap[  w'*C+ci,  w*C+co] = wg[ci, co]            (all w', w)
    """
    wp = W + 2
    wc = W * C
    j = jnp.arange(wp)
    dx = jnp.arange(3)
    wcol = jnp.arange(W)
    t3 = (j[:, None, None] == wcol[None, None, :] + dx[None, :, None]).astype(w3.dtype)
    w3b = jnp.einsum("jxw,yxio->yjiwo", t3, w3).reshape(3, wp * C, wc)
    t1 = (j[:, None] == wcol[None, :] + 1).astype(w1.dtype)
    w1b = jnp.einsum("jw,io->jiwo", t1, w1).reshape(wp * C, wc)
    wgap = jnp.tile(wg, (W, W))
    return w3b, w1b, wgap


def _check_banded_fits(w, c, operand_dtype):
    itemsize = jnp.dtype(operand_dtype).itemsize
    banded_bytes = 4 * (w + 2) * c * (w * c) * itemsize   # 3 conv3x3 blocks + conv1x1
    if c >= 128 or banded_bytes > _MAX_BANDED_WEIGHT_BYTES:
        # TODO(synk): for large C / W*C switch to per-tap K=C channel matmuls (direct
        # conv); the banded weights scale as (W*C)^2 and would blow VMEM / multiply zeros.
        raise NotImplementedError(
            "banded-Toeplitz fusion is only used for small C / W*C "
            f"(got C={c}, banded weights ~{banded_bytes / 2**20:.1f} MiB)")


def _vmem_limit_bytes():
    """~3/4 of physical VMEM, capped; conservative fallback is safe on v7x (64 MiB/TC)."""
    try:
        cap = int(pltpu.get_tpu_info().vmem_capacity_bytes)
    except Exception:
        cap = 64 << 20
    return int(max(32 << 20, min(cap * 3 // 4, 100 << 20)))


def _pick_batch_tile(n, h, w, c, operand_bytes, vmem_limit):
    """Images per grid step, sized by VMEM bytes (few-MiB blocks), requiring NB | N
    and >= 2 grid steps whenever N > 1 (pipelining overlap + v7x dual-TC sharding).
    NB is a leading dim, so it carries no (8,128) constraint."""
    per_image = (h + 2) * (w + 2) * c * operand_bytes + h * w * c * 4   # in + out block
    budget = min(8 << 20, vmem_limit // 4)   # leaves room for double-buffering + weights
    best = 1
    for d in range(1, n + 1):
        if n % d:
            continue
        if d * per_image > budget:
            break
        if n // d >= 2 or n == 1:
            best = d
    return best


def contextual_cell(x_nchw, w1, w3, wg, *, operand_dtype=jnp.bfloat16):
    """x_nchw: (N, C, H, W).  w1, wg: (Cin, Cout); w3: (kh, kw, Cin, Cout); BN folded.
    Matmul operands default to bf16 (MXU-native on v5e/v6e/v7x, halves operand HBM/VMEM
    traffic); accumulation stays f32.  Pass operand_dtype=jnp.float32 for bit-tight checks."""
    n, c, h, w = x_nchw.shape
    wc = w * c
    kp = (w + 2) * c
    _check_banded_fits(w, c, operand_dtype)

    # Layout plumbing only (no activation arithmetic in the wrapper): NCHW -> NHWC,
    # zero-pad spatially, flatten rows to (W+2)*C lanes, cast operands.
    # TODO(synk): accept/return NHWC (or fuse the final reshape/transpose into the
    # consumer) to drop two more wrapper-side HBM passes.
    x = jnp.transpose(x_nchw, (0, 2, 3, 1))
    xp = jnp.pad(x, ((0, 0), (1, 1), (1, 1), (0, 0)))
    s_all = xp.reshape(n, h + 2, kp).astype(operand_dtype)

    w3b, w1b, wgap = _build_fused_weights(w1, w3, wg, w, c)
    w3b = w3b.astype(operand_dtype)
    w1b = w1b.astype(operand_dtype)
    wgap = wgap.astype(jnp.float32)           # tiny GAP matmul stays f32

    vmem_limit = _vmem_limit_bytes()
    nb = _pick_batch_tile(n, h, w, c, jnp.dtype(operand_dtype).itemsize, vmem_limit)
    grid = (n // nb,)

    kernel = functools.partial(contextual_cell_kernel, inv_hw=1.0 / float(h * w))
    out_slab = pl.pallas_call(
        kernel,
        out_shape=jax.ShapeDtypeStruct((n, h, wc), jnp.float32),
        grid=grid,
        in_specs=[
            pl.BlockSpec((nb, h + 2, kp), lambda i: (i, 0, 0)),
            # Constant-index weights (tiny here); pipeline_mode=pl.Buffered(1) would
            # drop their second VMEM buffer once they become non-trivial in size.
            pl.BlockSpec((3, kp, wc), lambda i: (0, 0, 0)),
            pl.BlockSpec((kp, wc), lambda i: (0, 0)),
            pl.BlockSpec((wc, wc), lambda i: (0, 0)),
        ],
        out_specs=pl.BlockSpec((nb, h, wc), lambda i: (i, 0, 0)),
        compiler_params=pltpu.CompilerParams(
            dimension_semantics=("parallel",),
            vmem_limit_bytes=vmem_limit,
        ),
    )(s_all, w3b, w1b, wgap)

    # Layout only: back to NCHW.
    out_nhwc = out_slab.reshape(n, h, w, c)
    return jnp.transpose(out_nhwc, (0, 3, 1, 2)).astype(x_nchw.dtype)


# ---------------------------------------------------------------------------
# Parameters and pure-JAX reference
# ---------------------------------------------------------------------------
def init_params(key, c):
    """Deterministic synthetic parameters, PyTorch conv layout (Cout, Cin, kh, kw),
    with inference-mode BatchNorm (mean=0, var=1, gamma=1, beta=0) folded in.
    Returned in kernel/reference layouts: (Cin, Cout) and (kh, kw, Cin, Cout)."""
    k1, k2, k3 = jax.random.split(key, 3)
    bn_scale = 1.0 / jnp.sqrt(1.0 + BN_EPS)
    w1_t = jax.random.normal(k1, (c, c, 1, 1), jnp.float32) * 0.1   # conv1x1
    w3_t = jax.random.normal(k2, (c, c, 3, 3), jnp.float32) * 0.1   # conv3x3
    wg_t = jax.random.normal(k3, (c, c, 1, 1), jnp.float32) * 0.1   # GAP conv1x1
    w1 = jnp.transpose(w1_t[:, :, 0, 0], (1, 0)) * bn_scale
    w3 = jnp.transpose(w3_t, (2, 3, 1, 0)) * bn_scale
    wg = jnp.transpose(wg_t[:, :, 0, 0], (1, 0)) * bn_scale
    return w1, w3, wg


def reference_forward_nhwc(x, w1, w3, wg):
    """Pure-JAX reference of the same ContextualCell config (NHWC)."""
    f1 = jax.nn.relu(jnp.einsum("nhwc,cd->nhwd", x, w1))
    f2 = jax.nn.relu(
        lax.conv_general_dilated(
            x, w3, window_strides=(1, 1), padding="SAME",
            dimension_numbers=("NHWC", "HWIO", "NHWC"),
        )
    )
    g = jax.nn.relu(jnp.einsum("nc,cd->nd", jnp.mean(f1, axis=(1, 2)), wg))
    return f2 + g[:, None, None, :]


# TODO(synk): only the ops exercised by config=[0,[0,1,1,4]] (conv1x1, conv3x3,
# global_average_pool, sum-aggregate) are implemented; the sep/dilated conv,
# skip_connect and none ops from OP_NAMES are unused by this config.

if __name__ == "__main__":
    key = jax.random.PRNGKey(0)
    kx, kparam = jax.random.split(key)

    N, C, H, W = 2, 4, 16, 16
    x_nchw = jax.random.normal(kx, (N, C, H, W), jnp.float32)
    w1, w3, wg = init_params(kparam, C)

    # pure-JAX f32 reference
    x_nhwc = jnp.transpose(x_nchw, (0, 2, 3, 1))
    ref = jnp.transpose(reference_forward_nhwc(x_nhwc, w1, w3, wg), (0, 3, 1, 2))
    ref = jax.block_until_ready(ref)

    # default path: bf16 matmul operands, f32 accumulation
    out = jax.block_until_ready(jax.jit(contextual_cell)(x_nchw, w1, w3, wg))
    assert out.shape == (N, C, H, W)
    assert jnp.allclose(out, ref, atol=5e-2, rtol=5e-2), "bf16-operand mismatch vs reference"

    # tight structural check with f32 operands
    fwd_f32 = jax.jit(functools.partial(contextual_cell, operand_dtype=jnp.float32))
    out_f32 = jax.block_until_ready(fwd_f32(x_nchw, w1, w3, wg))
    assert jnp.allclose(out_f32, ref, atol=1e-4, rtol=1e-4), "f32-operand mismatch vs reference"

    print("KERNEL_OK")
</pallas_src>

<mosaic_0001>
module attributes {stable_mosaic.version = 11 : i64} {
  func.func @contextual_cell_kernel(%arg0: i32, %arg1: memref<1x18x72xbf16, #tpu.memory_space<vmem>>, %arg2: memref<3x72x64xbf16, #tpu.memory_space<vmem>>, %arg3: memref<72x64xbf16, #tpu.memory_space<vmem>>, %arg4: memref<64x64xf32, #tpu.memory_space<vmem>>, %arg5: memref<1x16x64xf32, #tpu.memory_space<vmem>>) attributes {dimension_semantics = [#tpu.dimension_semantics<parallel>], iteration_bounds = array<i64: 2>, scalar_prefetch = 0 : i64, scratch_operands = 0 : i64, tpu.core_type = #tpu.core_type<tc>, window_params = [{transform_indices = @transform_0, window_bounds = array<i64: 1, 18, 72>}, {pipeline_mode = #tpu.pipeline_mode<synchronous>, transform_indices = @transform_1, window_bounds = array<i64: 3, 72, 64>}, {pipeline_mode = #tpu.pipeline_mode<synchronous>, transform_indices = @transform_2, window_bounds = array<i64: 72, 64>}, {pipeline_mode = #tpu.pipeline_mode<synchronous>, transform_indices = @transform_3, window_bounds = array<i64: 64, 64>}, {transform_indices = @transform_4, window_bounds = array<i64: 1, 16, 64>}]} {
    %c0 = arith.constant 0 : index
    %c1 = arith.constant 1 : index
    %c0_0 = arith.constant 0 : index
    %0 = vector.load %arg1[%c0, %c1, %c0_0] : memref<1x18x72xbf16, #tpu.memory_space<vmem>>, vector<1x16x72xbf16>
    %1 = vector.shape_cast %0 : vector<1x16x72xbf16> to vector<16x72xbf16>
    %c1_1 = arith.constant 1 : index
    %c0_2 = arith.constant 0 : index
    %c0_3 = arith.constant 0 : index
    %2 = vector.load %arg2[%c1_1, %c0_2, %c0_3] : memref<3x72x64xbf16, #tpu.memory_space<vmem>>, vector<1x72x64xbf16>
    %3 = vector.shape_cast %2 : vector<1x72x64xbf16> to vector<72x64xbf16>
    %cst = arith.constant dense<0.000000e+00> : vector<16x64xf32>
    %4 = tpu.matmul %1, %3, %cst {dimension_numbers = #tpu.dot_dimension_numbers<[1], [0], [0], [1], [0, 0, 1, 1], [], []>} : vector<16x72xbf16>, vector<72x64xbf16>, vector<16x64xf32> -> vector<16x64xf32>
    %c0_4 = arith.constant 0 : index
    %c0_5 = arith.constant 0 : index
    %c0_6 = arith.constant 0 : index
    %5 = vector.load %arg1[%c0_4, %c0_5, %c0_6] : memref<1x18x72xbf16, #tpu.memory_space<vmem>>, vector<1x16x72xbf16>
    %6 = vector.shape_cast %5 : vector<1x16x72xbf16> to vector<16x72xbf16>
    %c0_7 = arith.constant 0 : index
    %c0_8 = arith.constant 0 : index
    %c0_9 = arith.constant 0 : index
    %7 = vector.load %arg2[%c0_7, %c0_8, %c0_9] : memref<3x72x64xbf16, #tpu.memory_space<vmem>>, vector<1x72x64xbf16>
    %8 = vector.shape_cast %7 : vector<1x72x64xbf16> to vector<72x64xbf16>
    %cst_10 = arith.constant dense<0.000000e+00> : vector<16x64xf32>
    %9 = tpu.matmul %6, %8, %cst_10 {dimension_numbers = #tpu.dot_dimension_numbers<[1], [0], [0], [1], [0, 0, 1, 1], [], []>} : vector<16x72xbf16>, vector<72x64xbf16>, vector<16x64xf32> -> vector<16x64xf32>
    %10 = arith.addf %4, %9 : vector<16x64xf32>
    %c0_11 = arith.constant 0 : index
    %c2 = arith.constant 2 : index
    %c0_12 = arith.constant 0 : index
    %11 = vector.load %arg1[%c0_11, %c2, %c0_12] : memref<1x18x72xbf16, #tpu.memory_space<vmem>>, vector<1x16x72xbf16>
    %12 = vector.shape_cast %11 : vector<1x16x72xbf16> to vector<16x72xbf16>
    %c2_13 = arith.constant 2 : index
    %c0_14 = arith.constant 0 : index
    %c0_15 = arith.constant 0 : index
    %13 = vector.load %arg2[%c2_13, %c0_14, %c0_15] : memref<3x72x64xbf16, #tpu.memory_space<vmem>>, vector<1x72x64xbf16>
    %14 = vector.shape_cast %13 : vector<1x72x64xbf16> to vector<72x64xbf16>
    %cst_16 = arith.constant dense<0.000000e+00> : vector<16x64xf32>
    %15 = tpu.matmul %12, %14, %cst_16 {dimension_numbers = #tpu.dot_dimension_numbers<[1], [0], [0], [1], [0, 0, 1, 1], [], []>} : vector<16x72xbf16>, vector<72x64xbf16>, vector<16x64xf32> -> vector<16x64xf32>
    %16 = arith.addf %10, %15 : vector<16x64xf32>
    %cst_17 = arith.constant 0.000000e+00 : f32
    %17 = vector.broadcast %cst_17 : f32 to vector<16x64xf32>
    %18 = arith.maximumf %16, %17 : vector<16x64xf32>
    %c0_18 = arith.constant 0 : index
    %c0_19 = arith.constant 0 : index
    %19 = vector.load %arg3[%c0_18, %c0_19] : memref<72x64xbf16, #tpu.memory_space<vmem>>, vector<72x64xbf16>
    %cst_20 = arith.constant dense<0.000000e+00> : vector<16x64xf32>
    %20 = tpu.matmul %1, %19, %cst_20 {dimension_numbers = #tpu.dot_dimension_numbers<[1], [0], [0], [1], [0, 0, 1, 1], [], []>} : vector<16x72xbf16>, vector<72x64xbf16>, vector<16x64xf32> -> vector<16x64xf32>
    %cst_21 = arith.constant 0.000000e+00 : f32
    %21 = vector.broadcast %cst_21 : f32 to vector<16x64xf32>
    %22 = arith.maximumf %20, %21 : vector<16x64xf32>
    %23 = vector.shape_cast %22 : vector<16x64xf32> to vector<1x16x64xf32>
    %cst_22 = arith.constant dense<0.000000e+00> : vector<1x64xf32>
    %24 = vector.multi_reduction <add>, %23, %cst_22 [1] : vector<1x16x64xf32> to vector<1x64xf32>
    %cst_23 = arith.constant 3.906250e-03 : f32
    %25 = vector.broadcast %cst_23 : f32 to vector<1x64xf32>
    %26 = arith.mulf %24, %25 : vector<1x64xf32>
    %c0_24 = arith.constant 0 : index
    %c0_25 = arith.constant 0 : index
    %27 = vector.load %arg4[%c0_24, %c0_25] : memref<64x64xf32, #tpu.memory_space<vmem>>, vector<64x64xf32>
    %cst_26 = arith.constant dense<0.000000e+00> : vector<1x64xf32>
    %28 = tpu.matmul %26, %27, %cst_26 {dimension_numbers = #tpu.dot_dimension_numbers<[1], [0], [0], [1], [0, 0, 1, 1], [], []>} : vector<1x64xf32>, vector<64x64xf32>, vector<1x64xf32> -> vector<1x64xf32>
    %cst_27 = arith.constant 0.000000e+00 : f32
    %29 = vector.broadcast %cst_27 : f32 to vector<1x64xf32>
    %30 = arith.maximumf %28, %29 : vector<1x64xf32>
    %31 = vector.shape_cast %18 : vector<16x64xf32> to vector<1x16x64xf32>
    %32 = vector.shape_cast %30 : vector<1x64xf32> to vector<1x1x64xf32>
    %33 = vector.broadcast %32 : vector<1x1x64xf32> to vector<1x16x64xf32>
    %34 = arith.addf %31, %33 : vector<1x16x64xf32>
    %c0_28 = arith.constant 0 : index
    %c0_29 = arith.constant 0 : index
    %c0_30 = arith.constant 0 : index
    %35 = vector.load %arg5[%c0_28, %c0_29, %c0_30] : memref<1x16x64xf32, #tpu.memory_space<vmem>>, vector<1x16x64xf32>
    tpu.vector_store %arg5[%c0_28, %c0_29, %c0_30], %34 {strides = array<i32>} : memref<1x16x64xf32, #tpu.memory_space<vmem>>, vector<1x16x64xf32>,
    return
  }
  func.func @transform_0(%arg0: i32) -> (i32, i32, i32) {
    %c0_i32 = arith.constant 0 : i32
    %c0_i32_0 = arith.constant 0 : i32
    %c0_i32_1 = arith.constant 0 : i32
    return %arg0, %c0_i32, %c0_i32_0 : i32, i32, i32
  }
  func.func @transform_1(%arg0: i32) -> (i32, i32, i32) {
    %c0_i32 = arith.constant 0 : i32
    %c0_i32_0 = arith.constant 0 : i32
    %c0_i32_1 = arith.constant 0 : i32
    %c0_i32_2 = arith.constant 0 : i32
    return %c0_i32, %c0_i32_0, %c0_i32_1 : i32, i32, i32
  }
  func.func @transform_2(%arg0: i32) -> (i32, i32) {
    %c0_i32 = arith.constant 0 : i32
    %c0_i32_0 = arith.constant 0 : i32
    %c0_i32_1 = arith.constant 0 : i32
    return %c0_i32, %c0_i32_0 : i32, i32
  }
  func.func @transform_3(%arg0: i32) -> (i32, i32) {
    %c0_i32 = arith.constant 0 : i32
    %c0_i32_0 = arith.constant 0 : i32
    %c0_i32_1 = arith.constant 0 : i32
    return %c0_i32, %c0_i32_0 : i32, i32
  }
  func.func @transform_4(%arg0: i32) -> (i32, i32, i32) {
    %c0_i32 = arith.constant 0 : i32
    %c0_i32_0 = arith.constant 0 : i32
    %c0_i32_1 = arith.constant 0 : i32
    return %arg0, %c0_i32, %c0_i32_0 : i32, i32, i32
  }
}

</mosaic_0001>

<llo_original>
// kernel: tile.8
$region0: #{tile.8}
  #allocation0 [shape = 's32[1]{0}', space=sflag, size = 0x4, scoped, tag = 'scoped memory for tile.8']
  %s0 = inlined_call_operand.vmem [shape: f32[4,4], index: 0, kind: input, shape index: {}]
  %s1 = inlined_call_operand.vmem [shape: f32[16,4,16,4], index: 1, kind: output, shape index: {}]
  // Predicated region
  $region2: #{tile.8} parent=0 // pred_check
    _
  $region3: #{tile.8} parent=0 // pred_check_branch
    %3 = sbr.rel (0) target = $region5
  $region4: #{tile.8} parent=0 // pred_region
    _
  $region5: #{tile.8} parent=0 // pred_fallthru
    _
  %v4 = vld [vmem:[%s0] ss:$0 sm:$0xff]
  %5 = vst [vmem:[%s1] sm:$0xff] %v4
  %s6 = scalar_lea.vmem %s1, 64
  %7 = vst [vmem:[%s6] sm:$0xff] %v4
  %s8 = scalar_lea.vmem %s1, 128
  %9 = vst [vmem:[%s8] sm:$0xff] %v4
  %s10 = scalar_lea.vmem %s1, 192
  %11 = vst [vmem:[%s10] sm:$0xff] %v4
  %s12 = scalar_lea.vmem %s1, 256
  %13 = vst [vmem:[%s12] sm:$0xff] %v4
  %s14 = scalar_lea.vmem %s1, 320
  %15 = vst [vmem:[%s14] sm:$0xff] %v4
  %s16 = scalar_lea.vmem %s1, 384
  %17 = vst [vmem:[%s16] sm:$0xff] %v4
  %s18 = scalar_lea.vmem %s1, 448
  %19 = vst [vmem:[%s18] sm:$0xff] %v4
  %s20 = scalar_lea.vmem %s1, 512
  %21 = vst [vmem:[%s20] sm:$0xff] %v4
  %s22 = scalar_lea.vmem %s1, 576
  %23 = vst [vmem:[%s22] sm:$0xff] %v4
  %s24 = scalar_lea.vmem %s1, 640
  %25 = vst [vmem:[%s24] sm:$0xff] %v4
  %s26 = scalar_lea.vmem %s1, 704
  %27 = vst [vmem:[%s26] sm:$0xff] %v4
  %s28 = scalar_lea.vmem %s1, 768
  %29 = vst [vmem:[%s28] sm:$0xff] %v4
  %s30 = scalar_lea.vmem %s1, 832
  %31 = vst [vmem:[%s30] sm:$0xff] %v4
  %s32 = scalar_lea.vmem %s1, 896
  %33 = vst [vmem:[%s32] sm:$0xff] %v4
  %s34 = scalar_lea.vmem %s1, 960
  %35 = vst [vmem:[%s34] sm:$0xff] %v4
  %s36 = scalar_lea.vmem %s0, 1
  %v37 = vld [vmem:[%s36] ss:$0 sm:$0xff]
  %s38 = scalar_lea.vmem %s1, 16
  %39 = vst [vmem:[%s38] sm:$0xff] %v37
  %s40 = scalar_lea.vmem %s1, 80
  %41 = vst [vmem:[%s40] sm:$0xff] %v37
  %s42 = scalar_lea.vmem %s1, 144
  %43 = vst [vmem:[%s42] sm:$0xff] %v37
  %s44 = scalar_lea.vmem %s1, 208
  %45 = vst [vmem:[%s44] sm:$0xff] %v37
  %s46 = scalar_lea.vmem %s1, 272
  %47 = vst [vmem:[%s46] sm:$0xff] %v37
  %s48 = scalar_lea.vmem %s1, 336
  %49 = vst [vmem:[%s48] sm:$0xff] %v37
  %s50 = scalar_lea.vmem %s1, 400
  %51 = vst [vmem:[%s50] sm:$0xff] %v37
  %s52 = scalar_lea.vmem %s1, 464
  %53 = vst [vmem:[%s52] sm:$0xff] %v37
  %s54 = scalar_lea.vmem %s1, 528
  %55 = vst [vmem:[%s54] sm:$0xff] %v37
  %s56 = scalar_lea.vmem %s1, 592
  %57 = vst [vmem:[%s56] sm:$0xff] %v37
  %s58 = scalar_lea.vmem %s1, 656
  %59 = vst [vmem:[%s58] sm:$0xff] %v37
  %s60 = scalar_lea.vmem %s1, 720
  %61 = vst [vmem:[%s60] sm:$0xff] %v37
  %s62 = scalar_lea.vmem %s1, 784
  %63 = vst [vmem:[%s62] sm:$0xff] %v37
  %s64 = scalar_lea.vmem %s1, 848
  %65 = vst [vmem:[%s64] sm:$0xff] %v37
  %s66 = scalar_lea.vmem %s1, 912
  %67 = vst [vmem:[%s66] sm:$0xff] %v37
  %s68 = scalar_lea.vmem %s1, 976
  %69 = vst [vmem:[%s68] sm:$0xff] %v37
  %s70 = scalar_lea.vmem %s0, 2
  %v71 = vld [vmem:[%s70] ss:$0 sm:$0xff]
  %s72 = scalar_lea.vmem %s1, 32
  %73 = vst [vmem:[%s72] sm:$0xff] %v71
  %s74 = scalar_lea.vmem %s1, 96
  %75 = vst [vmem:[%s74] sm:$0xff] %v71
  %s76 = scalar_lea.vmem %s1, 160
  %77 = vst [vmem:[%s76] sm:$0xff] %v71
  %s78 = scalar_lea.vmem %s1, 224
  %79 = vst [vmem:[%s78] sm:$0xff] %v71
  %s80 = scalar_lea.vmem %s1, 288
  %81 = vst [vmem:[%s80] sm:$0xff] %v71
  %s82 = scalar_lea.vmem %s1, 352
  %83 = vst [vmem:[%s82] sm:$0xff] %v71
  %s84 = scalar_lea.vmem %s1, 416
  %85 = vst [vmem:[%s84] sm:$0xff] %v71
  %s86 = scalar_lea.vmem %s1, 480
  %87 = vst [vmem:[%s86] sm:$0xff] %v71
  %s88 = scalar_lea.vmem %s1, 544
  %89 = vst [vmem:[%s88] sm:$0xff] %v71
  %s90 = scalar_lea.vmem %s1, 608
  %91 = vst [vmem:[%s90] sm:$0xff] %v71
  %s92 = scalar_lea.vmem %s1, 672
  %93 = vst [vmem:[%s92] sm:$0xff] %v71
  %s94 = scalar_lea.vmem %s1, 736
  %95 = vst [vmem:[%s94] sm:$0xff] %v71
  %s96 = scalar_lea.vmem %s1, 800
  %97 = vst [vmem:[%s96] sm:$0xff] %v71
  %s98 = scalar_lea.vmem %s1, 864
  %99 = vst [vmem:[%s98] sm:$0xff] %v71
  %s100 = scalar_lea.vmem %s1, 928
  %101 = vst [vmem:[%s100] sm:$0xff] %v71
  %s102 = scalar_lea.vmem %s1, 992
  %103 = vst [vmem:[%s102] sm:$0xff] %v71
  %s104 = scalar_lea.vmem %s0, 3
  %v105 = vld [vmem:[%s104] ss:$0 sm:$0xff]
  %s106 = scalar_lea.vmem %s1, 48
  %107 = vst [vmem:[%s106] sm:$0xff] %v105
  %s108 = scalar_lea.vmem %s1, 112
  %109 = vst [vmem:[%s108] sm:$0xff] %v105
  %s110 = scalar_lea.vmem %s1, 176
  %111 = vst [vmem:[%s110] sm:$0xff] %v105
  %s112 = scalar_lea.vmem %s1, 240
  %113 = vst [vmem:[%s112] sm:$0xff] %v105
  %s114 = scalar_lea.vmem %s1, 304
  %115 = vst [vmem:[%s114] sm:$0xff] %v105
  %s116 = scalar_lea.vmem %s1, 368
  %117 = vst [vmem:[%s116] sm:$0xff] %v105
  %s118 = scalar_lea.vmem %s1, 432
  %119 = vst [vmem:[%s118] sm:$0xff] %v105
  %s120 = scalar_lea.vmem %s1, 496
  %121 = vst [vmem:[%s120] sm:$0xff] %v105
  %s122 = scalar_lea.vmem %s1, 560
  %123 = vst [vmem:[%s122] sm:$0xff] %v105
  %s124 = scalar_lea.vmem %s1, 624
  %125 = vst [vmem:[%s124] sm:$0xff] %v105
  %s126 = scalar_lea.vmem %s1, 688
  %127 = vst [vmem:[%s126] sm:$0xff] %v105
  %s128 = scalar_lea.vmem %s1, 752
  %129 = vst [vmem:[%s128] sm:$0xff] %v105
  %s130 = scalar_lea.vmem %s1, 816
  %131 = vst [vmem:[%s130] sm:$0xff] %v105
  %s132 = scalar_lea.vmem %s1, 880
  %133 = vst [vmem:[%s132] sm:$0xff] %v105
  %s134 = scalar_lea.vmem %s1, 944
  %135 = vst [vmem:[%s134] sm:$0xff] %v105
  %s136 = scalar_lea.vmem %s1, 1008
  %137 = vst [vmem:[%s136] sm:$0xff] %v105
  %s138 = scalar_lea.vmem %s1, 8
  %139 = vst [vmem:[%s138] sm:$0xff] %v4
  %s140 = scalar_lea.vmem %s1, 72
  %141 = vst [vmem:[%s140] sm:$0xff] %v4
  %s142 = scalar_lea.vmem %s1, 136
  %143 = vst [vmem:[%s142] sm:$0xff] %v4
  %s144 = scalar_lea.vmem %s1, 200
  %145 = vst [vmem:[%s144] sm:$0xff] %v4
  %s146 = scalar_lea.vmem %s1, 264
  %147 = vst [vmem:[%s146] sm:$0xff] %v4
  %s148 = scalar_lea.vmem %s1, 328
  %149 = vst [vmem:[%s148] sm:$0xff] %v4
  %s150 = scalar_lea.vmem %s1, 392
  %151 = vst [vmem:[%s150] sm:$0xff] %v4
  %s152 = scalar_lea.vmem %s1, 456
  %153 = vst [vmem:[%s152] sm:$0xff] %v4
  %s154 = scalar_lea.vmem %s1, 520
  %155 = vst [vmem:[%s154] sm:$0xff] %v4
  %s156 = scalar_lea.vmem %s1, 584
  %157 = vst [vmem:[%s156] sm:$0xff] %v4
  %s158 = scalar_lea.vmem %s1, 648
  %159 = vst [vmem:[%s158] sm:$0xff] %v4
  %s160 = scalar_lea.vmem %s1, 712
  %161 = vst [vmem:[%s160] sm:$0xff] %v4
  %s162 = scalar_lea.vmem %s1, 776
  %163 = vst [vmem:[%s162] sm:$0xff] %v4
  %s164 = scalar_lea.vmem %s1, 840
  %165 = vst [vmem:[%s164] sm:$0xff] %v4
  %s166 = scalar_lea.vmem %s1, 904
  %167 = vst [vmem:[%s166] sm:$0xff] %v4
  %s168 = scalar_lea.vmem %s1, 968
  %169 = vst [vmem:[%s168] sm:$0xff] %v4
  %s170 = scalar_lea.vmem %s1, 24
  %171 = vst [vmem:[%s170] sm:$0xff] %v37
  %s172 = scalar_lea.vmem %s1, 88
  %173 = vst [vmem:[%s172] sm:$0xff] %v37
  %s174 = scalar_lea.vmem %s1, 152
  %175 = vst [vmem:[%s174] sm:$0xff] %v37
  %s176 = scalar_lea.vmem %s1, 216
  %177 = vst [vmem:[%s176] sm:$0xff] %v37
  %s178 = scalar_lea.vmem %s1, 280
  %179 = vst [vmem:[%s178] sm:$0xff] %v37
  %s180 = scalar_lea.vmem %s1, 344
  %181 = vst [vmem:[%s180] sm:$0xff] %v37
  %s182 = scalar_lea.vmem %s1, 408
  %183 = vst [vmem:[%s182] sm:$0xff] %v37
  %s184 = scalar_lea.vmem %s1, 472
  %185 = vst [vmem:[%s184] sm:$0xff] %v37
  %s186 = scalar_lea.vmem %s1, 536
  %187 = vst [vmem:[%s186] sm:$0xff] %v37
  %s188 = scalar_lea.vmem %s1, 600
  %189 = vst [vmem:[%s188] sm:$0xff] %v37
  %s190 = scalar_lea.vmem %s1, 664
  %191 = vst [vmem:[%s190] sm:$0xff] %v37
  %s192 = scalar_lea.vmem %s1, 728
  %193 = vst [vmem:[%s192] sm:$0xff] %v37
  %s194 = scalar_lea.vmem %s1, 792
  %195 = vst [vmem:[%s194] sm:$0xff] %v37
  %s196 = scalar_lea.vmem %s1, 856
  %197 = vst [vmem:[%s196] sm:$0xff] %v37
  %s198 = scalar_lea.vmem %s1, 920
  %199 = vst [vmem:[%s198] sm:$0xff] %v37
  %s200 = scalar_lea.vmem %s1, 984
  %201 = vst [vmem:[%s200] sm:$0xff] %v37
  %s202 = scalar_lea.vmem %s1, 40
  %203 = vst [vmem:[%s202] sm:$0xff] %v71
  %s204 = scalar_lea.vmem %s1, 104
  %205 = vst [vmem:[%s204] sm:$0xff] %v71
  %s206 = scalar_lea.vmem %s1, 168
  %207 = vst [vmem:[%s206] sm:$0xff] %v71
  %s208 = scalar_lea.vmem %s1, 232
  %209 = vst [vmem:[%s208] sm:$0xff] %v71
  %s210 = scalar_lea.vmem %s1, 296
  %211 = vst [vmem:[%s210] sm:$0xff] %v71
  %s212 = scalar_lea.vmem %s1, 360
  %213 = vst [vmem:[%s212] sm:$0xff] %v71
  %s214 = scalar_lea.vmem %s1, 424
  %215 = vst [vmem:[%s214] sm:$0xff] %v71
  %s216 = scalar_lea.vmem %s1, 488
  %217 = vst [vmem:[%s216] sm:$0xff] %v71
  %s218 = scalar_lea.vmem %s1, 552
  %219 = vst [vmem:[%s218] sm:$0xff] %v71
  %s220 = scalar_lea.vmem %s1, 616
  %221 = vst [vmem:[%s220] sm:$0xff] %v71
  %s222 = scalar_lea.vmem %s1, 680
  %223 = vst [vmem:[%s222] sm:$0xff] %v71
  %s224 = scalar_lea.vmem %s1, 744
  %225 = vst [vmem:[%s224] sm:$0xff] %v71
  %s226 = scalar_lea.vmem %s1, 808
  %227 = vst [vmem:[%s226] sm:$0xff] %v71
  %s228 = scalar_lea.vmem %s1, 872
  %229 = vst [vmem:[%s228] sm:$0xff] %v71
  %s230 = scalar_lea.vmem %s1, 936
  %231 = vst [vmem:[%s230] sm:$0xff] %v71
  %s232 = scalar_lea.vmem %s1, 1000
  %233 = vst [vmem:[%s232] sm:$0xff] %v71
  %s234 = scalar_lea.vmem %s1, 56
  %235 = vst [vmem:[%s234] sm:$0xff] %v105
  %s236 = scalar_lea.vmem %s1, 120
  %237 = vst [vmem:[%s236] sm:$0xff] %v105
  %s238 = scalar_lea.vmem %s1, 184
  %239 = vst [vmem:[%s238] sm:$0xff] %v105
  %s240 = scalar_lea.vmem %s1, 248
  %241 = vst [vmem:[%s240] sm:$0xff] %v105
  %s242 = scalar_lea.vmem %s1, 312
  %243 = vst [vmem:[%s242] sm:$0xff] %v105
  %s244 = scalar_lea.vmem %s1, 376
  %245 = vst [vmem:[%s244] sm:$0xff] %v105
  %s246 = scalar_lea.vmem %s1, 440
  %247 = vst [vmem:[%s246] sm:$0xff] %v105
  %s248 = scalar_lea.vmem %s1, 504
  %249 = vst [vmem:[%s248] sm:$0xff] %v105
  %s250 = scalar_lea.vmem %s1, 568
  %251 = vst [vmem:[%s250] sm:$0xff] %v105
  %s252 = scalar_lea.vmem %s1, 632
  %253 = vst [vmem:[%s252] sm:$0xff] %v105
  %s254 = scalar_lea.vmem %s1, 696
  %255 = vst [vmem:[%s254] sm:$0xff] %v105
  %s256 = scalar_lea.vmem %s1, 760
  %257 = vst [vmem:[%s256] sm:$0xff] %v105
  %s258 = scalar_lea.vmem %s1, 824
  %259 = vst [vmem:[%s258] sm:$0xff] %v105
  %s260 = scalar_lea.vmem %s1, 888
  %261 = vst [vmem:[%s260] sm:$0xff] %v105
  %s262 = scalar_lea.vmem %s1, 952
  %263 = vst [vmem:[%s262] sm:$0xff] %v105
  %s264 = scalar_lea.vmem %s1, 1016
  %265 = vst [vmem:[%s264] sm:$0xff] %v105

// kernel: tile.9
$region0: #{tile.9}
  %s0 = inlined_call_operand.vmem [shape: f32[16,4,16,4], index: 0, kind: input, shape index: {}]
  %s1 = inlined_call_operand.vmem [shape: f32[64,64], index: 1, kind: output, shape index: {}]
  %s2 = smov 3
  %v3 = vld [vmem:[%s0] ss:$16 sm:%s2]
  %s4 = smov 12
  %v5 = vld [vmem:[%s0] ss:$16 sm:%s4]
  %vm6 = vcmask 1043458
  %v7 = vsel %vm6, %v5, %v3
  %s8 = smov 48
  %v9 = vld [vmem:[%s0] ss:$16 sm:%s8]
  %vm10 = vcmask 1045508
  %v11 = vsel %vm10, %v9, %v7
  %s12 = smov 192
  %v13 = vld [vmem:[%s0] ss:$16 sm:%s12]
  %vm14 = vcmask 1047558
  %v15 = vsel %vm14, %v13, %v11
  %vm16 = vcmask 31744
  %17 = vst.msk [vmem:[%s1] sm:$0xff] %vm16, %v15
  %s18 = scalar_lea.vmem %s0, 128
  %s19 = smov 3
  %v20 = vld [vmem:[%s18] ss:$16 sm:%s19]
  %s21 = scalar_lea.vmem %s0, 128
  %s22 = smov 12
  %v23 = vld [vmem:[%s21] ss:$16 sm:%s22]
  %vm24 = vcmask 1043458
  %v25 = vsel %vm24, %v23, %v20
  %s26 = scalar_lea.vmem %s0, 128
  %s27 = smov 48
  %v28 = vld [vmem:[%s26] ss:$16 sm:%s27]
  %vm29 = vcmask 1045508
  %v30 = vsel %vm29, %v28, %v25
  %s31 = scalar_lea.vmem %s0, 128
  %s32 = smov 192
  %v33 = vld [vmem:[%s31] ss:$16 sm:%s32]
  %vm34 = vcmask 1047558
  %v35 = vsel %vm34, %v33, %v30
  %vm36 = vcmask 31744
  %s37 = scalar_lea.vmem %s1, 8
  %38 = vst.msk [vmem:[%s37] sm:$0xff] %vm36, %v35
  %s39 = scalar_lea.vmem %s0, 256
  %s40 = smov 3
  %v41 = vld [vmem:[%s39] ss:$16 sm:%s40]
  %s42 = scalar_lea.vmem %s0, 256
  %s43 = smov 12
  %v44 = vld [vmem:[%s42] ss:$16 sm:%s43]
  %vm45 = vcmask 1043458
  %v46 = vsel %vm45, %v44, %v41
  %s47 = scalar_lea.vmem %s0, 256
  %s48 = smov 48
  %v49 = vld [vmem:[%s47] ss:$16 sm:%s48]
  %vm50 = vcmask 1045508
  %v51 = vsel %vm50, %v49, %v46
  %s52 = scalar_lea.vmem %s0, 256
  %s53 = smov 192
  %v54 = vld [vmem:[%s52] ss:$16 sm:%s53]
  %vm55 = vcmask 1047558
  %v56 = vsel %vm55, %v54, %v51
  %vm57 = vcmask 31744
  %s58 = scalar_lea.vmem %s1, 16
  %59 = vst.msk [vmem:[%s58] sm:$0xff] %vm57, %v56
  %s60 = scalar_lea.vmem %s0, 384
  %s61 = smov 3
  %v62 = vld [vmem:[%s60] ss:$16 sm:%s61]
  %s63 = scalar_lea.vmem %s0, 384
  %s64 = smov 12
  %v65 = vld [vmem:[%s63] ss:$16 sm:%s64]
  %vm66 = vcmask 1043458
  %v67 = vsel %vm66, %v65, %v62
  %s68 = scalar_lea.vmem %s0, 384
  %s69 = smov 48
  %v70 = vld [vmem:[%s68] ss:$16 sm:%s69]
  %vm71 = vcmask 1045508
  %v72 = vsel %vm71, %v70, %v67
  %s73 = scalar_lea.vmem %s0, 384
  %s74 = smov 192
  %v75 = vld [vmem:[%s73] ss:$16 sm:%s74]
  %vm76 = vcmask 1047558
  %v77 = vsel %vm76, %v75, %v72
  %vm78 = vcmask 31744
  %s79 = scalar_lea.vmem %s1, 24
  %80 = vst.msk [vmem:[%s79] sm:$0xff] %vm78, %v77
  %s81 = scalar_lea.vmem %s0, 512
  %s82 = smov 3
  %v83 = vld [vmem:[%s81] ss:$16 sm:%s82]
  %s84 = scalar_lea.vmem %s0, 512
  %s85 = smov 12
  %v86 = vld [vmem:[%s84] ss:$16 sm:%s85]
  %vm87 = vcmask 1043458
  %v88 = vsel %vm87, %v86, %v83
  %s89 = scalar_lea.vmem %s0, 512
  %s90 = smov 48
  %v91 = vld [vmem:[%s89] ss:$16 sm:%s90]
  %vm92 = vcmask 1045508
  %v93 = vsel %vm92, %v91, %v88
  %s94 = scalar_lea.vmem %s0, 512
  %s95 = smov 192
  %v96 = vld [vmem:[%s94] ss:$16 sm:%s95]
  %vm97 = vcmask 1047558
  %v98 = vsel %vm97, %v96, %v93
  %vm99 = vcmask 31744
  %s100 = scalar_lea.vmem %s1, 32
  %101 = vst.msk [vmem:[%s100] sm:$0xff] %vm99, %v98
  %s102 = scalar_lea.vmem %s0, 640
  %s103 = smov 3
  %v104 = vld [vmem:[%s102] ss:$16 sm:%s103]
  %s105 = scalar_lea.vmem %s0, 640
  %s106 = smov 12
  %v107 = vld [vmem:[%s105] ss:$16 sm:%s106]
  %vm108 = vcmask 1043458
  %v109 = vsel %vm108, %v107, %v104
  %s110 = scalar_lea.vmem %s0, 640
  %s111 = smov 48
  %v112 = vld [vmem:[%s110] ss:$16 sm:%s111]
  %vm113 = vcmask 1045508
  %v114 = vsel %vm113, %v112, %v109
  %s115 = scalar_lea.vmem %s0, 640
  %s116 = smov 192
  %v117 = vld [vmem:[%s115] ss:$16 sm:%s116]
  %vm118 = vcmask 1047558
  %v119 = vsel %vm118, %v117, %v114
  %vm120 = vcmask 31744
  %s121 = scalar_lea.vmem %s1, 40
  %122 = vst.msk [vmem:[%s121] sm:$0xff] %vm120, %v119
  %s123 = scalar_lea.vmem %s0, 768
  %s124 = smov 3
  %v125 = vld [vmem:[%s123] ss:$16 sm:%s124]
  %s126 = scalar_lea.vmem %s0, 768
  %s127 = smov 12
  %v128 = vld [vmem:[%s126] ss:$16 sm:%s127]
  %vm129 = vcmask 1043458
  %v130 = vsel %vm129, %v128, %v125
  %s131 = scalar_lea.vmem %s0, 768
  %s132 = smov 48
  %v133 = vld [vmem:[%s131] ss:$16 sm:%s132]
  %vm134 = vcmask 1045508
  %v135 = vsel %vm134, %v133, %v130
  %s136 = scalar_lea.vmem %s0, 768
  %s137 = smov 192
  %v138 = vld [vmem:[%s136] ss:$16 sm:%s137]
  %vm139 = vcmask 1047558
  %v140 = vsel %vm139, %v138, %v135
  %vm141 = vcmask 31744
  %s142 = scalar_lea.vmem %s1, 48
  %143 = vst.msk [vmem:[%s142] sm:$0xff] %vm141, %v140
  %s144 = scalar_lea.vmem %s0, 896
  %s145 = smov 3
  %v146 = vld [vmem:[%s144] ss:$16 sm:%s145]
  %s147 = scalar_lea.vmem %s0, 896
  %s148 = smov 12
  %v149 = vld [vmem:[%s147] ss:$16 sm:%s148]
  %vm150 = vcmask 1043458
  %v151 = vsel %vm150, %v149, %v146
  %s152 = scalar_lea.vmem %s0, 896
  %s153 = smov 48
  %v154 = vld [vmem:[%s152] ss:$16 sm:%s153]
  %vm155 = vcmask 1045508
  %v156 = vsel %vm155, %v154, %v151
  %s157 = scalar_lea.vmem %s0, 896
  %s158 = smov 192
  %v159 = vld [vmem:[%s157] ss:$16 sm:%s158]
  %vm160 = vcmask 1047558
  %v161 = vsel %vm160, %v159, %v156
  %vm162 = vcmask 31744
  %s163 = scalar_lea.vmem %s1, 56
  %164 = vst.msk [vmem:[%s163] sm:$0xff] %vm162, %v161
  %s165 = scalar_lea.vmem %s0, 15
  %s166 = smov 3
  %v167 = vld [vmem:[%s165] ss:$16 sm:%s166]
  %s168 = scalar_lea.vmem %s0, 15
  %s169 = smov 12
  %v170 = vld [vmem:[%s168] ss:$16 sm:%s169]
  %vm171 = vcmask 1043458
  %v172 = vsel %vm171, %v170, %v167
  %s173 = scalar_lea.vmem %s0, 15
  %s174 = smov 48
  %v175 = vld [vmem:[%s173] ss:$16 sm:%s174]
  %vm176 = vcmask 1045508
  %v177 = vsel %vm176, %v175, %v172
  %s178 = scalar_lea.vmem %s0, 15
  %s179 = smov 192
  %v180 = vld [vmem:[%s178] ss:$16 sm:%s179]
  %vm181 = vcmask 1047558
  %v182 = vsel %vm181, %v180, %v177
  %183 = vrot.lane.b32.xlu0 %v182, 60
  %v184 = vpop.permute.xlu0 %183
  %vm185 = vcmask 523744
  %186 = vst.msk [vmem:[%s1] sm:$0xff] %vm185, %v184
  %s187 = scalar_lea.vmem %s0, 527
  %s188 = smov 3
  %v189 = vld [vmem:[%s187] ss:$16 sm:%s188]
  %s190 = scalar_lea.vmem %s0, 527
  %s191 = smov 12
  %v192 = vld [vmem:[%s190] ss:$16 sm:%s191]
  %vm193 = vcmask 1043458
  %v194 = vsel %vm193, %v192, %v189
  %s195 = scalar_lea.vmem %s0, 527
  %s196 = smov 48
  %v197 = vld [vmem:[%s195] ss:$16 sm:%s196]
  %vm198 = vcmask 1045508
  %v199 = vsel %vm198, %v197, %v194
  %s200 = scalar_lea.vmem %s0, 527
  %s201 = smov 192
  %v202 = vld [vmem:[%s200] ss:$16 sm:%s201]
  %vm203 = vcmask 1047558
  %v204 = vsel %vm203, %v202, %v199
  %205 = vrot.lane.b32.xlu0 %v204, 60
  %v206 = vpop.permute.xlu0 %205
  %vm207 = vcmask 523744
  %s208 = scalar_lea.vmem %s1, 32
  %209 = vst.msk [vmem:[%s208] sm:$0xff] %vm207, %v206
  %s210 = scalar_lea.vmem %s0, 143
  %s211 = smov 3
  %v212 = vld [vmem:[%s210] ss:$16 sm:%s211]
  %s213 = scalar_lea.vmem %s0, 143
  %s214 = smov 12
  %v215 = vld [vmem:[%s213] ss:$16 sm:%s214]
  %vm216 = vcmask 1043458
  %v217 = vsel %vm216, %v215, %v212
  %s218 = scalar_lea.vmem %s0, 143
  %s219 = smov 48
  %v220 = vld [vmem:[%s218] ss:$16 sm:%s219]
  %vm221 = vcmask 1045508
  %v222 = vsel %vm221, %v220, %v217
  %s223 = scalar_lea.vmem %s0, 143
  %s224 = smov 192
  %v225 = vld [vmem:[%s223] ss:$16 sm:%s224]
  %vm226 = vcmask 1047558
  %v227 = vsel %vm226, %v225, %v222
  %228 = vrot.lane.b32.xlu0 %v227, 60
  %v229 = vpop.permute.xlu0 %228
  %vm230 = vcmask 523744
  %s231 = scalar_lea.vmem %s1, 8
  %232 = vst.msk [vmem:[%s231] sm:$0xff] %vm230, %v229
  %s233 = scalar_lea.vmem %s0, 655
  %s234 = smov 3
  %v235 = vld [vmem:[%s233] ss:$16 sm:%s234]
  %s236 = scalar_lea.vmem %s0, 655
  %s237 = smov 12
  %v238 = vld [vmem:[%s236] ss:$16 sm:%s237]
  %vm239 = vcmask 1043458
  %v240 = vsel %vm239, %v238, %v235
  %s241 = scalar_lea.vmem %s0, 655
  %s242 = smov 48
  %v243 = vld [vmem:[%s241] ss:$16 sm:%s242]
  %vm244 = vcmask 1045508
  %v245 = vsel %vm244, %v243, %v240
  %s246 = scalar_lea.vmem %s0, 655
  %s247 = smov 192
  %v248 = vld [vmem:[%s246] ss:$16 sm:%s247]
  %vm249 = vcmask 1047558
  %v250 = vsel %vm249, %v248, %v245
  %251 = vrot.lane.b32.xlu0 %v250, 60
  %v252 = vpop.permute.xlu0 %251
  %vm253 = vcmask 523744
  %s254 = scalar_lea.vmem %s1, 40
  %255 = vst.msk [vmem:[%s254] sm:$0xff] %vm253, %v252
  %s256 = scalar_lea.vmem %s0, 271
  %s257 = smov 3
  %v258 = vld [vmem:[%s256] ss:$16 sm:%s257]
  %s259 = scalar_lea.vmem %s0, 271
  %s260 = smov 12
  %v261 = vld [vmem:[%s259] ss:$16 sm:%s260]
  %vm262 = vcmask 1043458
  %v263 = vsel %vm262, %v261, %v258
  %s264 = scalar_lea.vmem %s0, 271
  %s265 = smov 48
  %v266 = vld [vmem:[%s264] ss:$16 sm:%s265]
  %vm267 = vcmask 1045508
  %v268 = vsel %vm267, %v266, %v263
  %s269 = scalar_lea.vmem %s0, 271
  %s270 = smov 192
  %v271 = vld [vmem:[%s269] ss:$16 sm:%s270]
  %vm272 = vcmask 1047558
  %v273 = vsel %vm272, %v271, %v268
  %274 = vrot.lane.b32.xlu0 %v273, 60
  %v275 = vpop.permute.xlu0 %274
  %vm276 = vcmask 523744
  %s277 = scalar_lea.vmem %s1, 16
  %278 = vst.msk [vmem:[%s277] sm:$0xff] %vm276, %v275
  %s279 = scalar_lea.vmem %s0, 783
  %s280 = smov 3
  %v281 = vld [vmem:[%s279] ss:$16 sm:%s280]
  %s282 = scalar_lea.vmem %s0, 783
  %s283 = smov 12
  %v284 = vld [vmem:[%s282] ss:$16 sm:%s283]
  %vm285 = vcmask 1043458
  %v286 = vsel %vm285, %v284, %v281
  %s287 = scalar_lea.vmem %s0, 783
  %s288 = smov 48
  %v289 = vld [vmem:[%s287] ss:$16 sm:%s288]
  %vm290 = vcmask 1045508
  %v291 = vsel %vm290, %v289, %v286
  %s292 = scalar_lea.vmem %s0, 783
  %s293 = smov 192
  %v294 = vld [vmem:[%s292] ss:$16 sm:%s293]
  %vm295 = vcmask 1047558
  %v296 = vsel %vm295, %v294, %v291
  %297 = vrot.lane.b32.xlu0 %v296, 60
  %v298 = vpop.permute.xlu0 %297
  %vm299 = vcmask 523744
  %s300 = scalar_lea.vmem %s1, 48
  %301 = vst.msk [vmem:[%s300] sm:$0xff] %vm299, %v298
  %s302 = scalar_lea.vmem %s0, 399
  %s303 = smov 3
  %v304 = vld [vmem:[%s302] ss:$16 sm:%s303]
  %s305 = scalar_lea.vmem %s0, 399
  %s306 = smov 12
  %v307 = vld [vmem:[%s305] ss:$16 sm:%s306]
  %vm308 = vcmask 1043458
  %v309 = vsel %vm308, %v307, %v304
  %s310 = scalar_lea.vmem %s0, 399
  %s311 = smov 48
  %v312 = vld [vmem:[%s310] ss:$16 sm:%s311]
  %vm313 = vcmask 1045508
  %v314 = vsel %vm313, %v312, %v309
  %s315 = scalar_lea.vmem %s0, 399
  %s316 = smov 192
  %v317 = vld [vmem:[%s315] ss:$16 sm:%s316]
  %vm318 = vcmask 1047558
  %v319 = vsel %vm318, %v317, %v314
  %320 = vrot.lane.b32.xlu0 %v319, 60
  %v321 = vpop.permute.xlu0 %320
  %vm322 = vcmask 523744
  %s323 = scalar_lea.vmem %s1, 24
  %324 = vst.msk [vmem:[%s323] sm:$0xff] %vm322, %v321
  %s325 = scalar_lea.vmem %s0, 911
  %s326 = smov 3
  %v327 = vld [vmem:[%s325] ss:$16 sm:%s326]
  %s328 = scalar_lea.vmem %s0, 911
  %s329 = smov 12
  %v330 = vld [vmem:[%s328] ss:$16 sm:%s329]
  %vm331 = vcmask 1043458
  %v332 = vsel %vm331, %v330, %v327
  %s333 = scalar_lea.vmem %s0, 911
  %s334 = smov 48
  %v335 = vld [vmem:[%s333] ss:$16 sm:%s334]
  %vm336 = vcmask 1045508
  %v337 = vsel %vm336, %v335, %v332
  %s338 = scalar_lea.vmem %s0, 911
  %s339 = smov 192
  %v340 = vld [vmem:[%s338] ss:$16 sm:%s339]
  %vm341 = vcmask 1047558
  %v342 = vsel %vm341, %v340, %v337
  %343 = vrot.lane.b32.xlu0 %v342, 60
  %v344 = vpop.permute.xlu0 %343
  %vm345 = vcmask 523744
  %s346 = scalar_lea.vmem %s1, 56
  %347 = vst.msk [vmem:[%s346] sm:$0xff] %vm345, %v344
  %s348 = scalar_lea.vmem %s0, 14
  %s349 = smov 3
  %v350 = vld [vmem:[%s348] ss:$16 sm:%s349]
  %s351 = scalar_lea.vmem %s0, 14
  %s352 = smov 12
  %v353 = vld [vmem:[%s351] ss:$16 sm:%s352]
  %vm354 = vcmask 1043458
  %v355 = vsel %vm354, %v353, %v350
  %s356 = scalar_lea.vmem %s0, 14
  %s357 = smov 48
  %v358 = vld [vmem:[%s356] ss:$16 sm:%s357]
  %vm359 = vcmask 1045508
  %v360 = vsel %vm359, %v358, %v355
  %s361 = scalar_lea.vmem %s0, 14
  %s362 = smov 192
  %v363 = vld [vmem:[%s361] ss:$16 sm:%s362]
  %vm364 = vcmask 1047558
  %v365 = vsel %vm364, %v363, %v360
  %366 = vrot.lane.b32.xlu0 %v365, 56
  %v367 = vpop.permute.xlu0 %366
  %vm368 = vcmask 490944
  %369 = vst.msk [vmem:[%s1] sm:$0xff] %vm368, %v367
  %s370 = scalar_lea.vmem %s0, 526
  %s371 = smov 3
  %v372 = vld [vmem:[%s370] ss:$16 sm:%s371]
  %s373 = scalar_lea.vmem %s0, 526
  %s374 = smov 12
  %v375 = vld [vmem:[%s373] ss:$16 sm:%s374]
  %vm376 = vcmask 1043458
  %v377 = vsel %vm376, %v375, %v372
  %s378 = scalar_lea.vmem %s0, 526
  %s379 = smov 48
  %v380 = vld [vmem:[%s378] ss:$16 sm:%s379]
  %vm381 = vcmask 1045508
  %v382 = vsel %vm381, %v380, %v377
  %s383 = scalar_lea.vmem %s0, 526
  %s384 = smov 192
  %v385 = vld [vmem:[%s383] ss:$16 sm:%s384]
  %vm386 = vcmask 1047558
  %v387 = vsel %vm386, %v385, %v382
  %388 = vrot.lane.b32.xlu0 %v387, 56
  %v389 = vpop.permute.xlu0 %388
  %vm390 = vcmask 490944
  %s391 = scalar_lea.vmem %s1, 32
  %392 = vst.msk [vmem:[%s391] sm:$0xff] %vm390, %v389
  %s393 = scalar_lea.vmem %s0, 142
  %s394 = smov 3
  %v395 = vld [vmem:[%s393] ss:$16 sm:%s394]
  %s396 = scalar_lea.vmem %s0, 142
  %s397 = smov 12
  %v398 = vld [vmem:[%s396] ss:$16 sm:%s397]
  %vm399 = vcmask 1043458
  %v400 = vsel %vm399, %v398, %v395
  %s401 = scalar_lea.vmem %s0, 142
  %s402 = smov 48
  %v403 = vld [vmem:[%s401] ss:$16 sm:%s402]
  %vm404 = vcmask 1045508
  %v405 = vsel %vm404, %v403, %v400
  %s406 = scalar_lea.vmem %s0, 142
  %s407 = smov 192
  %v408 = vld [vmem:[%s406] ss:$16 sm:%s407]
  %vm409 = vcmask 1047558
  %v410 = vsel %vm409, %v408, %v405
  %411 = vrot.lane.b32.xlu0 %v410, 56
  %v412 = vpop.permute.xlu0 %411
  %vm413 = vcmask 490944
  %s414 = scalar_lea.vmem %s1, 8
  %415 = vst.msk [vmem:[%s414] sm:$0xff] %vm413, %v412
  %s416 = scalar_lea.vmem %s0, 654
  %s417 = smov 3
  %v418 = vld [vmem:[%s416] ss:$16 sm:%s417]
  %s419 = scalar_lea.vmem %s0, 654
  %s420 = smov 12
  %v421 = vld [vmem:[%s419] ss:$16 sm:%s420]
  %vm422 = vcmask 1043458
  %v423 = vsel %vm422, %v421, %v418
  %s424 = scalar_lea.vmem %s0, 654
  %s425 = smov 48
  %v426 = vld [vmem:[%s424] ss:$16 sm:%s425]
  %vm427 = vcmask 1045508
  %v428 = vsel %vm427, %v426, %v423
  %s429 = scalar_lea.vmem %s0, 654
  %s430 = smov 192
  %v431 = vld [vmem:[%s429] ss:$16 sm:%s430]
  %vm432 = vcmask 1047558
  %v433 = vsel %vm432, %v431, %v428
  %434 = vrot.lane.b32.xlu0 %v433, 56
  %v435 = vpop.permute.xlu0 %434
  %vm436 = vcmask 490944
  %s437 = scalar_lea.vmem %s1, 40
  %438 = vst.msk [vmem:[%s437] sm:$0xff] %vm436, %v435
  %s439 = scalar_lea.vmem %s0, 270
  %s440 = smov 3
  %v441 = vld [vmem:[%s439] ss:$16 sm:%s440]
  %s442 = scalar_lea.vmem %s0, 270
  %s443 = smov 12
  %v444 = vld [vmem:[%s442] ss:$16 sm:%s443]
  %vm445 = vcmask 1043458
  %v446 = vsel %vm445, %v444, %v441
  %s447 = scalar_lea.vmem %s0, 270
  %s448 = smov 48
  %v449 = vld [vmem:[%s447] ss:$16 sm:%s448]
  %vm450 = vcmask 1045508
  %v451 = vsel %vm450, %v449, %v446
  %s452 = scalar_lea.vmem %s0, 270
  %s453 = smov 192
  %v454 = vld [vmem:[%s452] ss:$16 sm:%s453]
  %vm455 = vcmask 1047558
  %v456 = vsel %vm455, %v454, %v451
  %457 = vrot.lane.b32.xlu0 %v456, 56
  %v458 = vpop.permute.xlu0 %457
  %vm459 = vcmask 490944
  %s460 = scalar_lea.vmem %s1, 16
  %461 = vst.msk [vmem:[%s460] sm:$0xff] %vm459, %v458
  %s462 = scalar_lea.vmem %s0, 782
  %s463 = smov 3
  %v464 = vld [vmem:[%s462] ss:$16 sm:%s463]
  %s465 = scalar_lea.vmem %s0, 782
  %s466 = smov 12
  %v467 = vld [vmem:[%s465] ss:$16 sm:%s466]
  %vm468 = vcmask 1043458
  %v469 = vsel %vm468, %v467, %v464
  %s470 = scalar_lea.vmem %s0, 782
  %s471 = smov 48
  %v472 = vld [vmem:[%s470] ss:$16 sm:%s471]
  %vm473 = vcmask 1045508
  %v474 = vsel %vm473, %v472, %v469
  %s475 = scalar_lea.vmem %s0, 782
  %s476 = smov 192
  %v477 = vld [vmem:[%s475] ss:$16 sm:%s476]
  %vm478 = vcmask 1047558
  %v479 = vsel %vm478, %v477, %v474
  %480 = vrot.lane.b32.xlu0 %v479, 56
  %v481 = vpop.permute.xlu0 %480
  %vm482 = vcmask 490944
  %s483 = scalar_lea.vmem %s1, 48
  %484 = vst.msk [vmem:[%s483] sm:$0xff] %vm482, %v481
  %s485 = scalar_lea.vmem %s0, 398
  %s486 = smov 3
  %v487 = vld [vmem:[%s485] ss:$16 sm:%s486]
  %s488 = scalar_lea.vmem %s0, 398
  %s489 = smov 12
  %v490 = vld [vmem:[%s488] ss:$16 sm:%s489]
  %vm491 = vcmask 1043458
  %v492 = vsel %vm491, %v490, %v487
  %s493 = scalar_lea.vmem %s0, 398
  %s494 = smov 48
  %v495 = vld [vmem:[%s493] ss:$16 sm:%s494]
  %vm496 = vcmask 1045508
  %v497 = vsel %vm496, %v495, %v492
  %s498 = scalar_lea.vmem %s0, 398
  %s499 = smov 192
  %v500 = vld [vmem:[%s498] ss:$16 sm:%s499]
  %vm501 = vcmask 1047558
  %v502 = vsel %vm501, %v500, %v497
  %503 = vrot.lane.b32.xlu0 %v502, 56
  %v504 = vpop.permute.xlu0 %503
  %vm505 = vcmask 490944
  %s506 = scalar_lea.vmem %s1, 24
  %507 = vst.msk [vmem:[%s506] sm:$0xff] %vm505, %v504
  %s508 = scalar_lea.vmem %s0, 910
  %s509 = smov 3
  %v510 = vld [vmem:[%s508] ss:$16 sm:%s509]
  %s511 = scalar_lea.vmem %s0, 910
  %s512 = smov 12
  %v513 = vld [vmem:[%s511] ss:$16 sm:%s512]
  %vm514 = vcmask 1043458
  %v515 = vsel %vm514, %v513, %v510
  %s516 = scalar_lea.vmem %s0, 910
  %s517 = smov 48
  %v518 = vld [vmem:[%s516] ss:$16 sm:%s517]
  %vm519 = vcmask 1045508
  %v520 = vsel %vm519, %v518, %v515
  %s521 = scalar_lea.vmem %s0, 910
  %s522 = smov 192
  %v523 = vld [vmem:[%s521] ss:$16 sm:%s522]
  %vm524 = vcmask 1047558
  %v525 = vsel %vm524, %v523, %v520
  %526 = vrot.lane.b32.xlu0 %v525, 56
  %v527 = vpop.permute.xlu0 %526
  %vm528 = vcmask 490944
  %s529 = scalar_lea.vmem %s1, 56
  %530 = vst.msk [vmem:[%s529] sm:$0xff] %vm528, %v527
  %s531 = scalar_lea.vmem %s0, 13
  %s532 = smov 3
  %v533 = vld [vmem:[%s531] ss:$16 sm:%s532]
  %s534 = scalar_lea.vmem %s0, 13
  %s535 = smov 12
  %v536 = vld [vmem:[%s534] ss:$16 sm:%s535]
  %vm537 = vcmask 1043458
  %v538 = vsel %vm537, %v536, %v533
  %s539 = scalar_lea.vmem %s0, 13
  %s540 = smov 48
  %v541 = vld [vmem:[%s539] ss:$16 sm:%s540]
  %vm542 = vcmask 1045508
  %v543 = vsel %vm542, %v541, %v538
  %s544 = scalar_lea.vmem %s0, 13
  %s545 = smov 192
  %v546 = vld [vmem:[%s544] ss:$16 sm:%s545]
  %vm547 = vcmask 1047558
  %v548 = vsel %vm547, %v546, %v543
  %549 = vrot.lane.b32.xlu0 %v548, 52
  %v550 = vpop.permute.xlu0 %549
  %vm551 = vcmask 458144
  %552 = vst.msk [vmem:[%s1] sm:$0xff] %vm551, %v550
  %s553 = scalar_lea.vmem %s0, 525
  %s554 = smov 3
  %v555 = vld [vmem:[%s553] ss:$16 sm:%s554]
  %s556 = scalar_lea.vmem %s0, 525
  %s557 = smov 12
  %v558 = vld [vmem:[%s556] ss:$16 sm:%s557]
  %vm559 = vcmask 1043458
  %v560 = vsel %vm559, %v558, %v555
  %s561 = scalar_lea.vmem %s0, 525
  %s562 = smov 48
  %v563 = vld [vmem:[%s561] ss:$16 sm:%s562]
  %vm564 = vcmask 1045508
  %v565 = vsel %vm564, %v563, %v560
  %s566 = scalar_lea.vmem %s0, 525
  %s567 = smov 192
  %v568 = vld [vmem:[%s566] ss:$16 sm:%s567]
  %vm569 = vcmask 1047558
  %v570 = vsel %vm569, %v568, %v565
  %571 = vrot.lane.b32.xlu0 %v570, 52
  %v572 = vpop.permute.xlu0 %571
  %vm573 = vcmask 458144
  %s574 = scalar_lea.vmem %s1, 32
  %575 = vst.msk [vmem:[%s574] sm:$0xff] %vm573, %v572
  %s576 = scalar_lea.vmem %s0, 141
  %s577 = smov 3
  %v578 = vld [vmem:[%s576] ss:$16 sm:%s577]
  %s579 = scalar_lea.vmem %s0, 141
  %s580 = smov 12
  %v581 = vld [vmem:[%s579] ss:$16 sm:%s580]
  %vm582 = vcmask 1043458
  %v583 = vsel %vm582, %v581, %v578
  %s584 = scalar_lea.vmem %s0, 141
  %s585 = smov 48
  %v586 = vld [vmem:[%s584] ss:$16 sm:%s585]
  %vm587 = vcmask 1045508
  %v588 = vsel %vm587, %v586, %v583
  %s589 = scalar_lea.vmem %s0, 141
  %s590 = smov 192
  %v591 = vld [vmem:[%s589] ss:$16 sm:%s590]
  %vm592 = vcmask 1047558
  %v593 = vsel %vm592, %v591, %v588
  %594 = vrot.lane.b32.xlu0 %v593, 52
  %v595 = vpop.permute.xlu0 %594
  %vm596 = vcmask 458144
  %s597 = scalar_lea.vmem %s1, 8
  %598 = vst.msk [vmem:[%s597] sm:$0xff] %vm596, %v595
  %s599 = scalar_lea.vmem %s0, 653
  %s600 = smov 3
  %v601 = vld [vmem:[%s599] ss:$16 sm:%s600]
  %s602 = scalar_lea.vmem %s0, 653
  %s603 = smov 12
  %v604 = vld [vmem:[%s602] ss:$16 sm:%s603]
  %vm605 = vcmask 1043458
  %v606 = vsel %vm605, %v604, %v601
  %s607 = scalar_lea.vmem %s0, 653
  %s608 = smov 48
  %v609 = vld [vmem:[%s607] ss:$16 sm:%s608]
  %vm610 = vcmask 1045508
  %v611 = vsel %vm610, %v609, %v606
  %s612 = scalar_lea.vmem %s0, 653
  %s613 = smov 192
  %v614 = vld [vmem:[%s612] ss:$16 sm:%s613]
  %vm615 = vcmask 1047558
  %v616 = vsel %vm615, %v614, %v611
  %617 = vrot.lane.b32.xlu0 %v616, 52
  %v618 = vpop.permute.xlu0 %617
  %vm619 = vcmask 458144
  %s620 = scalar_lea.vmem %s1, 40
  %621 = vst.msk [vmem:[%s620] sm:$0xff] %vm619, %v618
  %s622 = scalar_lea.vmem %s0, 269
  %s623 = smov 3
  %v624 = vld [vmem:[%s622] ss:$16 sm:%s623]
  %s625 = scalar_lea.vmem %s0, 269
  %s626 = smov 12
  %v627 = vld [vmem:[%s625] ss:$16 sm:%s626]
  %vm628 = vcmask 1043458
  %v629 = vsel %vm628, %v627, %v624
  %s630 = scalar_lea.vmem %s0, 269
  %s631 = smov 48
  %v632 = vld [vmem:[%s630] ss:$16 sm:%s631]
  %vm633 = vcmask 1045508
  %v634 = vsel %vm633, %v632, %v629
  %s635 = scalar_lea.vmem %s0, 269
  %s636 = smov 192
  %v637 = vld [vmem:[%s635] ss:$16 sm:%s636]
  %vm638 = vcmask 1047558
  %v639 = vsel %vm638, %v637, %v634
  %640 = vrot.lane.b32.xlu0 %v639, 52
  %v641 = vpop.permute.xlu0 %640
  %vm642 = vcmask 458144
  %s643 = scalar_lea.vmem %s1, 16
  %644 = vst.msk [vmem:[%s643] sm:$0xff] %vm642, %v641
  %s645 = scalar_lea.vmem %s0, 781
  %s646 = smov 3
  %v647 = vld [vmem:[%s645] ss:$16 sm:%s646]
  %s648 = scalar_lea.vmem %s0, 781
  %s649 = smov 12
  %v650 = vld [vmem:[%s648] ss:$16 sm:%s649]
  %vm651 = vcmask 1043458
  %v652 = vsel %vm651, %v650, %v647
  %s653 = scalar_lea.vmem %s0, 781
  %s654 = smov 48
  %v655 = vld [vmem:[%s653] ss:$16 sm:%s654]
  %vm656 = vcmask 1045508
  %v657 = vsel %vm656, %v655, %v652
  %s658 = scalar_lea.vmem %s0, 781
  %s659 = smov 192
  %v660 = vld [vmem:[%s658] ss:$16 sm:%s659]
  %vm661 = vcmask 1047558
  %v662 = vsel %vm661, %v660, %v657
  %663 = vrot.lane.b32.xlu0 %v662, 52
  %v664 = vpop.permute.xlu0 %663
  %vm665 = vcmask 458144
  %s666 = scalar_lea.vmem %s1, 48
  %667 = vst.msk [vmem:[%s666] sm:$0xff] %vm665, %v664
  %s668 = scalar_lea.vmem %s0, 397
  %s669 = smov 3
  %v670 = vld [vmem:[%s668] ss:$16 sm:%s669]
  %s671 = scalar_lea.vmem %s0, 397
  %s672 = smov 12
  %v673 = vld [vmem:[%s671] ss:$16 sm:%s672]
  %vm674 = vcmask 1043458
  %v675 = vsel %vm674, %v673, %v670
  %s676 = scalar_lea.vmem %s0, 397
  %s677 = smov 48
  %v678 = vld [vmem:[%s676] ss:$16 sm:%s677]
  %vm679 = vcmask 1045508
  %v680 = vsel %vm679, %v678, %v675
  %s681 = scalar_lea.vmem %s0, 397
  %s682 = smov 192
  %v683 = vld [vmem:[%s681] ss:$16 sm:%s682]
  %vm684 = vcmask 1047558
  %v685 = vsel %vm684, %v683, %v680
  %686 = vrot.lane.b32.xlu0 %v685, 52
  %v687 = vpop.permute.xlu0 %686
  %vm688 = vcmask 458144
  %s689 = scalar_lea.vmem %s1, 24
  %690 = vst.msk [vmem:[%s689] sm:$0xff] %vm688, %v687
  %s691 = scalar_lea.vmem %s0, 909
  %s692 = smov 3
  %v693 = vld [vmem:[%s691] ss:$16 sm:%s692]
  %s694 = scalar_lea.vmem %s0, 909
  %s695 = smov 12
  %v696 = vld [vmem:[%s694] ss:$16 sm:%s695]
  %vm697 = vcmask 1043458
  %v698 = vsel %vm697, %v696, %v693
  %s699 = scalar_lea.vmem %s0, 909
  %s700 = smov 48
  %v701 = vld [vmem:[%s699] ss:$16 sm:%s700]
  %vm702 = vcmask 1045508
  %v703 = vsel %vm702, %v701, %v698
  %s704 = scalar_lea.vmem %s0, 909
  %s705 = smov 192
  %v706 = vld [vmem:[%s704] ss:$16 sm:%s705]
  %vm707 = vcmask 1047558
  %v708 = vsel %vm707, %v706, %v703
  %709 = vrot.lane.b32.xlu0 %v708, 52
  %v710 = vpop.permute.xlu0 %709
  %vm711 = vcmask 458144
  %s712 = scalar_lea.vmem %s1, 56
  %713 = vst.msk [vmem:[%s712] sm:$0xff] %vm711, %v710
  %s714 = scalar_lea.vmem %s0, 12
  %s715 = smov 3
  %v716 = vld [vmem:[%s714] ss:$16 sm:%s715]
  %s717 = scalar_lea.vmem %s0, 12
  %s718 = smov 12
  %v719 = vld [vmem:[%s717] ss:$16 sm:%s718]
  %vm720 = vcmask 1043458
  %v721 = vsel %vm720, %v719, %v716
  %s722 = scalar_lea.vmem %s0, 12
  %s723 = smov 48
  %v724 = vld [vmem:[%s722] ss:$16 sm:%s723]
  %vm725 = vcmask 1045508
  %v726 = vsel %vm725, %v724, %v721
  %s727 = scalar_lea.vmem %s0, 12
  %s728 = smov 192
  %v729 = vld [vmem:[%s727] ss:$16 sm:%s728]
  %vm730 = vcmask 1047558
  %v731 = vsel %vm730, %v729, %v726
  %732 = vrot.lane.b32.xlu0 %v731, 48
  %v733 = vpop.permute.xlu0 %732
  %vm734 = vcmask 425344
  %735 = vst.msk [vmem:[%s1] sm:$0xff] %vm734, %v733
  %s736 = scalar_lea.vmem %s0, 524
  %s737 = smov 3
  %v738 = vld [vmem:[%s736] ss:$16 sm:%s737]
  %s739 = scalar_lea.vmem %s0, 524
  %s740 = smov 12
  %v741 = vld [vmem:[%s739] ss:$16 sm:%s740]
  %vm742 = vcmask 1043458
  %v743 = vsel %vm742, %v741, %v738
  %s744 = scalar_lea.vmem %s0, 524
  %s745 = smov 48
  %v746 = vld [vmem:[%s744] ss:$16 sm:%s745]
  %vm747 = vcmask 1045508
  %v748 = vsel %vm747, %v746, %v743
  %s749 = scalar_lea.vmem %s0, 524
  %s750 = smov 192
  %v751 = vld [vmem:[%s749] ss:$16 sm:%s750]
  %vm752 = vcmask 1047558
  %v753 = vsel %vm752, %v751, %v748
  %754 = vrot.lane.b32.xlu0 %v753, 48
  %v755 = vpop.permute.xlu0 %754
  %vm756 = vcmask 425344
  %s757 = scalar_lea.vmem %s1, 32
  %758 = vst.msk [vmem:[%s757] sm:$0xff] %vm756, %v755
  %s759 = scalar_lea.vmem %s0, 140
  %s760 = smov 3
  %v761 = vld [vmem:[%s759] ss:$16 sm:%s760]
  %s762 = scalar_lea.vmem %s0, 140
  %s763 = smov 12
  %v764 = vld [vmem:[%s762] ss:$16 sm:%s763]
  %vm765 = vcmask 1043458
  %v766 = vsel %vm765, %v764, %v761
  %s767 = scalar_lea.vmem %s0, 140
  %s768 = smov 48
  %v769 = vld [vmem:[%s767] ss:$16 sm:%s768]
  %vm770 = vcmask 1045508
  %v771 = vsel %vm770, %v769, %v766
  %s772 = scalar_lea.vmem %s0, 140
  %s773 = smov 192
  %v774 = vld [vmem:[%s772] ss:$16 sm:%s773]
  %vm775 = vcmask 1047558
  %v776 = vsel %vm775, %v774, %v771
  %777 = vrot.lane.b32.xlu0 %v776, 48
  %v778 = vpop.permute.xlu0 %777
  %vm779 = vcmask 425344
  %s780 = scalar_lea.vmem %s1, 8
  %781 = vst.msk [vmem:[%s780] sm:$0xff] %vm779, %v778
  %s782 = scalar_lea.vmem %s0, 652
  %s783 = smov 3
  %v784 = vld [vmem:[%s782] ss:$16 sm:%s783]
  %s785 = scalar_lea.vmem %s0, 652
  %s786 = smov 12
  %v787 = vld [vmem:[%s785] ss:$16 sm:%s786]
  %vm788 = vcmask 1043458
  %v789 = vsel %vm788, %v787, %v784
  %s790 = scalar_lea.vmem %s0, 652
  %s791 = smov 48
  %v792 = vld [vmem:[%s790] ss:$16 sm:%s791]
  %vm793 = vcmask 1045508
  %v794 = vsel %vm793, %v792, %v789
  %s795 = scalar_lea.vmem %s0, 652
  %s796 = smov 192
  %v797 = vld [vmem:[%s795] ss:$16 sm:%s796]
  %vm798 = vcmask 1047558
  %v799 = vsel %vm798, %v797, %v794
  %800 = vrot.lane.b32.xlu0 %v799, 48
  %v801 = vpop.permute.xlu0 %800
  %vm802 = vcmask 425344
  %s803 = scalar_lea.vmem %s1, 40
  %804 = vst.msk [vmem:[%s803] sm:$0xff] %vm802, %v801
  %s805 = scalar_lea.vmem %s0, 268
  %s806 = smov 3
  %v807 = vld [vmem:[%s805] ss:$16 sm:%s806]
  %s808 = scalar_lea.vmem %s0, 268
  %s809 = smov 12
  %v810 = vld [vmem:[%s808] ss:$16 sm:%s809]
  %vm811 = vcmask 1043458
  %v812 = vsel %vm811, %v810, %v807
  %s813 = scalar_lea.vmem %s0, 268
  %s814 = smov 48
  %v815 = vld [vmem:[%s813] ss:$16 sm:%s814]
  %vm816 = vcmask 1045508
  %v817 = vsel %vm816, %v815, %v812
  %s818 = scalar_lea.vmem %s0, 268
  %s819 = smov 192
  %v820 = vld [vmem:[%s818] ss:$16 sm:%s819]
  %vm821 = vcmask 1047558
  %v822 = vsel %vm821, %v820, %v817
  %823 = vrot.lane.b32.xlu0 %v822, 48
  %v824 = vpop.permute.xlu0 %823
  %vm825 = vcmask 425344
  %s826 = scalar_lea.vmem %s1, 16
  %827 = vst.msk [vmem:[%s826] sm:$0xff] %vm825, %v824
  %s828 = scalar_lea.vmem %s0, 780
  %s829 = smov 3
  %v830 = vld [vmem:[%s828] ss:$16 sm:%s829]
  %s831 = scalar_lea.vmem %s0, 780
  %s832 = smov 12
  %v833 = vld [vmem:[%s831] ss:$16 sm:%s832]
  %vm834 = vcmask 1043458
  %v835 = vsel %vm834, %v833, %v830
  %s836 = scalar_lea.vmem %s0, 780
  %s837 = smov 48
  %v838 = vld [vmem:[%s836] ss:$16 sm:%s837]
  %vm839 = vcmask 1045508
  %v840 = vsel %vm839, %v838, %v835
  %s841 = scalar_lea.vmem %s0, 780
  %s842 = smov 192
  %v843 = vld [vmem:[%s841] ss:$16 sm:%s842]
  %vm844 = vcmask 1047558
  %v845 = vsel %vm844, %v843, %v840
  %846 = vrot.lane.b32.xlu0 %v845, 48
  %v847 = vpop.permute.xlu0 %846
  %vm848 = vcmask 425344
  %s849 = scalar_lea.vmem %s1, 48
  %850 = vst.msk [vmem:[%s849] sm:$0xff] %vm848, %v847
  %s851 = scalar_lea.vmem %s0, 396
  %s852 = smov 3
  %v853 = vld [vmem:[%s851] ss:$16 sm:%s852]
  %s854 = scalar_lea.vmem %s0, 396
  %s855 = smov 12
  %v856 = vld [vmem:[%s854] ss:$16 sm:%s855]
  %vm857 = vcmask 1043458
  %v858 = vsel %vm857, %v856, %v853
  %s859 = scalar_lea.vmem %s0, 396
  %s860 = smov 48
  %v861 = vld [vmem:[%s859] ss:$16 sm:%s860]
  %vm862 = vcmask 1045508
  %v863 = vsel %vm862, %v861, %v858
  %s864 = scalar_lea.vmem %s0, 396
  %s865 = smov 192
  %v866 = vld [vmem:[%s864] ss:$16 sm:%s865]
  %vm867 = vcmask 1047558
  %v868 = vsel %vm867, %v866, %v863
  %869 = vrot.lane.b32.xlu0 %v868, 48
  %v870 = vpop.permute.xlu0 %869
  %vm871 = vcmask 425344
  %s872 = scalar_lea.vmem %s1, 24
  %873 = vst.msk [vmem:[%s872] sm:$0xff] %vm871, %v870
  %s874 = scalar_lea.vmem %s0, 908
  %s875 = smov 3
  %v876 = vld [vmem:[%s874] ss:$16 sm:%s875]
  %s877 = scalar_lea.vmem %s0, 908
  %s878 = smov 12
  %v879 = vld [vmem:[%s877] ss:$16 sm:%s878]
  %vm880 = vcmask 1043458
  %v881 = vsel %vm880, %v879, %v876
  %s882 = scalar_lea.vmem %s0, 908
  %s883 = smov 48
  %v884 = vld [vmem:[%s882] ss:$16 sm:%s883]
  %vm885 = vcmask 1045508
  %v886 = vsel %vm885, %v884, %v881
  %s887 = scalar_lea.vmem %s0, 908
  %s888 = smov 192
  %v889 = vld [vmem:[%s887] ss:$16 sm:%s888]
  %vm890 = vcmask 1047558
  %v891 = vsel %vm890, %v889, %v886
  %892 = vrot.lane.b32.xlu0 %v891, 48
  %v893 = vpop.permute.xlu0 %892
  %vm894 = vcmask 425344
  %s895 = scalar_lea.vmem %s1, 56
  %896 = vst.msk [vmem:[%s895] sm:$0xff] %vm894, %v893
  %s897 = scalar_lea.vmem %s0, 11
  %s898 = smov 3
  %v899 = vld [vmem:[%s897] ss:$16 sm:%s898]
  %s900 = scalar_lea.vmem %s0, 11
  %s901 = smov 12
  %v902 = vld [vmem:[%s900] ss:$16 sm:%s901]
  %vm903 = vcmask 1043458
  %v904 = vsel %vm903, %v902, %v899
  %s905 = scalar_lea.vmem %s0, 11
  %s906 = smov 48
  %v907 = vld [vmem:[%s905] ss:$16 sm:%s906]
  %vm908 = vcmask 1045508
  %v909 = vsel %vm908, %v907, %v904
  %s910 = scalar_lea.vmem %s0, 11
  %s911 = smov 192
  %v912 = vld [vmem:[%s910] ss:$16 sm:%s911]
  %vm913 = vcmask 1047558
  %v914 = vsel %vm913, %v912, %v909
  %915 = vrot.lane.b32.xlu0 %v914, 44
  %v916 = vpop.permute.xlu0 %915
  %vm917 = vcmask 392544
  %918 = vst.msk [vmem:[%s1] sm:$0xff] %vm917, %v916
  %s919 = scalar_lea.vmem %s0, 523
  %s920 = smov 3
  %v921 = vld [vmem:[%s919] ss:$16 sm:%s920]
  %s922 = scalar_lea.vmem %s0, 523
  %s923 = smov 12
  %v924 = vld [vmem:[%s922] ss:$16 sm:%s923]
  %vm925 = vcmask 1043458
  %v926 = vsel %vm925, %v924, %v921
  %s927 = scalar_lea.vmem %s0, 523
  %s928 = smov 48
  %v929 = vld [vmem:[%s927] ss:$16 sm:%s928]
  %vm930 = vcmask 1045508
  %v931 = vsel %vm930, %v929, %v926
  %s932 = scalar_lea.vmem %s0, 523
  %s933 = smov 192
  %v934 = vld [vmem:[%s932] ss:$16 sm:%s933]
  %vm935 = vcmask 1047558
  %v936 = vsel %vm935, %v934, %v931
  %937 = vrot.lane.b32.xlu0 %v936, 44
  %v938 = vpop.permute.xlu0 %937
  %vm939 = vcmask 392544
  %s940 = scalar_lea.vmem %s1, 32
  %941 = vst.msk [vmem:[%s940] sm:$0xff] %vm939, %v938
  %s942 = scalar_lea.vmem %s0, 139
  %s943 = smov 3
  %v944 = vld [vmem:[%s942] ss:$16 sm:%s943]
  %s945 = scalar_lea.vmem %s0, 139
  %s946 = smov 12
  %v947 = vld [vmem:[%s945] ss:$16 sm:%s946]
  %vm948 = vcmask 1043458
  %v949 = vsel %vm948, %v947, %v944
  %s950 = scalar_lea.vmem %s0, 139
  %s951 = smov 48
  %v952 = vld [vmem:[%s950] ss:$16 sm:%s951]
  %vm953 = vcmask 1045508
  %v954 = vsel %vm953, %v952, %v949
  %s955 = scalar_lea.vmem %s0, 139
  %s956 = smov 192
  %v957 = vld [vmem:[%s955] ss:$16 sm:%s956]
  %vm958 = vcmask 1047558
  %v959 = vsel %vm958, %v957, %v954
  %960 = vrot.lane.b32.xlu0 %v959, 44
  %v961 = vpop.permute.xlu0 %960
  %vm962 = vcmask 392544
  %s963 = scalar_lea.vmem %s1, 8
  %964 = vst.msk [vmem:[%s963] sm:$0xff] %vm962, %v961
  %s965 = scalar_lea.vmem %s0, 651
  %s966 = smov 3
  %v967 = vld [vmem:[%s965] ss:$16 sm:%s966]
  %s968 = scalar_lea.vmem %s0, 651
  %s969 = smov 12
  %v970 = vld [vmem:[%s968] ss:$16 sm:%s969]
  %vm971 = vcmask 1043458
  %v972 = vsel %vm971, %v970, %v967
  %s973 = scalar_lea.vmem %s0, 651
  %s974 = smov 48
  %v975 = vld [vmem:[%s973] ss:$16 sm:%s974]
  %vm976 = vcmask 1045508
  %v977 = vsel %vm976, %v975, %v972
  %s978 = scalar_lea.vmem %s0, 651
  %s979 = smov 192
  %v980 = vld [vmem:[%s978] ss:$16 sm:%s979]
  %vm981 = vcmask 1047558
  %v982 = vsel %vm981, %v980, %v977
  %983 = vrot.lane.b32.xlu0 %v982, 44
  %v984 = vpop.permute.xlu0 %983
  %vm985 = vcmask 392544
  %s986 = scalar_lea.vmem %s1, 40
  %987 = vst.msk [vmem:[%s986] sm:$0xff] %vm985, %v984
  %s988 = scalar_lea.vmem %s0, 267
  %s989 = smov 3
  %v990 = vld [vmem:[%s988] ss:$16 sm:%s989]
  %s991 = scalar_lea.vmem %s0, 267
  %s992 = smov 12
  %v993 = vld [vmem:[%s991] ss:$16 sm:%s992]
  %vm994 = vcmask 1043458
  %v995 = vsel %vm994, %v993, %v990
  %s996 = scalar_lea.vmem %s0, 267
  %s997 = smov 48
  %v998 = vld [vmem:[%s996] ss:$16 sm:%s997]
  %vm999 = vcmask 1045508
  %v1000 = vsel %vm999, %v998, %v995
  %s1001 = scalar_lea.vmem %s0, 267
  %s1002 = smov 192
  %v1003 = vld [vmem:[%s1001] ss:$16 sm:%s1002]
  %vm1004 = vcmask 1047558
  %v1005 = vsel %vm1004, %v1003, %v1000
  %1006 = vrot.lane.b32.xlu0 %v1005, 44
  %v1007 = vpop.permute.xlu0 %1006
  %vm1008 = vcmask 392544
  %s1009 = scalar_lea.vmem %s1, 16
  %1010 = vst.msk [vmem:[%s1009] sm:$0xff] %vm1008, %v1007
  %s1011 = scalar_lea.vmem %s0, 779
  %s1012 = smov 3
  %v1013 = vld [vmem:[%s1011] ss:$16 sm:%s1012]
  %s1014 = scalar_lea.vmem %s0, 779
  %s1015 = smov 12
  %v1016 = vld [vmem:[%s1014] ss:$16 sm:%s1015]
  %vm1017 = vcmask 1043458
  %v1018 = vsel %vm1017, %v1016, %v1013
  %s1019 = scalar_lea.vmem %s0, 779
  %s1020 = smov 48
  %v1021 = vld [vmem:[%s1019] ss:$16 sm:%s1020]
  %vm1022 = vcmask 1045508
  %v1023 = vsel %vm1022, %v1021, %v1018
  %s1024 = scalar_lea.vmem %s0, 779
  %s1025 = smov 192
  %v1026 = vld [vmem:[%s1024] ss:$16 sm:%s1025]
  %vm1027 = vcmask 1047558
  %v1028 = vsel %vm1027, %v1026, %v1023
  %1029 = vrot.lane.b32.xlu0 %v1028, 44
  %v1030 = vpop.permute.xlu0 %1029
  %vm1031 = vcmask 392544
  %s1032 = scalar_lea.vmem %s1, 48
  %1033 = vst.msk [vmem:[%s1032] sm:$0xff] %vm1031, %v1030
  %s1034 = scalar_lea.vmem %s0, 395
  %s1035 = smov 3
  %v1036 = vld [vmem:[%s1034] ss:$16 sm:%s1035]
  %s1037 = scalar_lea.vmem %s0, 395
  %s1038 = smov 12
  %v1039 = vld [vmem:[%s1037] ss:$16 sm:%s1038]
  %vm1040 = vcmask 1043458
  %v1041 = vsel %vm1040, %v1039, %v1036
  %s1042 = scalar_lea.vmem %s0, 395
  %s1043 = smov 48
  %v1044 = vld [vmem:[%s1042] ss:$16 sm:%s1043]
  %vm1045 = vcmask 1045508
  %v1046 = vsel %vm1045, %v1044, %v1041
  %s1047 = scalar_lea.vmem %s0, 395
  %s1048 = smov 192
  %v1049 = vld [vmem:[%s1047] ss:$16 sm:%s1048]
  %vm1050 = vcmask 1047558
  %v1051 = vsel %vm1050, %v1049, %v1046
  %1052 = vrot.lane.b32.xlu0 %v1051, 44
  %v1053 = vpop.permute.xlu0 %1052
  %vm1054 = vcmask 392544
  %s1055 = scalar_lea.vmem %s1, 24
  %1056 = vst.msk [vmem:[%s1055] sm:$0xff] %vm1054, %v1053
  %s1057 = scalar_lea.vmem %s0, 907
  %s1058 = smov 3
  %v1059 = vld [vmem:[%s1057] ss:$16 sm:%s1058]
  %s1060 = scalar_lea.vmem %s0, 907
  %s1061 = smov 12
  %v1062 = vld [vmem:[%s1060] ss:$16 sm:%s1061]
  %vm1063 = vcmask 1043458
  %v1064 = vsel %vm1063, %v1062, %v1059
  %s1065 = scalar_lea.vmem %s0, 907
  %s1066 = smov 48
  %v1067 = vld [vmem:[%s1065] ss:$16 sm:%s1066]
  %vm1068 = vcmask 1045508
  %v1069 = vsel %vm1068, %v1067, %v1064
  %s1070 = scalar_lea.vmem %s0, 907
  %s1071 = smov 192
  %v1072 = vld [vmem:[%s1070] ss:$16 sm:%s1071]
  %vm1073 = vcmask 1047558
  %v1074 = vsel %vm1073, %v1072, %v1069
  %1075 = vrot.lane.b32.xlu0 %v1074, 44
  %v1076 = vpop.permute.xlu0 %1075
  %vm1077 = vcmask 392544
  %s1078 = scalar_lea.vmem %s1, 56
  %1079 = vst.msk [vmem:[%s1078] sm:$0xff] %vm1077, %v1076
  %s1080 = scalar_lea.vmem %s0, 10
  %s1081 = smov 3
  %v1082 = vld [vmem:[%s1080] ss:$16 sm:%s1081]
  %s1083 = scalar_lea.vmem %s0, 10
  %s1084 = smov 12
  %v1085 = vld [vmem:[%s1083] ss:$16 sm:%s1084]
  %vm1086 = vcmask 1043458
  %v1087 = vsel %vm1086, %v1085, %v1082
  %s1088 = scalar_lea.vmem %s0, 10
  %s1089 = smov 48
  %v1090 = vld [vmem:[%s1088] ss:$16 sm:%s1089]
  %vm1091 = vcmask 1045508
  %v1092 = vsel %vm1091, %v1090, %v1087
  %s1093 = scalar_lea.vmem %s0, 10
  %s1094 = smov 192
  %v1095 = vld [vmem:[%s1093] ss:$16 sm:%s1094]
  %vm1096 = vcmask 1047558
  %v1097 = vsel %vm1096, %v1095, %v1092
  %1098 = vrot.lane.b32.xlu0 %v1097, 40
  %v1099 = vpop.permute.xlu0 %1098
  %vm1100 = vcmask 359744
  %1101 = vst.msk [vmem:[%s1] sm:$0xff] %vm1100, %v1099
  %s1102 = scalar_lea.vmem %s0, 522
  %s1103 = smov 3
  %v1104 = vld [vmem:[%s1102] ss:$16 sm:%s1103]
  %s1105 = scalar_lea.vmem %s0, 522
  %s1106 = smov 12
  %v1107 = vld [vmem:[%s1105] ss:$16 sm:%s1106]
  %vm1108 = vcmask 1043458
  %v1109 = vsel %vm1108, %v1107, %v1104
  %s1110 = scalar_lea.vmem %s0, 522
  %s1111 = smov 48
  %v1112 = vld [vmem:[%s1110] ss:$16 sm:%s1111]
  %vm1113 = vcmask 1045508
  %v1114 = vsel %vm1113, %v1112, %v1109
  %s1115 = scalar_lea.vmem %s0, 522
  %s1116 = smov 192
  %v1117 = vld [vmem:[%s1115] ss:$16 sm:%s1116]
  %vm1118 = vcmask 1047558
  %v1119 = vsel %vm1118, %v1117, %v1114
  %1120 = vrot.lane.b32.xlu0 %v1119, 40
  %v1121 = vpop.permute.xlu0 %1120
  %vm1122 = vcmask 359744
  %s1123 = scalar_lea.vmem %s1, 32
  %1124 = vst.msk [vmem:[%s1123] sm:$0xff] %vm1122, %v1121
  %s1125 = scalar_lea.vmem %s0, 138
  %s1126 = smov 3
  %v1127 = vld [vmem:[%s1125] ss:$16 sm:%s1126]
  %s1128 = scalar_lea.vmem %s0, 138
  %s1129 = smov 12
  %v1130 = vld [vmem:[%s1128] ss:$16 sm:%s1129]
  %vm1131 = vcmask 1043458
  %v1132 = vsel %vm1131, %v1130, %v1127
  %s1133 = scalar_lea.vmem %s0, 138
  %s1134 = smov 48
  %v1135 = vld [vmem:[%s1133] ss:$16 sm:%s1134]
  %vm1136 = vcmask 1045508
  %v1137 = vsel %vm1136, %v1135, %v1132
  %s1138 = scalar_lea.vmem %s0, 138
  %s1139 = smov 192
  %v1140 = vld [vmem:[%s1138] ss:$16 sm:%s1139]
  %vm1141 = vcmask 1047558
  %v1142 = vsel %vm1141, %v1140, %v1137
  %1143 = vrot.lane.b32.xlu0 %v1142, 40
  %v1144 = vpop.permute.xlu0 %1143
  %vm1145 = vcmask 359744
  %s1146 = scalar_lea.vmem %s1, 8
  %1147 = vst.msk [vmem:[%s1146] sm:$0xff] %vm1145, %v1144
  %s1148 = scalar_lea.vmem %s0, 650
  %s1149 = smov 3
  %v1150 = vld [vmem:[%s1148] ss:$16 sm:%s1149]
  %s1151 = scalar_lea.vmem %s0, 650
  %s1152 = smov 12
  %v1153 = vld [vmem:[%s1151] ss:$16 sm:%s1152]
  %vm1154 = vcmask 1043458
  %v1155 = vsel %vm1154, %v1153, %v1150
  %s1156 = scalar_lea.vmem %s0, 650
  %s1157 = smov 48
  %v1158 = vld [vmem:[%s1156] ss:$16 sm:%s1157]
  %vm1159 = vcmask 1045508
  %v1160 = vsel %vm1159, %v1158, %v1155
  %s1161 = scalar_lea.vmem %s0, 650
  %s1162 = smov 192
  %v1163 = vld [vmem:[%s1161] ss:$16 sm:%s1162]
  %vm1164 = vcmask 1047558
  %v1165 = vsel %vm1164, %v1163, %v1160
  %1166 = vrot.lane.b32.xlu0 %v1165, 40
  %v1167 = vpop.permute.xlu0 %1166
  %vm1168 = vcmask 359744
  %s1169 = scalar_lea.vmem %s1, 40
  %1170 = vst.msk [vmem:[%s1169] sm:$0xff] %vm1168, %v1167
  %s1171 = scalar_lea.vmem %s0, 266
  %s1172 = smov 3
  %v1173 = vld [vmem:[%s1171] ss:$16 sm:%s1172]
  %s1174 = scalar_lea.vmem %s0, 266
  %s1175 = smov 12
  %v1176 = vld [vmem:[%s1174] ss:$16 sm:%s1175]
  %vm1177 = vcmask 1043458
  %v1178 = vsel %vm1177, %v1176, %v1173
  %s1179 = scalar_lea.vmem %s0, 266
  %s1180 = smov 48
  %v1181 = vld [vmem:[%s1179] ss:$16 sm:%s1180]
  %vm1182 = vcmask 1045508
  %v1183 = vsel %vm1182, %v1181, %v1178
  %s1184 = scalar_lea.vmem %s0, 266
  %s1185 = smov 192
  %v1186 = vld [vmem:[%s1184] ss:$16 sm:%s1185]
  %vm1187 = vcmask 1047558
  %v1188 = vsel %vm1187, %v1186, %v1183
  %1189 = vrot.lane.b32.xlu0 %v1188, 40
  %v1190 = vpop.permute.xlu0 %1189
  %vm1191 = vcmask 359744
  %s1192 = scalar_lea.vmem %s1, 16
  %1193 = vst.msk [vmem:[%s1192] sm:$0xff] %vm1191, %v1190
  %s1194 = scalar_lea.vmem %s0, 778
  %s1195 = smov 3
  %v1196 = vld [vmem:[%s1194] ss:$16 sm:%s1195]
  %s1197 = scalar_lea.vmem %s0, 778
  %s1198 = smov 12
  %v1199 = vld [vmem:[%s1197] ss:$16 sm:%s1198]
  %vm1200 = vcmask 1043458
  %v1201 = vsel %vm1200, %v1199, %v1196
  %s1202 = scalar_lea.vmem %s0, 778
  %s1203 = smov 48
  %v1204 = vld [vmem:[%s1202] ss:$16 sm:%s1203]
  %vm1205 = vcmask 1045508
  %v1206 = vsel %vm1205, %v1204, %v1201
  %s1207 = scalar_lea.vmem %s0, 778
  %s1208 = smov 192
  %v1209 = vld [vmem:[%s1207] ss:$16 sm:%s1208]
  %vm1210 = vcmask 1047558
  %v1211 = vsel %vm1210, %v1209, %v1206
  %1212 = vrot.lane.b32.xlu0 %v1211, 40
  %v1213 = vpop.permute.xlu0 %1212
  %vm1214 = vcmask 359744
  %s1215 = scalar_lea.vmem %s1, 48
  %1216 = vst.msk [vmem:[%s1215] sm:$0xff] %vm1214, %v1213
  %s1217 = scalar_lea.vmem %s0, 394
  %s1218 = smov 3
  %v1219 = vld [vmem:[%s1217] ss:$16 sm:%s1218]
  %s1220 = scalar_lea.vmem %s0, 394
  %s1221 = smov 12
  %v1222 = vld [vmem:[%s1220] ss:$16 sm:%s1221]
  %vm1223 = vcmask 1043458
  %v1224 = vsel %vm1223, %v1222, %v1219
  %s1225 = scalar_lea.vmem %s0, 394
  %s1226 = smov 48
  %v1227 = vld [vmem:[%s1225] ss:$16 sm:%s1226]
  %vm1228 = vcmask 1045508
  %v1229 = vsel %vm1228, %v1227, %v1224
  %s1230 = scalar_lea.vmem %s0, 394
  %s1231 = smov 192
  %v1232 = vld [vmem:[%s1230] ss:$16 sm:%s1231]
  %vm1233 = vcmask 1047558
  %v1234 = vsel %vm1233, %v1232, %v1229
  %1235 = vrot.lane.b32.xlu0 %v1234, 40
  %v1236 = vpop.permute.xlu0 %1235
  %vm1237 = vcmask 359744
  %s1238 = scalar_lea.vmem %s1, 24
  %1239 = vst.msk [vmem:[%s1238] sm:$0xff] %vm1237, %v1236
  %s1240 = scalar_lea.vmem %s0, 906
  %s1241 = smov 3
  %v1242 = vld [vmem:[%s1240] ss:$16 sm:%s1241]
  %s1243 = scalar_lea.vmem %s0, 906
  %s1244 = smov 12
  %v1245 = vld [vmem:[%s1243] ss:$16 sm:%s1244]
  %vm1246 = vcmask 1043458
  %v1247 = vsel %vm1246, %v1245, %v1242
  %s1248 = scalar_lea.vmem %s0, 906
  %s1249 = smov 48
  %v1250 = vld [vmem:[%s1248] ss:$16 sm:%s1249]
  %vm1251 = vcmask 1045508
  %v1252 = vsel %vm1251, %v1250, %v1247
  %s1253 = scalar_lea.vmem %s0, 906
  %s1254 = smov 192
  %v1255 = vld [vmem:[%s1253] ss:$16 sm:%s1254]
  %vm1256 = vcmask 1047558
  %v1257 = vsel %vm1256, %v1255, %v1252
  %1258 = vrot.lane.b32.xlu0 %v1257, 40
  %v1259 = vpop.permute.xlu0 %1258
  %vm1260 = vcmask 359744
  %s1261 = scalar_lea.vmem %s1, 56
  %1262 = vst.msk [vmem:[%s1261] sm:$0xff] %vm1260, %v1259
  %s1263 = scalar_lea.vmem %s0, 9
  %s1264 = smov 3
  %v1265 = vld [vmem:[%s1263] ss:$16 sm:%s1264]
  %s1266 = scalar_lea.vmem %s0, 9
  %s1267 = smov 12
  %v1268 = vld [vmem:[%s1266] ss:$16 sm:%s1267]
  %vm1269 = vcmask 1043458
  %v1270 = vsel %vm1269, %v1268, %v1265
  %s1271 = scalar_lea.vmem %s0, 9
  %s1272 = smov 48
  %v1273 = vld [vmem:[%s1271] ss:$16 sm:%s1272]
  %vm1274 = vcmask 1045508
  %v1275 = vsel %vm1274, %v1273, %v1270
  %s1276 = scalar_lea.vmem %s0, 9
  %s1277 = smov 192
  %v1278 = vld [vmem:[%s1276] ss:$16 sm:%s1277]
  %vm1279 = vcmask 1047558
  %v1280 = vsel %vm1279, %v1278, %v1275
  %1281 = vrot.lane.b32.xlu0 %v1280, 36
  %v1282 = vpop.permute.xlu0 %1281
  %vm1283 = vcmask 326944
  %1284 = vst.msk [vmem:[%s1] sm:$0xff] %vm1283, %v1282
  %s1285 = scalar_lea.vmem %s0, 521
  %s1286 = smov 3
  %v1287 = vld [vmem:[%s1285] ss:$16 sm:%s1286]
  %s1288 = scalar_lea.vmem %s0, 521
  %s1289 = smov 12
  %v1290 = vld [vmem:[%s1288] ss:$16 sm:%s1289]
  %vm1291 = vcmask 1043458
  %v1292 = vsel %vm1291, %v1290, %v1287
  %s1293 = scalar_lea.vmem %s0, 521
  %s1294 = smov 48
  %v1295 = vld [vmem:[%s1293] ss:$16 sm:%s1294]
  %vm1296 = vcmask 1045508
  %v1297 = vsel %vm1296, %v1295, %v1292
  %s1298 = scalar_lea.vmem %s0, 521
  %s1299 = smov 192
  %v1300 = vld [vmem:[%s1298] ss:$16 sm:%s1299]
  %vm1301 = vcmask 1047558
  %v1302 = vsel %vm1301, %v1300, %v1297
  %1303 = vrot.lane.b32.xlu0 %v1302, 36
  %v1304 = vpop.permute.xlu0 %1303
  %vm1305 = vcmask 326944
  %s1306 = scalar_lea.vmem %s1, 32
  %1307 = vst.msk [vmem:[%s1306] sm:$0xff] %vm1305, %v1304
  %s1308 = scalar_lea.vmem %s0, 137
  %s1309 = smov 3
  %v1310 = vld [vmem:[%s1308] ss:$16 sm:%s1309]
  %s1311 = scalar_lea.vmem %s0, 137
  %s1312 = smov 12
  %v1313 = vld [vmem:[%s1311] ss:$16 sm:%s1312]
  %vm1314 = vcmask 1043458
  %v1315 = vsel %vm1314, %v1313, %v1310
  %s1316 = scalar_lea.vmem %s0, 137
  %s1317 = smov 48
  %v1318 = vld [vmem:[%s1316] ss:$16 sm:%s1317]
  %vm1319 = vcmask 1045508
  %v1320 = vsel %vm1319, %v1318, %v1315
  %s1321 = scalar_lea.vmem %s0, 137
  %s1322 = smov 192
  %v1323 = vld [vmem:[%s1321] ss:$16 sm:%s1322]
  %vm1324 = vcmask 1047558
  %v1325 = vsel %vm1324, %v1323, %v1320
  %1326 = vrot.lane.b32.xlu0 %v1325, 36
  %v1327 = vpop.permute.xlu0 %1326
  %vm1328 = vcmask 326944
  %s1329 = scalar_lea.vmem %s1, 8
  %1330 = vst.msk [vmem:[%s1329] sm:$0xff] %vm1328, %v1327
  %s1331 = scalar_lea.vmem %s0, 649
  %s1332 = smov 3
  %v1333 = vld [vmem:[%s1331] ss:$16 sm:%s1332]
  %s1334 = scalar_lea.vmem %s0, 649
  %s1335 = smov 12
  %v1336 = vld [vmem:[%s1334] ss:$16 sm:%s1335]
  %vm1337 = vcmask 1043458
  %v1338 = vsel %vm1337, %v1336, %v1333
  %s1339 = scalar_lea.vmem %s0, 649
  %s1340 = smov 48
  %v1341 = vld [vmem:[%s1339] ss:$16 sm:%s1340]
  %vm1342 = vcmask 1045508
  %v1343 = vsel %vm1342, %v1341, %v1338
  %s1344 = scalar_lea.vmem %s0, 649
  %s1345 = smov 192
  %v1346 = vld [vmem:[%s1344] ss:$16 sm:%s1345]
  %vm1347 = vcmask 1047558
  %v1348 = vsel %vm1347, %v1346, %v1343
  %1349 = vrot.lane.b32.xlu0 %v1348, 36
  %v1350 = vpop.permute.xlu0 %1349
  %vm1351 = vcmask 326944
  %s1352 = scalar_lea.vmem %s1, 40
  %1353 = vst.msk [vmem:[%s1352] sm:$0xff] %vm1351, %v1350
  %s1354 = scalar_lea.vmem %s0, 265
  %s1355 = smov 3
  %v1356 = vld [vmem:[%s1354] ss:$16 sm:%s1355]
  %s1357 = scalar_lea.vmem %s0, 265
  %s1358 = smov 12
  %v1359 = vld [vmem:[%s1357] ss:$16 sm:%s1358]
  %vm1360 = vcmask 1043458
  %v1361 = vsel %vm1360, %v1359, %v1356
  %s1362 = scalar_lea.vmem %s0, 265
  %s1363 = smov 48
  %v1364 = vld [vmem:[%s1362] ss:$16 sm:%s1363]
  %vm1365 = vcmask 1045508
  %v1366 = vsel %vm1365, %v1364, %v1361
  %s1367 = scalar_lea.vmem %s0, 265
  %s1368 = smov 192
  %v1369 = vld [vmem:[%s1367] ss:$16 sm:%s1368]
  %vm1370 = vcmask 1047558
  %v1371 = vsel %vm1370, %v1369, %v1366
  %1372 = vrot.lane.b32.xlu0 %v1371, 36
  %v1373 = vpop.permute.xlu0 %1372
  %vm1374 = vcmask 326944
  %s1375 = scalar_lea.vmem %s1, 16
  %1376 = vst.msk [vmem:[%s1375] sm:$0xff] %vm1374, %v1373
  %s1377 = scalar_lea.vmem %s0, 777
  %s1378 = smov 3
  %v1379 = vld [vmem:[%s1377] ss:$16 sm:%s1378]
  %s1380 = scalar_lea.vmem %s0, 777
  %s1381 = smov 12
  %v1382 = vld [vmem:[%s1380] ss:$16 sm:%s1381]
  %vm1383 = vcmask 1043458
  %v1384 = vsel %vm1383, %v1382, %v1379
  %s1385 = scalar_lea.vmem %s0, 777
  %s1386 = smov 48
  %v1387 = vld [vmem:[%s1385] ss:$16 sm:%s1386]
  %vm1388 = vcmask 1045508
  %v1389 = vsel %vm1388, %v1387, %v1384
  %s1390 = scalar_lea.vmem %s0, 777
  %s1391 = smov 192
  %v1392 = vld [vmem:[%s1390] ss:$16 sm:%s1391]
  %vm1393 = vcmask 1047558
  %v1394 = vsel %vm1393, %v1392, %v1389
  %1395 = vrot.lane.b32.xlu0 %v1394, 36
  %v1396 = vpop.permute.xlu0 %1395
  %vm1397 = vcmask 326944
  %s1398 = scalar_lea.vmem %s1, 48
  %1399 = vst.msk [vmem:[%s1398] sm:$0xff] %vm1397, %v1396
  %s1400 = scalar_lea.vmem %s0, 393
  %s1401 = smov 3
  %v1402 = vld [vmem:[%s1400] ss:$16 sm:%s1401]
  %s1403 = scalar_lea.vmem %s0, 393
  %s1404 = smov 12
  %v1405 = vld [vmem:[%s1403] ss:$16 sm:%s1404]
  %vm1406 = vcmask 1043458
  %v1407 = vsel %vm1406, %v1405, %v1402
  %s1408 = scalar_lea.vmem %s0, 393
  %s1409 = smov 48
  %v1410 = vld [vmem:[%s1408] ss:$16 sm:%s1409]
  %vm1411 = vcmask 1045508
  %v1412 = vsel %vm1411, %v1410, %v1407
  %s1413 = scalar_lea.vmem %s0, 393
  %s1414 = smov 192
  %v1415 = vld [vmem:[%s1413] ss:$16 sm:%s1414]
  %vm1416 = vcmask 1047558
  %v1417 = vsel %vm1416, %v1415, %v1412
  %1418 = vrot.lane.b32.xlu0 %v1417, 36
  %v1419 = vpop.permute.xlu0 %1418
  %vm1420 = vcmask 326944
  %s1421 = scalar_lea.vmem %s1, 24
  %1422 = vst.msk [vmem:[%s1421] sm:$0xff] %vm1420, %v1419
  %s1423 = scalar_lea.vmem %s0, 905
  %s1424 = smov 3
  %v1425 = vld [vmem:[%s1423] ss:$16 sm:%s1424]
  %s1426 = scalar_lea.vmem %s0, 905
  %s1427 = smov 12
  %v1428 = vld [vmem:[%s1426] ss:$16 sm:%s1427]
  %vm1429 = vcmask 1043458
  %v1430 = vsel %vm1429, %v1428, %v1425
  %s1431 = scalar_lea.vmem %s0, 905
  %s1432 = smov 48
  %v1433 = vld [vmem:[%s1431] ss:$16 sm:%s1432]
  %vm1434 = vcmask 1045508
  %v1435 = vsel %vm1434, %v1433, %v1430
  %s1436 = scalar_lea.vmem %s0, 905
  %s1437 = smov 192
  %v1438 = vld [vmem:[%s1436] ss:$16 sm:%s1437]
  %vm1439 = vcmask 1047558
  %v1440 = vsel %vm1439, %v1438, %v1435
  %1441 = vrot.lane.b32.xlu0 %v1440, 36
  %v1442 = vpop.permute.xlu0 %1441
  %vm1443 = vcmask 326944
  %s1444 = scalar_lea.vmem %s1, 56
  %1445 = vst.msk [vmem:[%s1444] sm:$0xff] %vm1443, %v1442
  %s1446 = scalar_lea.vmem %s0, 8
  %s1447 = smov 3
  %v1448 = vld [vmem:[%s1446] ss:$16 sm:%s1447]
  %s1449 = scalar_lea.vmem %s0, 8
  %s1450 = smov 12
  %v1451 = vld [vmem:[%s1449] ss:$16 sm:%s1450]
  %vm1452 = vcmask 1043458
  %v1453 = vsel %vm1452, %v1451, %v1448
  %s1454 = scalar_lea.vmem %s0, 8
  %s1455 = smov 48
  %v1456 = vld [vmem:[%s1454] ss:$16 sm:%s1455]
  %vm1457 = vcmask 1045508
  %v1458 = vsel %vm1457, %v1456, %v1453
  %s1459 = scalar_lea.vmem %s0, 8
  %s1460 = smov 192
  %v1461 = vld [vmem:[%s1459] ss:$16 sm:%s1460]
  %vm1462 = vcmask 1047558
  %v1463 = vsel %vm1462, %v1461, %v1458
  %1464 = vrot.lane.b32.xlu0 %v1463, 32
  %v1465 = vpop.permute.xlu0 %1464
  %vm1466 = vcmask 294144
  %1467 = vst.msk [vmem:[%s1] sm:$0xff] %vm1466, %v1465
  %s1468 = scalar_lea.vmem %s0, 520
  %s1469 = smov 3
  %v1470 = vld [vmem:[%s1468] ss:$16 sm:%s1469]
  %s1471 = scalar_lea.vmem %s0, 520
  %s1472 = smov 12
  %v1473 = vld [vmem:[%s1471] ss:$16 sm:%s1472]
  %vm1474 = vcmask 1043458
  %v1475 = vsel %vm1474, %v1473, %v1470
  %s1476 = scalar_lea.vmem %s0, 520
  %s1477 = smov 48
  %v1478 = vld [vmem:[%s1476] ss:$16 sm:%s1477]
  %vm1479 = vcmask 1045508
  %v1480 = vsel %vm1479, %v1478, %v1475
  %s1481 = scalar_lea.vmem %s0, 520
  %s1482 = smov 192
  %v1483 = vld [vmem:[%s1481] ss:$16 sm:%s1482]
  %vm1484 = vcmask 1047558
  %v1485 = vsel %vm1484, %v1483, %v1480
  %1486 = vrot.lane.b32.xlu0 %v1485, 32
  %v1487 = vpop.permute.xlu0 %1486
  %vm1488 = vcmask 294144
  %s1489 = scalar_lea.vmem %s1, 32
  %1490 = vst.msk [vmem:[%s1489] sm:$0xff] %vm1488, %v1487
  %s1491 = scalar_lea.vmem %s0, 136
  %s1492 = smov 3
  %v1493 = vld [vmem:[%s1491] ss:$16 sm:%s1492]
  %s1494 = scalar_lea.vmem %s0, 136
  %s1495 = smov 12
  %v1496 = vld [vmem:[%s1494] ss:$16 sm:%s1495]
  %vm1497 = vcmask 1043458
  %v1498 = vsel %vm1497, %v1496, %v1493
  %s1499 = scalar_lea.vmem %s0, 136
  %s1500 = smov 48
  %v1501 = vld [vmem:[%s1499] ss:$16 sm:%s1500]
  %vm1502 = vcmask 1045508
  %v1503 = vsel %vm1502, %v1501, %v1498
  %s1504 = scalar_lea.vmem %s0, 136
  %s1505 = smov 192
  %v1506 = vld [vmem:[%s1504] ss:$16 sm:%s1505]
  %vm1507 = vcmask 1047558
  %v1508 = vsel %vm1507, %v1506, %v1503
  %1509 = vrot.lane.b32.xlu0 %v1508, 32
  %v1510 = vpop.permute.xlu0 %1509
  %vm1511 = vcmask 294144
  %s1512 = scalar_lea.vmem %s1, 8
  %1513 = vst.msk [vmem:[%s1512] sm:$0xff] %vm1511, %v1510
  %s1514 = scalar_lea.vmem %s0, 648
  %s1515 = smov 3
  %v1516 = vld [vmem:[%s1514] ss:$16 sm:%s1515]
  %s1517 = scalar_lea.vmem %s0, 648
  %s1518 = smov 12
  %v1519 = vld [vmem:[%s1517] ss:$16 sm:%s1518]
  %vm1520 = vcmask 1043458
  %v1521 = vsel %vm1520, %v1519, %v1516
  %s1522 = scalar_lea.vmem %s0, 648
  %s1523 = smov 48
  %v1524 = vld [vmem:[%s1522] ss:$16 sm:%s1523]
  %vm1525 = vcmask 1045508
  %v1526 = vsel %vm1525, %v1524, %v1521
  %s1527 = scalar_lea.vmem %s0, 648
  %s1528 = smov 192
  %v1529 = vld [vmem:[%s1527] ss:$16 sm:%s1528]
  %vm1530 = vcmask 1047558
  %v1531 = vsel %vm1530, %v1529, %v1526
  %1532 = vrot.lane.b32.xlu0 %v1531, 32
  %v1533 = vpop.permute.xlu0 %1532
  %vm1534 = vcmask 294144
  %s1535 = scalar_lea.vmem %s1, 40
  %1536 = vst.msk [vmem:[%s1535] sm:$0xff] %vm1534, %v1533
  %s1537 = scalar_lea.vmem %s0, 264
  %s1538 = smov 3
  %v1539 = vld [vmem:[%s1537] ss:$16 sm:%s1538]
  %s1540 = scalar_lea.vmem %s0, 264
  %s1541 = smov 12
  %v1542 = vld [vmem:[%s1540] ss:$16 sm:%s1541]
  %vm1543 = vcmask 1043458
  %v1544 = vsel %vm1543, %v1542, %v1539
  %s1545 = scalar_lea.vmem %s0, 264
  %s1546 = smov 48
  %v1547 = vld [vmem:[%s1545] ss:$16 sm:%s1546]
  %vm1548 = vcmask 1045508
  %v1549 = vsel %vm1548, %v1547, %v1544
  %s1550 = scalar_lea.vmem %s0, 264
  %s1551 = smov 192
  %v1552 = vld [vmem:[%s1550] ss:$16 sm:%s1551]
  %vm1553 = vcmask 1047558
  %v1554 = vsel %vm1553, %v1552, %v1549
  %1555 = vrot.lane.b32.xlu0 %v1554, 32
  %v1556 = vpop.permute.xlu0 %1555
  %vm1557 = vcmask 294144
  %s1558 = scalar_lea.vmem %s1, 16
  %1559 = vst.msk [vmem:[%s1558] sm:$0xff] %vm1557, %v1556
  %s1560 = scalar_lea.vmem %s0, 776
  %s1561 = smov 3
  %v1562 = vld [vmem:[%s1560] ss:$16 sm:%s1561]
  %s1563 = scalar_lea.vmem %s0, 776
  %s1564 = smov 12
  %v1565 = vld [vmem:[%s1563] ss:$16 sm:%s1564]
  %vm1566 = vcmask 1043458
  %v1567 = vsel %vm1566, %v1565, %v1562
  %s1568 = scalar_lea.vmem %s0, 776
  %s1569 = smov 48
  %v1570 = vld [vmem:[%s1568] ss:$16 sm:%s1569]
  %vm1571 = vcmask 1045508
  %v1572 = vsel %vm1571, %v1570, %v1567
  %s1573 = scalar_lea.vmem %s0, 776
  %s1574 = smov 192
  %v1575 = vld [vmem:[%s1573] ss:$16 sm:%s1574]
  %vm1576 = vcmask 1047558
  %v1577 = vsel %vm1576, %v1575, %v1572
  %1578 = vrot.lane.b32.xlu0 %v1577, 32
  %v1579 = vpop.permute.xlu0 %1578
  %vm1580 = vcmask 294144
  %s1581 = scalar_lea.vmem %s1, 48
  %1582 = vst.msk [vmem:[%s1581] sm:$0xff] %vm1580, %v1579
  %s1583 = scalar_lea.vmem %s0, 392
  %s1584 = smov 3
  %v1585 = vld [vmem:[%s1583] ss:$16 sm:%s1584]
  %s1586 = scalar_lea.vmem %s0, 392
  %s1587 = smov 12
  %v1588 = vld [vmem:[%s1586] ss:$16 sm:%s1587]
  %vm1589 = vcmask 1043458
  %v1590 = vsel %vm1589, %v1588, %v1585
  %s1591 = scalar_lea.vmem %s0, 392
  %s1592 = smov 48
  %v1593 = vld [vmem:[%s1591] ss:$16 sm:%s1592]
  %vm1594 = vcmask 1045508
  %v1595 = vsel %vm1594, %v1593, %v1590
  %s1596 = scalar_lea.vmem %s0, 392
  %s1597 = smov 192
  %v1598 = vld [vmem:[%s1596] ss:$16 sm:%s1597]
  %vm1599 = vcmask 1047558
  %v1600 = vsel %vm1599, %v1598, %v1595
  %1601 = vrot.lane.b32.xlu0 %v1600, 32
  %v1602 = vpop.permute.xlu0 %1601
  %vm1603 = vcmask 294144
  %s1604 = scalar_lea.vmem %s1, 24
  %1605 = vst.msk [vmem:[%s1604] sm:$0xff] %vm1603, %v1602
  %s1606 = scalar_lea.vmem %s0, 904
  %s1607 = smov 3
  %v1608 = vld [vmem:[%s1606] ss:$16 sm:%s1607]
  %s1609 = scalar_lea.vmem %s0, 904
  %s1610 = smov 12
  %v1611 = vld [vmem:[%s1609] ss:$16 sm:%s1610]
  %vm1612 = vcmask 1043458
  %v1613 = vsel %vm1612, %v1611, %v1608
  %s1614 = scalar_lea.vmem %s0, 904
  %s1615 = smov 48
  %v1616 = vld [vmem:[%s1614] ss:$16 sm:%s1615]
  %vm1617 = vcmask 1045508
  %v1618 = vsel %vm1617, %v1616, %v1613
  %s1619 = scalar_lea.vmem %s0, 904
  %s1620 = smov 192
  %v1621 = vld [vmem:[%s1619] ss:$16 sm:%s1620]
  %vm1622 = vcmask 1047558
  %v1623 = vsel %vm1622, %v1621, %v1618
  %1624 = vrot.lane.b32.xlu0 %v1623, 32
  %v1625 = vpop.permute.xlu0 %1624
  %vm1626 = vcmask 294144
  %s1627 = scalar_lea.vmem %s1, 56
  %1628 = vst.msk [vmem:[%s1627] sm:$0xff] %vm1626, %v1625
  %s1629 = scalar_lea.vmem %s0, 7
  %s1630 = smov 3
  %v1631 = vld [vmem:[%s1629] ss:$16 sm:%s1630]
  %s1632 = scalar_lea.vmem %s0, 7
  %s1633 = smov 12
  %v1634 = vld [vmem:[%s1632] ss:$16 sm:%s1633]
  %vm1635 = vcmask 1043458
  %v1636 = vsel %vm1635, %v1634, %v1631
  %s1637 = scalar_lea.vmem %s0, 7
  %s1638 = smov 48
  %v1639 = vld [vmem:[%s1637] ss:$16 sm:%s1638]
  %vm1640 = vcmask 1045508
  %v1641 = vsel %vm1640, %v1639, %v1636
  %s1642 = scalar_lea.vmem %s0, 7
  %s1643 = smov 192
  %v1644 = vld [vmem:[%s1642] ss:$16 sm:%s1643]
  %vm1645 = vcmask 1047558
  %v1646 = vsel %vm1645, %v1644, %v1641
  %1647 = vrot.lane.b32.xlu0 %v1646, 28
  %v1648 = vpop.permute.xlu0 %1647
  %vm1649 = vcmask 261344
  %1650 = vst.msk [vmem:[%s1] sm:$0xff] %vm1649, %v1648
  %s1651 = scalar_lea.vmem %s0, 519
  %s1652 = smov 3
  %v1653 = vld [vmem:[%s1651] ss:$16 sm:%s1652]
  %s1654 = scalar_lea.vmem %s0, 519
  %s1655 = smov 12
  %v1656 = vld [vmem:[%s1654] ss:$16 sm:%s1655]
  %vm1657 = vcmask 1043458
  %v1658 = vsel %vm1657, %v1656, %v1653
  %s1659 = scalar_lea.vmem %s0, 519
  %s1660 = smov 48
  %v1661 = vld [vmem:[%s1659] ss:$16 sm:%s1660]
  %vm1662 = vcmask 1045508
  %v1663 = vsel %vm1662, %v1661, %v1658
  %s1664 = scalar_lea.vmem %s0, 519
  %s1665 = smov 192
  %v1666 = vld [vmem:[%s1664] ss:$16 sm:%s1665]
  %vm1667 = vcmask 1047558
  %v1668 = vsel %vm1667, %v1666, %v1663
  %1669 = vrot.lane.b32.xlu0 %v1668, 28
  %v1670 = vpop.permute.xlu0 %1669
  %vm1671 = vcmask 261344
  %s1672 = scalar_lea.vmem %s1, 32
  %1673 = vst.msk [vmem:[%s1672] sm:$0xff] %vm1671, %v1670
  %s1674 = scalar_lea.vmem %s0, 135
  %s1675 = smov 3
  %v1676 = vld [vmem:[%s1674] ss:$16 sm:%s1675]
  %s1677 = scalar_lea.vmem %s0, 135
  %s1678 = smov 12
  %v1679 = vld [vmem:[%s1677] ss:$16 sm:%s1678]
  %vm1680 = vcmask 1043458
  %v1681 = vsel %vm1680, %v1679, %v1676
  %s1682 = scalar_lea.vmem %s0, 135
  %s1683 = smov 48
  %v1684 = vld [vmem:[%s1682] ss:$16 sm:%s1683]
  %vm1685 = vcmask 1045508
  %v1686 = vsel %vm1685, %v1684, %v1681
  %s1687 = scalar_lea.vmem %s0, 135
  %s1688 = smov 192
  %v1689 = vld [vmem:[%s1687] ss:$16 sm:%s1688]
  %vm1690 = vcmask 1047558
  %v1691 = vsel %vm1690, %v1689, %v1686
  %1692 = vrot.lane.b32.xlu0 %v1691, 28
  %v1693 = vpop.permute.xlu0 %1692
  %vm1694 = vcmask 261344
  %s1695 = scalar_lea.vmem %s1, 8
  %1696 = vst.msk [vmem:[%s1695] sm:$0xff] %vm1694, %v1693
  %s1697 = scalar_lea.vmem %s0, 647
  %s1698 = smov 3
  %v1699 = vld [vmem:[%s1697] ss:$16 sm:%s1698]
  %s1700 = scalar_lea.vmem %s0, 647
  %s1701 = smov 12
  %v1702 = vld [vmem:[%s1700] ss:$16 sm:%s1701]
  %vm1703 = vcmask 1043458
  %v1704 = vsel %vm1703, %v1702, %v1699
  %s1705 = scalar_lea.vmem %s0, 647
  %s1706 = smov 48
  %v1707 = vld [vmem:[%s1705] ss:$16 sm:%s1706]
  %vm1708 = vcmask 1045508
  %v1709 = vsel %vm1708, %v1707, %v1704
  %s1710 = scalar_lea.vmem %s0, 647
  %s1711 = smov 192
  %v1712 = vld [vmem:[%s1710] ss:$16 sm:%s1711]
  %vm1713 = vcmask 1047558
  %v1714 = vsel %vm1713, %v1712, %v1709
  %1715 = vrot.lane.b32.xlu0 %v1714, 28
  %v1716 = vpop.permute.xlu0 %1715
  %vm1717 = vcmask 261344
  %s1718 = scalar_lea.vmem %s1, 40
  %1719 = vst.msk [vmem:[%s1718] sm:$0xff] %vm1717, %v1716
  %s1720 = scalar_lea.vmem %s0, 263
  %s1721 = smov 3
  %v1722 = vld [vmem:[%s1720] ss:$16 sm:%s1721]
  %s1723 = scalar_lea.vmem %s0, 263
  %s1724 = smov 12
  %v1725 = vld [vmem:[%s1723] ss:$16 sm:%s1724]
  %vm1726 = vcmask 1043458
  %v1727 = vsel %vm1726, %v1725, %v1722
  %s1728 = scalar_lea.vmem %s0, 263
  %s1729 = smov 48
  %v1730 = vld [vmem:[%s1728] ss:$16 sm:%s1729]
  %vm1731 = vcmask 1045508
  %v1732 = vsel %vm1731, %v1730, %v1727
  %s1733 = scalar_lea.vmem %s0, 263
  %s1734 = smov 192
  %v1735 = vld [vmem:[%s1733] ss:$16 sm:%s1734]
  %vm1736 = vcmask 1047558
  %v1737 = vsel %vm1736, %v1735, %v1732
  %1738 = vrot.lane.b32.xlu0 %v1737, 28
  %v1739 = vpop.permute.xlu0 %1738
  %vm1740 = vcmask 261344
  %s1741 = scalar_lea.vmem %s1, 16
  %1742 = vst.msk [vmem:[%s1741] sm:$0xff] %vm1740, %v1739
  %s1743 = scalar_lea.vmem %s0, 775
  %s1744 = smov 3
  %v1745 = vld [vmem:[%s1743] ss:$16 sm:%s1744]
  %s1746 = scalar_lea.vmem %s0, 775
  %s1747 = smov 12
  %v1748 = vld [vmem:[%s1746] ss:$16 sm:%s1747]
  %vm1749 = vcmask 1043458
  %v1750 = vsel %vm1749, %v1748, %v1745
  %s1751 = scalar_lea.vmem %s0, 775
  %s1752 = smov 48
  %v1753 = vld [vmem:[%s1751] ss:$16 sm:%s1752]
  %vm1754 = vcmask 1045508
  %v1755 = vsel %vm1754, %v1753, %v1750
  %s1756 = scalar_lea.vmem %s0, 775
  %s1757 = smov 192
  %v1758 = vld [vmem:[%s1756] ss:$16 sm:%s1757]
  %vm1759 = vcmask 1047558
  %v1760 = vsel %vm1759, %v1758, %v1755
  %1761 = vrot.lane.b32.xlu0 %v1760, 28
  %v1762 = vpop.permute.xlu0 %1761
  %vm1763 = vcmask 261344
  %s1764 = scalar_lea.vmem %s1, 48
  %1765 = vst.msk [vmem:[%s1764] sm:$0xff] %vm1763, %v1762
  %s1766 = scalar_lea.vmem %s0, 391
  %s1767 = smov 3
  %v1768 = vld [vmem:[%s1766] ss:$16 sm:%s1767]
  %s1769 = scalar_lea.vmem %s0, 391
  %s1770 = smov 12
  %v1771 = vld [vmem:[%s1769] ss:$16 sm:%s1770]
  %vm1772 = vcmask 1043458
  %v1773 = vsel %vm1772, %v1771, %v1768
  %s1774 = scalar_lea.vmem %s0, 391
  %s1775 = smov 48
  %v1776 = vld [vmem:[%s1774] ss:$16 sm:%s1775]
  %vm1777 = vcmask 1045508
  %v1778 = vsel %vm1777, %v1776, %v1773
  %s1779 = scalar_lea.vmem %s0, 391
  %s1780 = smov 192
  %v1781 = vld [vmem:[%s1779] ss:$16 sm:%s1780]
  %vm1782 = vcmask 1047558
  %v1783 = vsel %vm1782, %v1781, %v1778
  %1784 = vrot.lane.b32.xlu0 %v1783, 28
  %v1785 = vpop.permute.xlu0 %1784
  %vm1786 = vcmask 261344
  %s1787 = scalar_lea.vmem %s1, 24
  %1788 = vst.msk [vmem:[%s1787] sm:$0xff] %vm1786, %v1785
  %s1789 = scalar_lea.vmem %s0, 903
  %s1790 = smov 3
  %v1791 = vld [vmem:[%s1789] ss:$16 sm:%s1790]
  %s1792 = scalar_lea.vmem %s0, 903
  %s1793 = smov 12
  %v1794 = vld [vmem:[%s1792] ss:$16 sm:%s1793]
  %vm1795 = vcmask 1043458
  %v1796 = vsel %vm1795, %v1794, %v1791
  %s1797 = scalar_lea.vmem %s0, 903
  %s1798 = smov 48
  %v1799 = vld [vmem:[%s1797] ss:$16 sm:%s1798]
  %vm1800 = vcmask 1045508
  %v1801 = vsel %vm1800, %v1799, %v1796
  %s1802 = scalar_lea.vmem %s0, 903
  %s1803 = smov 192
  %v1804 = vld [vmem:[%s1802] ss:$16 sm:%s1803]
  %vm1805 = vcmask 1047558
  %v1806 = vsel %vm1805, %v1804, %v1801
  %1807 = vrot.lane.b32.xlu0 %v1806, 28
  %v1808 = vpop.permute.xlu0 %1807
  %vm1809 = vcmask 261344
  %s1810 = scalar_lea.vmem %s1, 56
  %1811 = vst.msk [vmem:[%s1810] sm:$0xff] %vm1809, %v1808
  %s1812 = scalar_lea.vmem %s0, 6
  %s1813 = smov 3
  %v1814 = vld [vmem:[%s1812] ss:$16 sm:%s1813]
  %s1815 = scalar_lea.vmem %s0, 6
  %s1816 = smov 12
  %v1817 = vld [vmem:[%s1815] ss:$16 sm:%s1816]
  %vm1818 = vcmask 1043458
  %v1819 = vsel %vm1818, %v1817, %v1814
  %s1820 = scalar_lea.vmem %s0, 6
  %s1821 = smov 48
  %v1822 = vld [vmem:[%s1820] ss:$16 sm:%s1821]
  %vm1823 = vcmask 1045508
  %v1824 = vsel %vm1823, %v1822, %v1819
  %s1825 = scalar_lea.vmem %s0, 6
  %s1826 = smov 192
  %v1827 = vld [vmem:[%s1825] ss:$16 sm:%s1826]
  %vm1828 = vcmask 1047558
  %v1829 = vsel %vm1828, %v1827, %v1824
  %1830 = vrot.lane.b32.xlu0 %v1829, 24
  %v1831 = vpop.permute.xlu0 %1830
  %vm1832 = vcmask 228544
  %1833 = vst.msk [vmem:[%s1] sm:$0xff] %vm1832, %v1831
  %s1834 = scalar_lea.vmem %s0, 518
  %s1835 = smov 3
  %v1836 = vld [vmem:[%s1834] ss:$16 sm:%s1835]
  %s1837 = scalar_lea.vmem %s0, 518
  %s1838 = smov 12
  %v1839 = vld [vmem:[%s1837] ss:$16 sm:%s1838]
  %vm1840 = vcmask 1043458
  %v1841 = vsel %vm1840, %v1839, %v1836
  %s1842 = scalar_lea.vmem %s0, 518
  %s1843 = smov 48
  %v1844 = vld [vmem:[%s1842] ss:$16 sm:%s1843]
  %vm1845 = vcmask 1045508
  %v1846 = vsel %vm1845, %v1844, %v1841
  %s1847 = scalar_lea.vmem %s0, 518
  %s1848 = smov 192
  %v1849 = vld [vmem:[%s1847] ss:$16 sm:%s1848]
  %vm1850 = vcmask 1047558
  %v1851 = vsel %vm1850, %v1849, %v1846
  %1852 = vrot.lane.b32.xlu0 %v1851, 24
  %v1853 = vpop.permute.xlu0 %1852
  %vm1854 = vcmask 228544
  %s1855 = scalar_lea.vmem %s1, 32
  %1856 = vst.msk [vmem:[%s1855] sm:$0xff] %vm1854, %v1853
  %s1857 = scalar_lea.vmem %s0, 134
  %s1858 = smov 3
  %v1859 = vld [vmem:[%s1857] ss:$16 sm:%s1858]
  %s1860 = scalar_lea.vmem %s0, 134
  %s1861 = smov 12
  %v1862 = vld [vmem:[%s1860] ss:$16 sm:%s1861]
  %vm1863 = vcmask 1043458
  %v1864 = vsel %vm1863, %v1862, %v1859
  %s1865 = scalar_lea.vmem %s0, 134
  %s1866 = smov 48
  %v1867 = vld [vmem:[%s1865] ss:$16 sm:%s1866]
  %vm1868 = vcmask 1045508
  %v1869 = vsel %vm1868, %v1867, %v1864
  %s1870 = scalar_lea.vmem %s0, 134
  %s1871 = smov 192
  %v1872 = vld [vmem:[%s1870] ss:$16 sm:%s1871]
  %vm1873 = vcmask 1047558
  %v1874 = vsel %vm1873, %v1872, %v1869
  %1875 = vrot.lane.b32.xlu0 %v1874, 24
  %v1876 = vpop.permute.xlu0 %1875
  %vm1877 = vcmask 228544
  %s1878 = scalar_lea.vmem %s1, 8
  %1879 = vst.msk [vmem:[%s1878] sm:$0xff] %vm1877, %v1876
  %s1880 = scalar_lea.vmem %s0, 646
  %s1881 = smov 3
  %v1882 = vld [vmem:[%s1880] ss:$16 sm:%s1881]
  %s1883 = scalar_lea.vmem %s0, 646
  %s1884 = smov 12
  %v1885 = vld [vmem:[%s1883] ss:$16 sm:%s1884]
  %vm1886 = vcmask 1043458
  %v1887 = vsel %vm1886, %v1885, %v1882
  %s1888 = scalar_lea.vmem %s0, 646
  %s1889 = smov 48
  %v1890 = vld [vmem:[%s1888] ss:$16 sm:%s1889]
  %vm1891 = vcmask 1045508
  %v1892 = vsel %vm1891, %v1890, %v1887
  %s1893 = scalar_lea.vmem %s0, 646
  %s1894 = smov 192
  %v1895 = vld [vmem:[%s1893] ss:$16 sm:%s1894]
  %vm1896 = vcmask 1047558
  %v1897 = vsel %vm1896, %v1895, %v1892
  %1898 = vrot.lane.b32.xlu0 %v1897, 24
  %v1899 = vpop.permute.xlu0 %1898
  %vm1900 = vcmask 228544
  %s1901 = scalar_lea.vmem %s1, 40
  %1902 = vst.msk [vmem:[%s1901] sm:$0xff] %vm1900, %v1899
  %s1903 = scalar_lea.vmem %s0, 262
  %s1904 = smov 3
  %v1905 = vld [vmem:[%s1903] ss:$16 sm:%s1904]
  %s1906 = scalar_lea.vmem %s0, 262
  %s1907 = smov 12
  %v1908 = vld [vmem:[%s1906] ss:$16 sm:%s1907]
  %vm1909 = vcmask 1043458
  %v1910 = vsel %vm1909, %v1908, %v1905
  %s1911 = scalar_lea.vmem %s0, 262
  %s1912 = smov 48
  %v1913 = vld [vmem:[%s1911] ss:$16 sm:%s1912]
  %vm1914 = vcmask 1045508
  %v1915 = vsel %vm1914, %v1913, %v1910
  %s1916 = scalar_lea.vmem %s0, 262
  %s1917 = smov 192
  %v1918 = vld [vmem:[%s1916] ss:$16 sm:%s1917]
  %vm1919 = vcmask 1047558
  %v1920 = vsel %vm1919, %v1918, %v1915
  %1921 = vrot.lane.b32.xlu0 %v1920, 24
  %v1922 = vpop.permute.xlu0 %1921
  %vm1923 = vcmask 228544
  %s1924 = scalar_lea.vmem %s1, 16
  %1925 = vst.msk [vmem:[%s1924] sm:$0xff] %vm1923, %v1922
  %s1926 = scalar_lea.vmem %s0, 774
  %s1927 = smov 3
  %v1928 = vld [vmem:[%s1926] ss:$16 sm:%s1927]
  %s1929 = scalar_lea.vmem %s0, 774
  %s1930 = smov 12
  %v1931 = vld [vmem:[%s1929] ss:$16 sm:%s1930]
  %vm1932 = vcmask 1043458
  %v1933 = vsel %vm1932, %v1931, %v1928
  %s1934 = scalar_lea.vmem %s0, 774
  %s1935 = smov 48
  %v1936 = vld [vmem:[%s1934] ss:$16 sm:%s1935]
  %vm1937 = vcmask 1045508
  %v1938 = vsel %vm1937, %v1936, %v1933
  %s1939 = scalar_lea.vmem %s0, 774
  %s1940 = smov 192
  %v1941 = vld [vmem:[%s1939] ss:$16 sm:%s1940]
  %vm1942 = vcmask 1047558
  %v1943 = vsel %vm1942, %v1941, %v1938
  %1944 = vrot.lane.b32.xlu0 %v1943, 24
  %v1945 = vpop.permute.xlu0 %1944
  %vm1946 = vcmask 228544
  %s1947 = scalar_lea.vmem %s1, 48
  %1948 = vst.msk [vmem:[%s1947] sm:$0xff] %vm1946, %v1945
  %s1949 = scalar_lea.vmem %s0, 390
  %s1950 = smov 3
  %v1951 = vld [vmem:[%s1949] ss:$16 sm:%s1950]
  %s1952 = scalar_lea.vmem %s0, 390
  %s1953 = smov 12
  %v1954 = vld [vmem:[%s1952] ss:$16 sm:%s1953]
  %vm1955 = vcmask 1043458
  %v1956 = vsel %vm1955, %v1954, %v1951
  %s1957 = scalar_lea.vmem %s0, 390
  %s1958 = smov 48
  %v1959 = vld [vmem:[%s1957] ss:$16 sm:%s1958]
  %vm1960 = vcmask 1045508
  %v1961 = vsel %vm1960, %v1959, %v1956
  %s1962 = scalar_lea.vmem %s0, 390
  %s1963 = smov 192
  %v1964 = vld [vmem:[%s1962] ss:$16 sm:%s1963]
  %vm1965 = vcmask 1047558
  %v1966 = vsel %vm1965, %v1964, %v1961
  %1967 = vrot.lane.b32.xlu0 %v1966, 24
  %v1968 = vpop.permute.xlu0 %1967
  %vm1969 = vcmask 228544
  %s1970 = scalar_lea.vmem %s1, 24
  %1971 = vst.msk [vmem:[%s1970] sm:$0xff] %vm1969, %v1968
  %s1972 = scalar_lea.vmem %s0, 902
  %s1973 = smov 3
  %v1974 = vld [vmem:[%s1972] ss:$16 sm:%s1973]
  %s1975 = scalar_lea.vmem %s0, 902
  %s1976 = smov 12
  %v1977 = vld [vmem:[%s1975] ss:$16 sm:%s1976]
  %vm1978 = vcmask 1043458
  %v1979 = vsel %vm1978, %v1977, %v1974
  %s1980 = scalar_lea.vmem %s0, 902
  %s1981 = smov 48
  %v1982 = vld [vmem:[%s1980] ss:$16 sm:%s1981]
  %vm1983 = vcmask 1045508
  %v1984 = vsel %vm1983, %v1982, %v1979
  %s1985 = scalar_lea.vmem %s0, 902
  %s1986 = smov 192
  %v1987 = vld [vmem:[%s1985] ss:$16 sm:%s1986]
  %vm1988 = vcmask 1047558
  %v1989 = vsel %vm1988, %v1987, %v1984
  %1990 = vrot.lane.b32.xlu0 %v1989, 24
  %v1991 = vpop.permute.xlu0 %1990
  %vm1992 = vcmask 228544
  %s1993 = scalar_lea.vmem %s1, 56
  %1994 = vst.msk [vmem:[%s1993] sm:$0xff] %vm1992, %v1991
  %s1995 = scalar_lea.vmem %s0, 5
  %s1996 = smov 3
  %v1997 = vld [vmem:[%s1995] ss:$16 sm:%s1996]
  %s1998 = scalar_lea.vmem %s0, 5
  %s1999 = smov 12
  %v2000 = vld [vmem:[%s1998] ss:$16 sm:%s1999]
  %vm2001 = vcmask 1043458
  %v2002 = vsel %vm2001, %v2000, %v1997
  %s2003 = scalar_lea.vmem %s0, 5
  %s2004 = smov 48
  %v2005 = vld [vmem:[%s2003] ss:$16 sm:%s2004]
  %vm2006 = vcmask 1045508
  %v2007 = vsel %vm2006, %v2005, %v2002
  %s2008 = scalar_lea.vmem %s0, 5
  %s2009 = smov 192
  %v2010 = vld [vmem:[%s2008] ss:$16 sm:%s2009]
  %vm2011 = vcmask 1047558
  %v2012 = vsel %vm2011, %v2010, %v2007
  %2013 = vrot.lane.b32.xlu0 %v2012, 20
  %v2014 = vpop.permute.xlu0 %2013
  %vm2015 = vcmask 195744
  %2016 = vst.msk [vmem:[%s1] sm:$0xff] %vm2015, %v2014
  %s2017 = scalar_lea.vmem %s0, 517
  %s2018 = smov 3
  %v2019 = vld [vmem:[%s2017] ss:$16 sm:%s2018]
  %s2020 = scalar_lea.vmem %s0, 517
  %s2021 = smov 12
  %v2022 = vld [vmem:[%s2020] ss:$16 sm:%s2021]
  %vm2023 = vcmask 1043458
  %v2024 = vsel %vm2023, %v2022, %v2019
  %s2025 = scalar_lea.vmem %s0, 517
  %s2026 = smov 48
  %v2027 = vld [vmem:[%s2025] ss:$16 sm:%s2026]
  %vm2028 = vcmask 1045508
  %v2029 = vsel %vm2028, %v2027, %v2024
  %s2030 = scalar_lea.vmem %s0, 517
  %s2031 = smov 192
  %v2032 = vld [vmem:[%s2030] ss:$16 sm:%s2031]
  %vm2033 = vcmask 1047558
  %v2034 = vsel %vm2033, %v2032, %v2029
  %2035 = vrot.lane.b32.xlu0 %v2034, 20
  %v2036 = vpop.permute.xlu0 %2035
  %vm2037 = vcmask 195744
  %s2038 = scalar_lea.vmem %s1, 32
  %2039 = vst.msk [vmem:[%s2038] sm:$0xff] %vm2037, %v2036
  %s2040 = scalar_lea.vmem %s0, 133
  %s2041 = smov 3
  %v2042 = vld [vmem:[%s2040] ss:$16 sm:%s2041]
  %s2043 = scalar_lea.vmem %s0, 133
  %s2044 = smov 12
  %v2045 = vld [vmem:[%s2043] ss:$16 sm:%s2044]
  %vm2046 = vcmask 1043458
  %v2047 = vsel %vm2046, %v2045, %v2042
  %s2048 = scalar_lea.vmem %s0, 133
  %s2049 = smov 48
  %v2050 = vld [vmem:[%s2048] ss:$16 sm:%s2049]
  %vm2051 = vcmask 1045508
  %v2052 = vsel %vm2051, %v2050, %v2047
  %s2053 = scalar_lea.vmem %s0, 133
  %s2054 = smov 192
  %v2055 = vld [vmem:[%s2053] ss:$16 sm:%s2054]
  %vm2056 = vcmask 1047558
  %v2057 = vsel %vm2056, %v2055, %v2052
  %2058 = vrot.lane.b32.xlu0 %v2057, 20
  %v2059 = vpop.permute.xlu0 %2058
  %vm2060 = vcmask 195744
  %s2061 = scalar_lea.vmem %s1, 8
  %2062 = vst.msk [vmem:[%s2061] sm:$0xff] %vm2060, %v2059
  %s2063 = scalar_lea.vmem %s0, 645
  %s2064 = smov 3
  %v2065 = vld [vmem:[%s2063] ss:$16 sm:%s2064]
  %s2066 = scalar_lea.vmem %s0, 645
  %s2067 = smov 12
  %v2068 = vld [vmem:[%s2066] ss:$16 sm:%s2067]
  %vm2069 = vcmask 1043458
  %v2070 = vsel %vm2069, %v2068, %v2065
  %s2071 = scalar_lea.vmem %s0, 645
  %s2072 = smov 48
  %v2073 = vld [vmem:[%s2071] ss:$16 sm:%s2072]
  %vm2074 = vcmask 1045508
  %v2075 = vsel %vm2074, %v2073, %v2070
  %s2076 = scalar_lea.vmem %s0, 645
  %s2077 = smov 192
  %v2078 = vld [vmem:[%s2076] ss:$16 sm:%s2077]
  %vm2079 = vcmask 1047558
  %v2080 = vsel %vm2079, %v2078, %v2075
  %2081 = vrot.lane.b32.xlu0 %v2080, 20
  %v2082 = vpop.permute.xlu0 %2081
  %vm2083 = vcmask 195744
  %s2084 = scalar_lea.vmem %s1, 40
  %2085 = vst.msk [vmem:[%s2084] sm:$0xff] %vm2083, %v2082
  %s2086 = scalar_lea.vmem %s0, 261
  %s2087 = smov 3
  %v2088 = vld [vmem:[%s2086] ss:$16 sm:%s2087]
  %s2089 = scalar_lea.vmem %s0, 261
  %s2090 = smov 12
  %v2091 = vld [vmem:[%s2089] ss:$16 sm:%s2090]
  %vm2092 = vcmask 1043458
  %v2093 = vsel %vm2092, %v2091, %v2088
  %s2094 = scalar_lea.vmem %s0, 261
  %s2095 = smov 48
  %v2096 = vld [vmem:[%s2094] ss:$16 sm:%s2095]
  %vm2097 = vcmask 1045508
  %v2098 = vsel %vm2097, %v2096, %v2093
  %s2099 = scalar_lea.vmem %s0, 261
  %s2100 = smov 192
  %v2101 = vld [vmem:[%s2099] ss:$16 sm:%s2100]
  %vm2102 = vcmask 1047558
  %v2103 = vsel %vm2102, %v2101, %v2098
  %2104 = vrot.lane.b32.xlu0 %v2103, 20
  %v2105 = vpop.permute.xlu0 %2104
  %vm2106 = vcmask 195744
  %s2107 = scalar_lea.vmem %s1, 16
  %2108 = vst.msk [vmem:[%s2107] sm:$0xff] %vm2106, %v2105
  %s2109 = scalar_lea.vmem %s0, 773
  %s2110 = smov 3
  %v2111 = vld [vmem:[%s2109] ss:$16 sm:%s2110]
  %s2112 = scalar_lea.vmem %s0, 773
  %s2113 = smov 12
  %v2114 = vld [vmem:[%s2112] ss:$16 sm:%s2113]
  %vm2115 = vcmask 1043458
  %v2116 = vsel %vm2115, %v2114, %v2111
  %s2117 = scalar_lea.vmem %s0, 773
  %s2118 = smov 48
  %v2119 = vld [vmem:[%s2117] ss:$16 sm:%s2118]
  %vm2120 = vcmask 1045508
  %v2121 = vsel %vm2120, %v2119, %v2116
  %s2122 = scalar_lea.vmem %s0, 773
  %s2123 = smov 192
  %v2124 = vld [vmem:[%s2122] ss:$16 sm:%s2123]
  %vm2125 = vcmask 1047558
  %v2126 = vsel %vm2125, %v2124, %v2121
  %2127 = vrot.lane.b32.xlu0 %v2126, 20
  %v2128 = vpop.permute.xlu0 %2127
  %vm2129 = vcmask 195744
  %s2130 = scalar_lea.vmem %s1, 48
  %2131 = vst.msk [vmem:[%s2130] sm:$0xff] %vm2129, %v2128
  %s2132 = scalar_lea.vmem %s0, 389
  %s2133 = smov 3
  %v2134 = vld [vmem:[%s2132] ss:$16 sm:%s2133]
  %s2135 = scalar_lea.vmem %s0, 389
  %s2136 = smov 12
  %v2137 = vld [vmem:[%s2135] ss:$16 sm:%s2136]
  %vm2138 = vcmask 1043458
  %v2139 = vsel %vm2138, %v2137, %v2134
  %s2140 = scalar_lea.vmem %s0, 389
  %s2141 = smov 48
  %v2142 = vld [vmem:[%s2140] ss:$16 sm:%s2141]
  %vm2143 = vcmask 1045508
  %v2144 = vsel %vm2143, %v2142, %v2139
  %s2145 = scalar_lea.vmem %s0, 389
  %s2146 = smov 192
  %v2147 = vld [vmem:[%s2145] ss:$16 sm:%s2146]
  %vm2148 = vcmask 1047558
  %v2149 = vsel %vm2148, %v2147, %v2144
  %2150 = vrot.lane.b32.xlu0 %v2149, 20
  %v2151 = vpop.permute.xlu0 %2150
  %vm2152 = vcmask 195744
  %s2153 = scalar_lea.vmem %s1, 24
  %2154 = vst.msk [vmem:[%s2153] sm:$0xff] %vm2152, %v2151
  %s2155 = scalar_lea.vmem %s0, 901
  %s2156 = smov 3
  %v2157 = vld [vmem:[%s2155] ss:$16 sm:%s2156]
  %s2158 = scalar_lea.vmem %s0, 901
  %s2159 = smov 12
  %v2160 = vld [vmem:[%s2158] ss:$16 sm:%s2159]
  %vm2161 = vcmask 1043458
  %v2162 = vsel %vm2161, %v2160, %v2157
  %s2163 = scalar_lea.vmem %s0, 901
  %s2164 = smov 48
  %v2165 = vld [vmem:[%s2163] ss:$16 sm:%s2164]
  %vm2166 = vcmask 1045508
  %v2167 = vsel %vm2166, %v2165, %v2162
  %s2168 = scalar_lea.vmem %s0, 901
  %s2169 = smov 192
  %v2170 = vld [vmem:[%s2168] ss:$16 sm:%s2169]
  %vm2171 = vcmask 1047558
  %v2172 = vsel %vm2171, %v2170, %v2167
  %2173 = vrot.lane.b32.xlu0 %v2172, 20
  %v2174 = vpop.permute.xlu0 %2173
  %vm2175 = vcmask 195744
  %s2176 = scalar_lea.vmem %s1, 56
  %2177 = vst.msk [vmem:[%s2176] sm:$0xff] %vm2175, %v2174
  %s2178 = scalar_lea.vmem %s0, 4
  %s2179 = smov 3
  %v2180 = vld [vmem:[%s2178] ss:$16 sm:%s2179]
  %s2181 = scalar_lea.vmem %s0, 4
  %s2182 = smov 12
  %v2183 = vld [vmem:[%s2181] ss:$16 sm:%s2182]
  %vm2184 = vcmask 1043458
  %v2185 = vsel %vm2184, %v2183, %v2180
  %s2186 = scalar_lea.vmem %s0, 4
  %s2187 = smov 48
  %v2188 = vld [vmem:[%s2186] ss:$16 sm:%s2187]
  %vm2189 = vcmask 1045508
  %v2190 = vsel %vm2189, %v2188, %v2185
  %s2191 = scalar_lea.vmem %s0, 4
  %s2192 = smov 192
  %v2193 = vld [vmem:[%s2191] ss:$16 sm:%s2192]
  %vm2194 = vcmask 1047558
  %v2195 = vsel %vm2194, %v2193, %v2190
  %2196 = vrot.lane.b32.xlu0 %v2195, 16
  %v2197 = vpop.permute.xlu0 %2196
  %vm2198 = vcmask 162944
  %2199 = vst.msk [vmem:[%s1] sm:$0xff] %vm2198, %v2197
  %s2200 = scalar_lea.vmem %s0, 516
  %s2201 = smov 3
  %v2202 = vld [vmem:[%s2200] ss:$16 sm:%s2201]
  %s2203 = scalar_lea.vmem %s0, 516
  %s2204 = smov 12
  %v2205 = vld [vmem:[%s2203] ss:$16 sm:%s2204]
  %vm2206 = vcmask 1043458
  %v2207 = vsel %vm2206, %v2205, %v2202
  %s2208 = scalar_lea.vmem %s0, 516
  %s2209 = smov 48
  %v2210 = vld [vmem:[%s2208] ss:$16 sm:%s2209]
  %vm2211 = vcmask 1045508
  %v2212 = vsel %vm2211, %v2210, %v2207
  %s2213 = scalar_lea.vmem %s0, 516
  %s2214 = smov 192
  %v2215 = vld [vmem:[%s2213] ss:$16 sm:%s2214]
  %vm2216 = vcmask 1047558
  %v2217 = vsel %vm2216, %v2215, %v2212
  %2218 = vrot.lane.b32.xlu0 %v2217, 16
  %v2219 = vpop.permute.xlu0 %2218
  %vm2220 = vcmask 162944
  %s2221 = scalar_lea.vmem %s1, 32
  %2222 = vst.msk [vmem:[%s2221] sm:$0xff] %vm2220, %v2219
  %s2223 = scalar_lea.vmem %s0, 132
  %s2224 = smov 3
  %v2225 = vld [vmem:[%s2223] ss:$16 sm:%s2224]
  %s2226 = scalar_lea.vmem %s0, 132
  %s2227 = smov 12
  %v2228 = vld [vmem:[%s2226] ss:$16 sm:%s2227]
  %vm2229 = vcmask 1043458
  %v2230 = vsel %vm2229, %v2228, %v2225
  %s2231 = scalar_lea.vmem %s0, 132
  %s2232 = smov 48
  %v2233 = vld [vmem:[%s2231] ss:$16 sm:%s2232]
  %vm2234 = vcmask 1045508
  %v2235 = vsel %vm2234, %v2233, %v2230
  %s2236 = scalar_lea.vmem %s0, 132
  %s2237 = smov 192
  %v2238 = vld [vmem:[%s2236] ss:$16 sm:%s2237]
  %vm2239 = vcmask 1047558
  %v2240 = vsel %vm2239, %v2238, %v2235
  %2241 = vrot.lane.b32.xlu0 %v2240, 16
  %v2242 = vpop.permute.xlu0 %2241
  %vm2243 = vcmask 162944
  %s2244 = scalar_lea.vmem %s1, 8
  %2245 = vst.msk [vmem:[%s2244] sm:$0xff] %vm2243, %v2242
  %s2246 = scalar_lea.vmem %s0, 644
  %s2247 = smov 3
  %v2248 = vld [vmem:[%s2246] ss:$16 sm:%s2247]
  %s2249 = scalar_lea.vmem %s0, 644
  %s2250 = smov 12
  %v2251 = vld [vmem:[%s2249] ss:$16 sm:%s2250]
  %vm2252 = vcmask 1043458
  %v2253 = vsel %vm2252, %v2251, %v2248
  %s2254 = scalar_lea.vmem %s0, 644
  %s2255 = smov 48
  %v2256 = vld [vmem:[%s2254] ss:$16 sm:%s2255]
  %vm2257 = vcmask 1045508
  %v2258 = vsel %vm2257, %v2256, %v2253
  %s2259 = scalar_lea.vmem %s0, 644
  %s2260 = smov 192
  %v2261 = vld [vmem:[%s2259] ss:$16 sm:%s2260]
  %vm2262 = vcmask 1047558
  %v2263 = vsel %vm2262, %v2261, %v2258
  %2264 = vrot.lane.b32.xlu0 %v2263, 16
  %v2265 = vpop.permute.xlu0 %2264
  %vm2266 = vcmask 162944
  %s2267 = scalar_lea.vmem %s1, 40
  %2268 = vst.msk [vmem:[%s2267] sm:$0xff] %vm2266, %v2265
  %s2269 = scalar_lea.vmem %s0, 260
  %s2270 = smov 3
  %v2271 = vld [vmem:[%s2269] ss:$16 sm:%s2270]
  %s2272 = scalar_lea.vmem %s0, 260
  %s2273 = smov 12
  %v2274 = vld [vmem:[%s2272] ss:$16 sm:%s2273]
  %vm2275 = vcmask 1043458
  %v2276 = vsel %vm2275, %v2274, %v2271
  %s2277 = scalar_lea.vmem %s0, 260
  %s2278 = smov 48
  %v2279 = vld [vmem:[%s2277] ss:$16 sm:%s2278]
  %vm2280 = vcmask 1045508
  %v2281 = vsel %vm2280, %v2279, %v2276
  %s2282 = scalar_lea.vmem %s0, 260
  %s2283 = smov 192
  %v2284 = vld [vmem:[%s2282] ss:$16 sm:%s2283]
  %vm2285 = vcmask 1047558
  %v2286 = vsel %vm2285, %v2284, %v2281
  %2287 = vrot.lane.b32.xlu0 %v2286, 16
  %v2288 = vpop.permute.xlu0 %2287
  %vm2289 = vcmask 162944
  %s2290 = scalar_lea.vmem %s1, 16
  %2291 = vst.msk [vmem:[%s2290] sm:$0xff] %vm2289, %v2288
  %s2292 = scalar_lea.vmem %s0, 772
  %s2293 = smov 3
  %v2294 = vld [vmem:[%s2292] ss:$16 sm:%s2293]
  %s2295 = scalar_lea.vmem %s0, 772
  %s2296 = smov 12
  %v2297 = vld [vmem:[%s2295] ss:$16 sm:%s2296]
  %vm2298 = vcmask 1043458
  %v2299 = vsel %vm2298, %v2297, %v2294
  %s2300 = scalar_lea.vmem %s0, 772
  %s2301 = smov 48
  %v2302 = vld [vmem:[%s2300] ss:$16 sm:%s2301]
  %vm2303 = vcmask 1045508
  %v2304 = vsel %vm2303, %v2302, %v2299
  %s2305 = scalar_lea.vmem %s0, 772
  %s2306 = smov 192
  %v2307 = vld [vmem:[%s2305] ss:$16 sm:%s2306]
  %vm2308 = vcmask 1047558
  %v2309 = vsel %vm2308, %v2307, %v2304
  %2310 = vrot.lane.b32.xlu0 %v2309, 16
  %v2311 = vpop.permute.xlu0 %2310
  %vm2312 = vcmask 162944
  %s2313 = scalar_lea.vmem %s1, 48
  %2314 = vst.msk [vmem:[%s2313] sm:$0xff] %vm2312, %v2311
  %s2315 = scalar_lea.vmem %s0, 388
  %s2316 = smov 3
  %v2317 = vld [vmem:[%s2315] ss:$16 sm:%s2316]
  %s2318 = scalar_lea.vmem %s0, 388
  %s2319 = smov 12
  %v2320 = vld [vmem:[%s2318] ss:$16 sm:%s2319]
  %vm2321 = vcmask 1043458
  %v2322 = vsel %vm2321, %v2320, %v2317
  %s2323 = scalar_lea.vmem %s0, 388
  %s2324 = smov 48
  %v2325 = vld [vmem:[%s2323] ss:$16 sm:%s2324]
  %vm2326 = vcmask 1045508
  %v2327 = vsel %vm2326, %v2325, %v2322
  %s2328 = scalar_lea.vmem %s0, 388
  %s2329 = smov 192
  %v2330 = vld [vmem:[%s2328] ss:$16 sm:%s2329]
  %vm2331 = vcmask 1047558
  %v2332 = vsel %vm2331, %v2330, %v2327
  %2333 = vrot.lane.b32.xlu0 %v2332, 16
  %v2334 = vpop.permute.xlu0 %2333
  %vm2335 = vcmask 162944
  %s2336 = scalar_lea.vmem %s1, 24
  %2337 = vst.msk [vmem:[%s2336] sm:$0xff] %vm2335, %v2334
  %s2338 = scalar_lea.vmem %s0, 900
  %s2339 = smov 3
  %v2340 = vld [vmem:[%s2338] ss:$16 sm:%s2339]
  %s2341 = scalar_lea.vmem %s0, 900
  %s2342 = smov 12
  %v2343 = vld [vmem:[%s2341] ss:$16 sm:%s2342]
  %vm2344 = vcmask 1043458
  %v2345 = vsel %vm2344, %v2343, %v2340
  %s2346 = scalar_lea.vmem %s0, 900
  %s2347 = smov 48
  %v2348 = vld [vmem:[%s2346] ss:$16 sm:%s2347]
  %vm2349 = vcmask 1045508
  %v2350 = vsel %vm2349, %v2348, %v2345
  %s2351 = scalar_lea.vmem %s0, 900
  %s2352 = smov 192
  %v2353 = vld [vmem:[%s2351] ss:$16 sm:%s2352]
  %vm2354 = vcmask 1047558
  %v2355 = vsel %vm2354, %v2353, %v2350
  %2356 = vrot.lane.b32.xlu0 %v2355, 16
  %v2357 = vpop.permute.xlu0 %2356
  %vm2358 = vcmask 162944
  %s2359 = scalar_lea.vmem %s1, 56
  %2360 = vst.msk [vmem:[%s2359] sm:$0xff] %vm2358, %v2357
  %s2361 = scalar_lea.vmem %s0, 3
  %s2362 = smov 3
  %v2363 = vld [vmem:[%s2361] ss:$16 sm:%s2362]
  %s2364 = scalar_lea.vmem %s0, 3
  %s2365 = smov 12
  %v2366 = vld [vmem:[%s2364] ss:$16 sm:%s2365]
  %vm2367 = vcmask 1043458
  %v2368 = vsel %vm2367, %v2366, %v2363
  %s2369 = scalar_lea.vmem %s0, 3
  %s2370 = smov 48
  %v2371 = vld [vmem:[%s2369] ss:$16 sm:%s2370]
  %vm2372 = vcmask 1045508
  %v2373 = vsel %vm2372, %v2371, %v2368
  %s2374 = scalar_lea.vmem %s0, 3
  %s2375 = smov 192
  %v2376 = vld [vmem:[%s2374] ss:$16 sm:%s2375]
  %vm2377 = vcmask 1047558
  %v2378 = vsel %vm2377, %v2376, %v2373
  %2379 = vrot.lane.b32.xlu0 %v2378, 12
  %v2380 = vpop.permute.xlu0 %2379
  %vm2381 = vcmask 130144
  %2382 = vst.msk [vmem:[%s1] sm:$0xff] %vm2381, %v2380
  %s2383 = scalar_lea.vmem %s0, 515
  %s2384 = smov 3
  %v2385 = vld [vmem:[%s2383] ss:$16 sm:%s2384]
  %s2386 = scalar_lea.vmem %s0, 515
  %s2387 = smov 12
  %v2388 = vld [vmem:[%s2386] ss:$16 sm:%s2387]
  %vm2389 = vcmask 1043458
  %v2390 = vsel %vm2389, %v2388, %v2385
  %s2391 = scalar_lea.vmem %s0, 515
  %s2392 = smov 48
  %v2393 = vld [vmem:[%s2391] ss:$16 sm:%s2392]
  %vm2394 = vcmask 1045508
  %v2395 = vsel %vm2394, %v2393, %v2390
  %s2396 = scalar_lea.vmem %s0, 515
  %s2397 = smov 192
  %v2398 = vld [vmem:[%s2396] ss:$16 sm:%s2397]
  %vm2399 = vcmask 1047558
  %v2400 = vsel %vm2399, %v2398, %v2395
  %2401 = vrot.lane.b32.xlu0 %v2400, 12
  %v2402 = vpop.permute.xlu0 %2401
  %vm2403 = vcmask 130144
  %s2404 = scalar_lea.vmem %s1, 32
  %2405 = vst.msk [vmem:[%s2404] sm:$0xff] %vm2403, %v2402
  %s2406 = scalar_lea.vmem %s0, 131
  %s2407 = smov 3
  %v2408 = vld [vmem:[%s2406] ss:$16 sm:%s2407]
  %s2409 = scalar_lea.vmem %s0, 131
  %s2410 = smov 12
  %v2411 = vld [vmem:[%s2409] ss:$16 sm:%s2410]
  %vm2412 = vcmask 1043458
  %v2413 = vsel %vm2412, %v2411, %v2408
  %s2414 = scalar_lea.vmem %s0, 131
  %s2415 = smov 48
  %v2416 = vld [vmem:[%s2414] ss:$16 sm:%s2415]
  %vm2417 = vcmask 1045508
  %v2418 = vsel %vm2417, %v2416, %v2413
  %s2419 = scalar_lea.vmem %s0, 131
  %s2420 = smov 192
  %v2421 = vld [vmem:[%s2419] ss:$16 sm:%s2420]
  %vm2422 = vcmask 1047558
  %v2423 = vsel %vm2422, %v2421, %v2418
  %2424 = vrot.lane.b32.xlu0 %v2423, 12
  %v2425 = vpop.permute.xlu0 %2424
  %vm2426 = vcmask 130144
  %s2427 = scalar_lea.vmem %s1, 8
  %2428 = vst.msk [vmem:[%s2427] sm:$0xff] %vm2426, %v2425
  %s2429 = scalar_lea.vmem %s0, 643
  %s2430 = smov 3
  %v2431 = vld [vmem:[%s2429] ss:$16 sm:%s2430]
  %s2432 = scalar_lea.vmem %s0, 643
  %s2433 = smov 12
  %v2434 = vld [vmem:[%s2432] ss:$16 sm:%s2433]
  %vm2435 = vcmask 1043458
  %v2436 = vsel %vm2435, %v2434, %v2431
  %s2437 = scalar_lea.vmem %s0, 643
  %s2438 = smov 48
  %v2439 = vld [vmem:[%s2437] ss:$16 sm:%s2438]
  %vm2440 = vcmask 1045508
  %v2441 = vsel %vm2440, %v2439, %v2436
  %s2442 = scalar_lea.vmem %s0, 643
  %s2443 = smov 192
  %v2444 = vld [vmem:[%s2442] ss:$16 sm:%s2443]
  %vm2445 = vcmask 1047558
  %v2446 = vsel %vm2445, %v2444, %v2441
  %2447 = vrot.lane.b32.xlu0 %v2446, 12
  %v2448 = vpop.permute.xlu0 %2447
  %vm2449 = vcmask 130144
  %s2450 = scalar_lea.vmem %s1, 40
  %2451 = vst.msk [vmem:[%s2450] sm:$0xff] %vm2449, %v2448
  %s2452 = scalar_lea.vmem %s0, 259
  %s2453 = smov 3
  %v2454 = vld [vmem:[%s2452] ss:$16 sm:%s2453]
  %s2455 = scalar_lea.vmem %s0, 259
  %s2456 = smov 12
  %v2457 = vld [vmem:[%s2455] ss:$16 sm:%s2456]
  %vm2458 = vcmask 1043458
  %v2459 = vsel %vm2458, %v2457, %v2454
  %s2460 = scalar_lea.vmem %s0, 259
  %s2461 = smov 48
  %v2462 = vld [vmem:[%s2460] ss:$16 sm:%s2461]
  %vm2463 = vcmask 1045508
  %v2464 = vsel %vm2463, %v2462, %v2459
  %s2465 = scalar_lea.vmem %s0, 259
  %s2466 = smov 192
  %v2467 = vld [vmem:[%s2465] ss:$16 sm:%s2466]
  %vm2468 = vcmask 1047558
  %v2469 = vsel %vm2468, %v2467, %v2464
  %2470 = vrot.lane.b32.xlu0 %v2469, 12
  %v2471 = vpop.permute.xlu0 %2470
  %vm2472 = vcmask 130144
  %s2473 = scalar_lea.vmem %s1, 16
  %2474 = vst.msk [vmem:[%s2473] sm:$0xff] %vm2472, %v2471
  %s2475 = scalar_lea.vmem %s0, 771
  %s2476 = smov 3
  %v2477 = vld [vmem:[%s2475] ss:$16 sm:%s2476]
  %s2478 = scalar_lea.vmem %s0, 771
  %s2479 = smov 12
  %v2480 = vld [vmem:[%s2478] ss:$16 sm:%s2479]
  %vm2481 = vcmask 1043458
  %v2482 = vsel %vm2481, %v2480, %v2477
  %s2483 = scalar_lea.vmem %s0, 771
  %s2484 = smov 48
  %v2485 = vld [vmem:[%s2483] ss:$16 sm:%s2484]
  %vm2486 = vcmask 1045508
  %v2487 = vsel %vm2486, %v2485, %v2482
  %s2488 = scalar_lea.vmem %s0, 771
  %s2489 = smov 192
  %v2490 = vld [vmem:[%s2488] ss:$16 sm:%s2489]
  %vm2491 = vcmask 1047558
  %v2492 = vsel %vm2491, %v2490, %v2487
  %2493 = vrot.lane.b32.xlu0 %v2492, 12
  %v2494 = vpop.permute.xlu0 %2493
  %vm2495 = vcmask 130144
  %s2496 = scalar_lea.vmem %s1, 48
  %2497 = vst.msk [vmem:[%s2496] sm:$0xff] %vm2495, %v2494
  %s2498 = scalar_lea.vmem %s0, 387
  %s2499 = smov 3
  %v2500 = vld [vmem:[%s2498] ss:$16 sm:%s2499]
  %s2501 = scalar_lea.vmem %s0, 387
  %s2502 = smov 12
  %v2503 = vld [vmem:[%s2501] ss:$16 sm:%s2502]
  %vm2504 = vcmask 1043458
  %v2505 = vsel %vm2504, %v2503, %v2500
  %s2506 = scalar_lea.vmem %s0, 387
  %s2507 = smov 48
  %v2508 = vld [vmem:[%s2506] ss:$16 sm:%s2507]
  %vm2509 = vcmask 1045508
  %v2510 = vsel %vm2509, %v2508, %v2505
  %s2511 = scalar_lea.vmem %s0, 387
  %s2512 = smov 192
  %v2513 = vld [vmem:[%s2511] ss:$16 sm:%s2512]
  %vm2514 = vcmask 1047558
  %v2515 = vsel %vm2514, %v2513, %v2510
  %2516 = vrot.lane.b32.xlu0 %v2515, 12
  %v2517 = vpop.permute.xlu0 %2516
  %vm2518 = vcmask 130144
  %s2519 = scalar_lea.vmem %s1, 24
  %2520 = vst.msk [vmem:[%s2519] sm:$0xff] %vm2518, %v2517
  %s2521 = scalar_lea.vmem %s0, 899
  %s2522 = smov 3
  %v2523 = vld [vmem:[%s2521] ss:$16 sm:%s2522]
  %s2524 = scalar_lea.vmem %s0, 899
  %s2525 = smov 12
  %v2526 = vld [vmem:[%s2524] ss:$16 sm:%s2525]
  %vm2527 = vcmask 1043458
  %v2528 = vsel %vm2527, %v2526, %v2523
  %s2529 = scalar_lea.vmem %s0, 899
  %s2530 = smov 48
  %v2531 = vld [vmem:[%s2529] ss:$16 sm:%s2530]
  %vm2532 = vcmask 1045508
  %v2533 = vsel %vm2532, %v2531, %v2528
  %s2534 = scalar_lea.vmem %s0, 899
  %s2535 = smov 192
  %v2536 = vld [vmem:[%s2534] ss:$16 sm:%s2535]
  %vm2537 = vcmask 1047558
  %v2538 = vsel %vm2537, %v2536, %v2533
  %2539 = vrot.lane.b32.xlu0 %v2538, 12
  %v2540 = vpop.permute.xlu0 %2539
  %vm2541 = vcmask 130144
  %s2542 = scalar_lea.vmem %s1, 56
  %2543 = vst.msk [vmem:[%s2542] sm:$0xff] %vm2541, %v2540
  %s2544 = scalar_lea.vmem %s0, 2
  %s2545 = smov 3
  %v2546 = vld [vmem:[%s2544] ss:$16 sm:%s2545]
  %s2547 = scalar_lea.vmem %s0, 2
  %s2548 = smov 12
  %v2549 = vld [vmem:[%s2547] ss:$16 sm:%s2548]
  %vm2550 = vcmask 1043458
  %v2551 = vsel %vm2550, %v2549, %v2546
  %s2552 = scalar_lea.vmem %s0, 2
  %s2553 = smov 48
  %v2554 = vld [vmem:[%s2552] ss:$16 sm:%s2553]
  %vm2555 = vcmask 1045508
  %v2556 = vsel %vm2555, %v2554, %v2551
  %s2557 = scalar_lea.vmem %s0, 2
  %s2558 = smov 192
  %v2559 = vld [vmem:[%s2557] ss:$16 sm:%s2558]
  %vm2560 = vcmask 1047558
  %v2561 = vsel %vm2560, %v2559, %v2556
  %2562 = vrot.lane.b32.xlu0 %v2561, 8
  %v2563 = vpop.permute.xlu0 %2562
  %vm2564 = vcmask 97344
  %2565 = vst.msk [vmem:[%s1] sm:$0xff] %vm2564, %v2563
  %s2566 = scalar_lea.vmem %s0, 514
  %s2567 = smov 3
  %v2568 = vld [vmem:[%s2566] ss:$16 sm:%s2567]
  %s2569 = scalar_lea.vmem %s0, 514
  %s2570 = smov 12
  %v2571 = vld [vmem:[%s2569] ss:$16 sm:%s2570]
  %vm2572 = vcmask 1043458
  %v2573 = vsel %vm2572, %v2571, %v2568
  %s2574 = scalar_lea.vmem %s0, 514
  %s2575 = smov 48
  %v2576 = vld [vmem:[%s2574] ss:$16 sm:%s2575]
  %vm2577 = vcmask 1045508
  %v2578 = vsel %vm2577, %v2576, %v2573
  %s2579 = scalar_lea.vmem %s0, 514
  %s2580 = smov 192
  %v2581 = vld [vmem:[%s2579] ss:$16 sm:%s2580]
  %vm2582 = vcmask 1047558
  %v2583 = vsel %vm2582, %v2581, %v2578
  %2584 = vrot.lane.b32.xlu0 %v2583, 8
  %v2585 = vpop.permute.xlu0 %2584
  %vm2586 = vcmask 97344
  %s2587 = scalar_lea.vmem %s1, 32
  %2588 = vst.msk [vmem:[%s2587] sm:$0xff] %vm2586, %v2585
  %s2589 = scalar_lea.vmem %s0, 130
  %s2590 = smov 3
  %v2591 = vld [vmem:[%s2589] ss:$16 sm:%s2590]
  %s2592 = scalar_lea.vmem %s0, 130
  %s2593 = smov 12
  %v2594 = vld [vmem:[%s2592] ss:$16 sm:%s2593]
  %vm2595 = vcmask 1043458
  %v2596 = vsel %vm2595, %v2594, %v2591
  %s2597 = scalar_lea.vmem %s0, 130
  %s2598 = smov 48
  %v2599 = vld [vmem:[%s2597] ss:$16 sm:%s2598]
  %vm2600 = vcmask 1045508
  %v2601 = vsel %vm2600, %v2599, %v2596
  %s2602 = scalar_lea.vmem %s0, 130
  %s2603 = smov 192
  %v2604 = vld [vmem:[%s2602] ss:$16 sm:%s2603]
  %vm2605 = vcmask 1047558
  %v2606 = vsel %vm2605, %v2604, %v2601
  %2607 = vrot.lane.b32.xlu0 %v2606, 8
  %v2608 = vpop.permute.xlu0 %2607
  %vm2609 = vcmask 97344
  %s2610 = scalar_lea.vmem %s1, 8
  %2611 = vst.msk [vmem:[%s2610] sm:$0xff] %vm2609, %v2608
  %s2612 = scalar_lea.vmem %s0, 642
  %s2613 = smov 3
  %v2614 = vld [vmem:[%s2612] ss:$16 sm:%s2613]
  %s2615 = scalar_lea.vmem %s0, 642
  %s2616 = smov 12
  %v2617 = vld [vmem:[%s2615] ss:$16 sm:%s2616]
  %vm2618 = vcmask 1043458
  %v2619 = vsel %vm2618, %v2617, %v2614
  %s2620 = scalar_lea.vmem %s0, 642
  %s2621 = smov 48
  %v2622 = vld [vmem:[%s2620] ss:$16 sm:%s2621]
  %vm2623 = vcmask 1045508
  %v2624 = vsel %vm2623, %v2622, %v2619
  %s2625 = scalar_lea.vmem %s0, 642
  %s2626 = smov 192
  %v2627 = vld [vmem:[%s2625] ss:$16 sm:%s2626]
  %vm2628 = vcmask 1047558
  %v2629 = vsel %vm2628, %v2627, %v2624
  %2630 = vrot.lane.b32.xlu0 %v2629, 8
  %v2631 = vpop.permute.xlu0 %2630
  %vm2632 = vcmask 97344
  %s2633 = scalar_lea.vmem %s1, 40
  %2634 = vst.msk [vmem:[%s2633] sm:$0xff] %vm2632, %v2631
  %s2635 = scalar_lea.vmem %s0, 258
  %s2636 = smov 3
  %v2637 = vld [vmem:[%s2635] ss:$16 sm:%s2636]
  %s2638 = scalar_lea.vmem %s0, 258
  %s2639 = smov 12
  %v2640 = vld [vmem:[%s2638] ss:$16 sm:%s2639]
  %vm2641 = vcmask 1043458
  %v2642 = vsel %vm2641, %v2640, %v2637
  %s2643 = scalar_lea.vmem %s0, 258
  %s2644 = smov 48
  %v2645 = vld [vmem:[%s2643] ss:$16 sm:%s2644]
  %vm2646 = vcmask 1045508
  %v2647 = vsel %vm2646, %v2645, %v2642
  %s2648 = scalar_lea.vmem %s0, 258
  %s2649 = smov 192
  %v2650 = vld [vmem:[%s2648] ss:$16 sm:%s2649]
  %vm2651 = vcmask 1047558
  %v2652 = vsel %vm2651, %v2650, %v2647
  %2653 = vrot.lane.b32.xlu0 %v2652, 8
  %v2654 = vpop.permute.xlu0 %2653
  %vm2655 = vcmask 97344
  %s2656 = scalar_lea.vmem %s1, 16
  %2657 = vst.msk [vmem:[%s2656] sm:$0xff] %vm2655, %v2654
  %s2658 = scalar_lea.vmem %s0, 770
  %s2659 = smov 3
  %v2660 = vld [vmem:[%s2658] ss:$16 sm:%s2659]
  %s2661 = scalar_lea.vmem %s0, 770
  %s2662 = smov 12
  %v2663 = vld [vmem:[%s2661] ss:$16 sm:%s2662]
  %vm2664 = vcmask 1043458
  %v2665 = vsel %vm2664, %v2663, %v2660
  %s2666 = scalar_lea.vmem %s0, 770
  %s2667 = smov 48
  %v2668 = vld [vmem:[%s2666] ss:$16 sm:%s2667]
  %vm2669 = vcmask 1045508
  %v2670 = vsel %vm2669, %v2668, %v2665
  %s2671 = scalar_lea.vmem %s0, 770
  %s2672 = smov 192
  %v2673 = vld [vmem:[%s2671] ss:$16 sm:%s2672]
  %vm2674 = vcmask 1047558
  %v2675 = vsel %vm2674, %v2673, %v2670
  %2676 = vrot.lane.b32.xlu0 %v2675, 8
  %v2677 = vpop.permute.xlu0 %2676
  %vm2678 = vcmask 97344
  %s2679 = scalar_lea.vmem %s1, 48
  %2680 = vst.msk [vmem:[%s2679] sm:$0xff] %vm2678, %v2677
  %s2681 = scalar_lea.vmem %s0, 386
  %s2682 = smov 3
  %v2683 = vld [vmem:[%s2681] ss:$16 sm:%s2682]
  %s2684 = scalar_lea.vmem %s0, 386
  %s2685 = smov 12
  %v2686 = vld [vmem:[%s2684] ss:$16 sm:%s2685]
  %vm2687 = vcmask 1043458
  %v2688 = vsel %vm2687, %v2686, %v2683
  %s2689 = scalar_lea.vmem %s0, 386
  %s2690 = smov 48
  %v2691 = vld [vmem:[%s2689] ss:$16 sm:%s2690]
  %vm2692 = vcmask 1045508
  %v2693 = vsel %vm2692, %v2691, %v2688
  %s2694 = scalar_lea.vmem %s0, 386
  %s2695 = smov 192
  %v2696 = vld [vmem:[%s2694] ss:$16 sm:%s2695]
  %vm2697 = vcmask 1047558
  %v2698 = vsel %vm2697, %v2696, %v2693
  %2699 = vrot.lane.b32.xlu0 %v2698, 8
  %v2700 = vpop.permute.xlu0 %2699
  %vm2701 = vcmask 97344
  %s2702 = scalar_lea.vmem %s1, 24
  %2703 = vst.msk [vmem:[%s2702] sm:$0xff] %vm2701, %v2700
  %s2704 = scalar_lea.vmem %s0, 898
  %s2705 = smov 3
  %v2706 = vld [vmem:[%s2704] ss:$16 sm:%s2705]
  %s2707 = scalar_lea.vmem %s0, 898
  %s2708 = smov 12
  %v2709 = vld [vmem:[%s2707] ss:$16 sm:%s2708]
  %vm2710 = vcmask 1043458
  %v2711 = vsel %vm2710, %v2709, %v2706
  %s2712 = scalar_lea.vmem %s0, 898
  %s2713 = smov 48
  %v2714 = vld [vmem:[%s2712] ss:$16 sm:%s2713]
  %vm2715 = vcmask 1045508
  %v2716 = vsel %vm2715, %v2714, %v2711
  %s2717 = scalar_lea.vmem %s0, 898
  %s2718 = smov 192
  %v2719 = vld [vmem:[%s2717] ss:$16 sm:%s2718]
  %vm2720 = vcmask 1047558
  %v2721 = vsel %vm2720, %v2719, %v2716
  %2722 = vrot.lane.b32.xlu0 %v2721, 8
  %v2723 = vpop.permute.xlu0 %2722
  %vm2724 = vcmask 97344
  %s2725 = scalar_lea.vmem %s1, 56
  %2726 = vst.msk [vmem:[%s2725] sm:$0xff] %vm2724, %v2723
  %s2727 = scalar_lea.vmem %s0, 1
  %s2728 = smov 3
  %v2729 = vld [vmem:[%s2727] ss:$16 sm:%s2728]
  %s2730 = scalar_lea.vmem %s0, 1
  %s2731 = smov 12
  %v2732 = vld [vmem:[%s2730] ss:$16 sm:%s2731]
  %vm2733 = vcmask 1043458
  %v2734 = vsel %vm2733, %v2732, %v2729
  %s2735 = scalar_lea.vmem %s0, 1
  %s2736 = smov 48
  %v2737 = vld [vmem:[%s2735] ss:$16 sm:%s2736]
  %vm2738 = vcmask 1045508
  %v2739 = vsel %vm2738, %v2737, %v2734
  %s2740 = scalar_lea.vmem %s0, 1
  %s2741 = smov 192
  %v2742 = vld [vmem:[%s2740] ss:$16 sm:%s2741]
  %vm2743 = vcmask 1047558
  %v2744 = vsel %vm2743, %v2742, %v2739
  %2745 = vrot.lane.b32.xlu0 %v2744, 4
  %v2746 = vpop.permute.xlu0 %2745
  %vm2747 = vcmask 64544
  %2748 = vst.msk [vmem:[%s1] sm:$0xff] %vm2747, %v2746
  %s2749 = scalar_lea.vmem %s0, 513
  %s2750 = smov 3
  %v2751 = vld [vmem:[%s2749] ss:$16 sm:%s2750]
  %s2752 = scalar_lea.vmem %s0, 513
  %s2753 = smov 12
  %v2754 = vld [vmem:[%s2752] ss:$16 sm:%s2753]
  %vm2755 = vcmask 1043458
  %v2756 = vsel %vm2755, %v2754, %v2751
  %s2757 = scalar_lea.vmem %s0, 513
  %s2758 = smov 48
  %v2759 = vld [vmem:[%s2757] ss:$16 sm:%s2758]
  %vm2760 = vcmask 1045508
  %v2761 = vsel %vm2760, %v2759, %v2756
  %s2762 = scalar_lea.vmem %s0, 513
  %s2763 = smov 192
  %v2764 = vld [vmem:[%s2762] ss:$16 sm:%s2763]
  %vm2765 = vcmask 1047558
  %v2766 = vsel %vm2765, %v2764, %v2761
  %2767 = vrot.lane.b32.xlu0 %v2766, 4
  %v2768 = vpop.permute.xlu0 %2767
  %vm2769 = vcmask 64544
  %s2770 = scalar_lea.vmem %s1, 32
  %2771 = vst.msk [vmem:[%s2770] sm:$0xff] %vm2769, %v2768
  %s2772 = scalar_lea.vmem %s0, 129
  %s2773 = smov 3
  %v2774 = vld [vmem:[%s2772] ss:$16 sm:%s2773]
  %s2775 = scalar_lea.vmem %s0, 129
  %s2776 = smov 12
  %v2777 = vld [vmem:[%s2775] ss:$16 sm:%s2776]
  %vm2778 = vcmask 1043458
  %v2779 = vsel %vm2778, %v2777, %v2774
  %s2780 = scalar_lea.vmem %s0, 129
  %s2781 = smov 48
  %v2782 = vld [vmem:[%s2780] ss:$16 sm:%s2781]
  %vm2783 = vcmask 1045508
  %v2784 = vsel %vm2783, %v2782, %v2779
  %s2785 = scalar_lea.vmem %s0, 129
  %s2786 = smov 192
  %v2787 = vld [vmem:[%s2785] ss:$16 sm:%s2786]
  %vm2788 = vcmask 1047558
  %v2789 = vsel %vm2788, %v2787, %v2784
  %2790 = vrot.lane.b32.xlu0 %v2789, 4
  %v2791 = vpop.permute.xlu0 %2790
  %vm2792 = vcmask 64544
  %s2793 = scalar_lea.vmem %s1, 8
  %2794 = vst.msk [vmem:[%s2793] sm:$0xff] %vm2792, %v2791
  %s2795 = scalar_lea.vmem %s0, 641
  %s2796 = smov 3
  %v2797 = vld [vmem:[%s2795] ss:$16 sm:%s2796]
  %s2798 = scalar_lea.vmem %s0, 641
  %s2799 = smov 12
  %v2800 = vld [vmem:[%s2798] ss:$16 sm:%s2799]
  %vm2801 = vcmask 1043458
  %v2802 = vsel %vm2801, %v2800, %v2797
  %s2803 = scalar_lea.vmem %s0, 641
  %s2804 = smov 48
  %v2805 = vld [vmem:[%s2803] ss:$16 sm:%s2804]
  %vm2806 = vcmask 1045508
  %v2807 = vsel %vm2806, %v2805, %v2802
  %s2808 = scalar_lea.vmem %s0, 641
  %s2809 = smov 192
  %v2810 = vld [vmem:[%s2808] ss:$16 sm:%s2809]
  %vm2811 = vcmask 1047558
  %v2812 = vsel %vm2811, %v2810, %v2807
  %2813 = vrot.lane.b32.xlu0 %v2812, 4
  %v2814 = vpop.permute.xlu0 %2813
  %vm2815 = vcmask 64544
  %s2816 = scalar_lea.vmem %s1, 40
  %2817 = vst.msk [vmem:[%s2816] sm:$0xff] %vm2815, %v2814
  %s2818 = scalar_lea.vmem %s0, 257
  %s2819 = smov 3
  %v2820 = vld [vmem:[%s2818] ss:$16 sm:%s2819]
  %s2821 = scalar_lea.vmem %s0, 257
  %s2822 = smov 12
  %v2823 = vld [vmem:[%s2821] ss:$16 sm:%s2822]
  %vm2824 = vcmask 1043458
  %v2825 = vsel %vm2824, %v2823, %v2820
  %s2826 = scalar_lea.vmem %s0, 257
  %s2827 = smov 48
  %v2828 = vld [vmem:[%s2826] ss:$16 sm:%s2827]
  %vm2829 = vcmask 1045508
  %v2830 = vsel %vm2829, %v2828, %v2825
  %s2831 = scalar_lea.vmem %s0, 257
  %s2832 = smov 192
  %v2833 = vld [vmem:[%s2831] ss:$16 sm:%s2832]
  %vm2834 = vcmask 1047558
  %v2835 = vsel %vm2834, %v2833, %v2830
  %2836 = vrot.lane.b32.xlu0 %v2835, 4
  %v2837 = vpop.permute.xlu0 %2836
  %vm2838 = vcmask 64544
  %s2839 = scalar_lea.vmem %s1, 16
  %2840 = vst.msk [vmem:[%s2839] sm:$0xff] %vm2838, %v2837
  %s2841 = scalar_lea.vmem %s0, 769
  %s2842 = smov 3
  %v2843 = vld [vmem:[%s2841] ss:$16 sm:%s2842]
  %s2844 = scalar_lea.vmem %s0, 769
  %s2845 = smov 12
  %v2846 = vld [vmem:[%s2844] ss:$16 sm:%s2845]
  %vm2847 = vcmask 1043458
  %v2848 = vsel %vm2847, %v2846, %v2843
  %s2849 = scalar_lea.vmem %s0, 769
  %s2850 = smov 48
  %v2851 = vld [vmem:[%s2849] ss:$16 sm:%s2850]
  %vm2852 = vcmask 1045508
  %v2853 = vsel %vm2852, %v2851, %v2848
  %s2854 = scalar_lea.vmem %s0, 769
  %s2855 = smov 192
  %v2856 = vld [vmem:[%s2854] ss:$16 sm:%s2855]
  %vm2857 = vcmask 1047558
  %v2858 = vsel %vm2857, %v2856, %v2853
  %2859 = vrot.lane.b32.xlu0 %v2858, 4
  %v2860 = vpop.permute.xlu0 %2859
  %vm2861 = vcmask 64544
  %s2862 = scalar_lea.vmem %s1, 48
  %2863 = vst.msk [vmem:[%s2862] sm:$0xff] %vm2861, %v2860
  %s2864 = scalar_lea.vmem %s0, 385
  %s2865 = smov 3
  %v2866 = vld [vmem:[%s2864] ss:$16 sm:%s2865]
  %s2867 = scalar_lea.vmem %s0, 385
  %s2868 = smov 12
  %v2869 = vld [vmem:[%s2867] ss:$16 sm:%s2868]
  %vm2870 = vcmask 1043458
  %v2871 = vsel %vm2870, %v2869, %v2866
  %s2872 = scalar_lea.vmem %s0, 385
  %s2873 = smov 48
  %v2874 = vld [vmem:[%s2872] ss:$16 sm:%s2873]
  %vm2875 = vcmask 1045508
  %v2876 = vsel %vm2875, %v2874, %v2871
  %s2877 = scalar_lea.vmem %s0, 385
  %s2878 = smov 192
  %v2879 = vld [vmem:[%s2877] ss:$16 sm:%s2878]
  %vm2880 = vcmask 1047558
  %v2881 = vsel %vm2880, %v2879, %v2876
  %2882 = vrot.lane.b32.xlu0 %v2881, 4
  %v2883 = vpop.permute.xlu0 %2882
  %vm2884 = vcmask 64544
  %s2885 = scalar_lea.vmem %s1, 24
  %2886 = vst.msk [vmem:[%s2885] sm:$0xff] %vm2884, %v2883
  %s2887 = scalar_lea.vmem %s0, 897
  %s2888 = smov 3
  %v2889 = vld [vmem:[%s2887] ss:$16 sm:%s2888]
  %s2890 = scalar_lea.vmem %s0, 897
  %s2891 = smov 12
  %v2892 = vld [vmem:[%s2890] ss:$16 sm:%s2891]
  %vm2893 = vcmask 1043458
  %v2894 = vsel %vm2893, %v2892, %v2889
  %s2895 = scalar_lea.vmem %s0, 897
  %s2896 = smov 48
  %v2897 = vld [vmem:[%s2895] ss:$16 sm:%s2896]
  %vm2898 = vcmask 1045508
  %v2899 = vsel %vm2898, %v2897, %v2894
  %s2900 = scalar_lea.vmem %s0, 897
  %s2901 = smov 192
  %v2902 = vld [vmem:[%s2900] ss:$16 sm:%s2901]
  %vm2903 = vcmask 1047558
  %v2904 = vsel %vm2903, %v2902, %v2899
  %2905 = vrot.lane.b32.xlu0 %v2904, 4
  %v2906 = vpop.permute.xlu0 %2905
  %vm2907 = vcmask 64544
  %s2908 = scalar_lea.vmem %s1, 56
  %2909 = vst.msk [vmem:[%s2908] sm:$0xff] %vm2907, %v2906

// kernel: contextual_cell.1
$region0: #{contextual_cell.1}
  #allocation0 [shape = 'u32[]', space=smem, size = 0x4, offset = 0x4, fixed_abs, tag = 'smem constant byte address 0x4 - core index']
  #allocation1 [shape = 'u32[72,128]{1,0:T(1,128)}', space=vmem, size = 0x9000, scoped, tag = 'internal scratch']
  %s0 = inlined_call_operand.vmem [shape: bf16[2,18,72], index: 0, kind: input, shape index: {}]
  %s1 = inlined_call_operand.vmem [shape: bf16[3,72,64], index: 1, kind: input, shape index: {}]
  %s2 = inlined_call_operand.vmem [shape: bf16[72,64], index: 2, kind: input, shape index: {}]
  %s3 = inlined_call_operand.vmem [shape: f32[64,64], index: 3, kind: input, shape index: {}]
  %s4 = inlined_call_operand.vmem [shape: f32[2,16,64], index: 4, kind: output, shape index: {}]
  %s5 = sld [smem:[#allocation0]]
  $region49: #{contextual_cell.1} parent=0
    _
  %s7 = ssub.s32 1, %s5
  %s8 = scalar_select 0, %s7, %s5
  loop: start=0, step=1, limit=4
  $region2: #{contextual_cell.1} parent=0 // loop_pre_header
    _
  $region3: #{contextual_cell.1} parent=0 // loop_header
    %s10 = sphi 0, %s14
    %p11 = scmp.ge.s32.totalorder %s10, 4
    %s20 = sphi 0, %s22
    %s23 = sphi 0, %s20
    %s24 = sphi 0, %s23
    %s40 = sphi 0, %s24
    %s44 = sphi 0, %s44
    %s46 = sphi 0, %s44
    %s47 = sphi 0, %s46
    %s61 = sphi 0, %s47
    %s65 = sphi 0, %s65
    %s67 = sphi 0, %s65
    %s68 = sphi 0, %s67
    %s82 = sphi 0, %s68
    %s86 = sphi 0, %s86
    %s88 = sphi 0, %s86
    %s89 = sphi 0, %s88
    %s103 = sphi 0, %s89
    %s109 = sphi 0, %s111
    %s112 = sphi 0, %s109
    %s113 = sphi 0, %s112
    %s129 = sphi 0, %s113
  $region4: #{contextual_cell.1} parent=0 // loop_header_branch
    %13 = sbr.rel (%p11) target = $region8
  $region5: #{contextual_cell.1} parent=0 // loop_body
    %s15 = ssub.s32 %s10, 1
    %s16 = ssub.s32 %s10, 2
    %s17 = sadd.s32 %s10, 1
    %s18 = ssub.s32 %s10, %s17
    %p19 = scmp.eq.s32.totalorder %s18, 0
    %s21 = sadd.s32 %s20, 1
    %s22 = scalar_select %p19, %s20, %s21
    %p25 = pneg %p19
    %p26 = scmp.eq.s32.totalorder %s10, 1
    %p27 = por %p25, %p26
    %p28 = scmp.ne.s32.totalorder %s20, %s23
    %p29 = scmp.eq.s32.totalorder %s10, 0
    %p30 = por %p28, %p29
    %p31 = scmp.ne.s32.totalorder %s20, %s23
    %p32 = scmp.eq.s32.totalorder %s15, 1
    %p33 = por %p31, %p32
    %p34 = scmp.ne.s32.totalorder %s23, %s24
    %p35 = scmp.eq.s32.totalorder %s15, 0
    %p36 = por %p34, %p35
    %p37 = scmp.ne.s32.totalorder %s23, %s24
    %p38 = scmp.eq.s32.totalorder %s16, 1
    %p39 = por %p37, %p38
    %p41 = scmp.ne.s32.totalorder %s24, %s40
    %p42 = scmp.eq.s32.totalorder %s16, 0
    %p43 = por %p41, %p42
    %s45 = sadd.s32 %s44, 1
    %p48 = scmp.eq.s32.totalorder %s10, 1
    %p49 = scmp.ne.s32.totalorder %s44, %s46
    %p50 = scmp.eq.s32.totalorder %s10, 0
    %p51 = por %p49, %p50
    %p52 = scmp.ne.s32.totalorder %s44, %s46
    %p53 = scmp.eq.s32.totalorder %s15, 1
    %p54 = por %p52, %p53
    %p55 = scmp.ne.s32.totalorder %s46, %s47
    %p56 = scmp.eq.s32.totalorder %s15, 0
    %p57 = por %p55, %p56
    %p58 = scmp.ne.s32.totalorder %s46, %s47
    %p59 = scmp.eq.s32.totalorder %s16, 1
    %p60 = por %p58, %p59
    %p62 = scmp.ne.s32.totalorder %s47, %s61
    %p63 = scmp.eq.s32.totalorder %s16, 0
    %p64 = por %p62, %p63
    %s66 = sadd.s32 %s65, 1
    %p69 = scmp.eq.s32.totalorder %s10, 1
    %p70 = scmp.ne.s32.totalorder %s65, %s67
    %p71 = scmp.eq.s32.totalorder %s10, 0
    %p72 = por %p70, %p71
    %p73 = scmp.ne.s32.totalorder %s65, %s67
    %p74 = scmp.eq.s32.totalorder %s15, 1
    %p75 = por %p73, %p74
    %p76 = scmp.ne.s32.totalorder %s67, %s68
    %p77 = scmp.eq.s32.totalorder %s15, 0
    %p78 = por %p76, %p77
    %p79 = scmp.ne.s32.totalorder %s67, %s68
    %p80 = scmp.eq.s32.totalorder %s16, 1
    %p81 = por %p79, %p80
    %p83 = scmp.ne.s32.totalorder %s68, %s82
    %p84 = scmp.eq.s32.totalorder %s16, 0
    %p85 = por %p83, %p84
    %s87 = sadd.s32 %s86, 1
    %p90 = scmp.eq.s32.totalorder %s10, 1
    %p91 = scmp.ne.s32.totalorder %s86, %s88
    %p92 = scmp.eq.s32.totalorder %s10, 0
    %p93 = por %p91, %p92
    %p94 = scmp.ne.s32.totalorder %s86, %s88
    %p95 = scmp.eq.s32.totalorder %s15, 1
    %p96 = por %p94, %p95
    %p97 = scmp.ne.s32.totalorder %s88, %s89
    %p98 = scmp.eq.s32.totalorder %s15, 0
    %p99 = por %p97, %p98
    %p100 = scmp.ne.s32.totalorder %s88, %s89
    %p101 = scmp.eq.s32.totalorder %s16, 1
    %p102 = por %p100, %p101
    %p104 = scmp.ne.s32.totalorder %s89, %s103
    %p105 = scmp.eq.s32.totalorder %s16, 0
    %p106 = por %p104, %p105
    %s107 = ssub.s32 %s10, %s17
    %p108 = scmp.eq.s32.totalorder %s107, 0
    %s110 = sadd.s32 %s109, 1
    %s111 = scalar_select %p108, %s109, %s110
    %p114 = pneg %p108
    %p115 = scmp.eq.s32.totalorder %s10, 1
    %p116 = por %p114, %p115
    %p117 = scmp.ne.s32.totalorder %s109, %s112
    %p118 = scmp.eq.s32.totalorder %s10, 0
    %p119 = por %p117, %p118
    %p120 = scmp.ne.s32.totalorder %s109, %s112
    %p121 = scmp.eq.s32.totalorder %s15, 1
    %p122 = por %p120, %p121
    %p123 = scmp.ne.s32.totalorder %s112, %s113
    %p124 = scmp.eq.s32.totalorder %s15, 0
    %p125 = por %p123, %p124
    %p126 = scmp.ne.s32.totalorder %s112, %s113
    %p127 = scmp.eq.s32.totalorder %s16, 1
    %p128 = por %p126, %p127
    %p130 = scmp.ne.s32.totalorder %s113, %s129
    %p131 = scmp.eq.s32.totalorder %s16, 0
    %p132 = por %p130, %p131
    %p133 = scmp.le.s32.totalorder 1, %s10
    %p134 = scmp.lt.s32.totalorder %s10, 3
    %p135 = pnand %p133, %p134
    %p136 = pneg %p135
    // Predicated region
    $region9: #{contextual_cell.1} parent=5 // pred_check
      _
    $region10: #{contextual_cell.1} parent=5 // pred_check_branch
      %138 = sbr.rel (%p135) target = $region12
    $region11: #{contextual_cell.1} parent=5 // pred_region
      %s139 = ssub.s32 %s10, 1
      // Predicated region
      $region13: #{contextual_cell.1} parent=11 // pred_check
        %p140 = pneg %p57
      $region14: #{contextual_cell.1} parent=11 // pred_check_branch
        %142 = sbr.rel (%p140) target = $region16
      $region15: #{contextual_cell.1} parent=11 // pred_region
        _
      $region16: #{contextual_cell.1} parent=11 // pred_fallthru
        _
      // Predicated region
      $region17: #{contextual_cell.1} parent=11 // pred_check
        %p143 = pneg %p78
      $region18: #{contextual_cell.1} parent=11 // pred_check_branch
        %145 = sbr.rel (%p143) target = $region20
      $region19: #{contextual_cell.1} parent=11 // pred_region
        _
      $region20: #{contextual_cell.1} parent=11 // pred_fallthru
        _
      // Predicated region
      $region21: #{contextual_cell.1} parent=11 // pred_check
        %p146 = pneg %p99
      $region22: #{contextual_cell.1} parent=11 // pred_check_branch
        %148 = sbr.rel (%p146) target = $region24
      $region23: #{contextual_cell.1} parent=11 // pred_region
        _
      $region24: #{contextual_cell.1} parent=11 // pred_fallthru
        _
    $region12: #{contextual_cell.1} parent=5 // pred_fallthru
      _
    %p149 = scmp.lt.s32.totalorder %s10, 2
    // Predicated region
    $region25: #{contextual_cell.1} parent=5 // pred_check
      %p150 = pneg %p149
    $region26: #{contextual_cell.1} parent=5 // pred_check_branch
      %152 = sbr.rel (%p150) target = $region28
    $region27: #{contextual_cell.1} parent=5 // pred_region
      // Predicated region
      $region29: #{contextual_cell.1} parent=27 // pred_check
        %p153 = pneg %p30
      $region30: #{contextual_cell.1} parent=27 // pred_check_branch
        %155 = sbr.rel (%p153) target = $region32
      $region31: #{contextual_cell.1} parent=27 // pred_region
        %p156 = scmp.lt.s32.totalorder %s10, 1
        %s157 = scalar_select %p156, %s10, 1
        %s158 = smul.addr %s157, 3
        %s159 = smul.addr %s158, 4
        %s160 = scalar_lea.vmem %s0, %s159
      $region32: #{contextual_cell.1} parent=27 // pred_fallthru
        _
    $region28: #{contextual_cell.1} parent=5 // pred_fallthru
      _
    %p161 = scmp.le.s32.totalorder 1, %s10
    %p162 = scmp.lt.s32.totalorder %s10, 3
    %p163 = pnand %p161, %p162
    %p164 = pneg %p163
    // Predicated region
    $region33: #{contextual_cell.1} parent=5 // pred_check
      _
    $region34: #{contextual_cell.1} parent=5 // pred_check_branch
      %166 = sbr.rel (%p163) target = $region36
    $region35: #{contextual_cell.1} parent=5 // pred_region
      %s167 = ssub.s32 %s10, 1
      %p168 = scmp.lt.s32.totalorder %s15, 1
      %s169 = scalar_select %p168, %s15, 1
      %s170 = smul.addr %s169, 3
      %s171 = smul.addr %s170, 4
      %s172 = scalar_lea.vmem %s0, %s171
      %p173 = pneg %p36
      %p174 = pneg %p33
      %p175 = pneg %p57
      %p176 = pneg %p54
      %p177 = pneg %p78
      %p178 = pneg %p75
      %p179 = pneg %p99
      %p180 = pneg %p96
      %p181 = pneg %p125
      %p182 = pneg %p122
      %p183 = scmp.lt.s32.totalorder %s15, 1
      %s184 = scalar_select %p183, %s15, 1
      %s185 = smul.addr %s184, 2
      %s186 = smul.addr %s185, 8
      %s187 = scalar_lea.vmem %s4, %s186
      %p188 = scmp.lt.s32.totalorder %s15, 1
      %s189 = scalar_select %p188, %s15, 1
      %s190 = smul.addr %s189, 3
      %s191 = smul.addr %s190, 4
      %s192 = scalar_lea.vmem %s0, %s191
      %p193 = scmp.lt.s32.totalorder %s15, 1
      %s194 = scalar_select %p193, %s15, 1
      %s195 = smul.addr %s194, 2
      %s196 = smul.addr %s195, 8
      %s197 = scalar_lea.vmem %s4, %s196
      %v199 = vld [vmem:[%s192] sm:$0xf]
      %v200 = vld [vmem:[%s192 + $0x4] sm:$0xf]
      %v201 = vld [vmem:[%s192 + $0x8] sm:$0x1]
      %s202 = scalar_lea.vmem %s1, 36
      %v203 = vld [vmem:[%s202] sm:$0xf]
      %v204 = vld [vmem:[%s202 + $0x4] sm:$0xf]
      %v205 = vld [vmem:[%s202 + $0x8] sm:$0xf]
      %v206 = vld [vmem:[%s202 + $0xc] sm:$0xf]
      %v207 = vld [vmem:[%s202 + $0x10] sm:$0xf]
      %v208 = vld [vmem:[%s202 + $0x14] sm:$0xf]
      %v209 = vld [vmem:[%s202 + $0x18] sm:$0xf]
      %v210 = vld [vmem:[%s202 + $0x1c] sm:$0xf]
      %v211 = vld [vmem:[%s202 + $0x20] sm:$0xf]
      %v212 = vld [vmem:[%s1] sm:$0xf]
      %v213 = vld [vmem:[%s1 + $0x4] sm:$0xf]
      %v214 = vld [vmem:[%s1 + $0x8] sm:$0xf]
      %v215 = vld [vmem:[%s1 + $0xc] sm:$0xf]
      %v216 = vld [vmem:[%s1 + $0x10] sm:$0xf]
      %v217 = vld [vmem:[%s1 + $0x14] sm:$0xf]
      %v218 = vld [vmem:[%s1 + $0x18] sm:$0xf]
      %v219 = vld [vmem:[%s1 + $0x1c] sm:$0xf]
      %v220 = vld [vmem:[%s1 + $0x20] sm:$0xf]
      %v223 = vunpack.c.l.b16 %v199
      %v224 = vunpack.c.l.b16 %v200
      %v225 = vpack.c.b16 %v224, %v223
      %v235 = vunpack.c.l.b16 %v212
      %v236 = vunpack.c.l.b16 %v213
      %v237 = vunpack.c.l.b16 %v214
      %v238 = vunpack.c.l.b16 %v215
      %v239 = vunpack.c.l.b16 %v216
      %v240 = vunpack.c.l.b16 %v217
      %v241 = vunpack.c.l.b16 %v218
      %v242 = vunpack.c.l.b16 %v219
      %v243 = vunpack.c.l.b16 %v220
      %v244 = vpack.c.b16 %v236, %v235
      %v245 = vpack.c.b16 %v238, %v237
      %v246 = vpack.c.b16 %v240, %v239
      %v247 = vpack.c.b16 %v242, %v241
      %v248 = vpack.c.b16 %v243, %v243
      %vm253 = vcmask 588800
      %v255 = vsel %vm253, %v225, 0
      %vm257 = vcmask 1043456
      %v259 = vsel %vm257, %v248, 0
      %261 = vmatpush.bf16.msra.mxu0 0
      %262 = vmatpush.bf16.msra.mxu0 0
      %263 = vmatpush.bf16.msra.mxu0 0
      %264 = vmatpush.bf16.msra.mxu0 %v259
      %265 = vmatpush.bf16.msra.mxu0 %v247
      %266 = vmatpush.bf16.msra.mxu0 %v246
      %267 = vmatpush.bf16.msra.mxu0 %v245
      %268 = vmatpush.bf16.msra.mxu0 %v244
      %269 = vmatmul.bf16.gmra.mxu0 %v255
      %v270 = vpop.f32.mrf.mxu0
      %v271 = vadd.f32 0.0, %v270
      %v272 = vpop.f32.mrf.mxu0
      %v273 = vadd.f32 0.0, %v272
      %274 = vdwg.mxu0
      %v276 = vunpack.c.l.b16 %v201
      %v277 = vpack.c.b16 %v276, %v276
      %vm278 = vsmask.f32 7424
      %v279 = vshrl.u32 %v225, 16
      %v281 = vshll.u32 %v225, 16
      %v283 = vrot.slane %v281, 1
      %v284 = vor.u32 %v279, %v283
      %v286 = vshll.u32 %v277, 16
      %v288 = vrot.slane %v286, 1
      %v289 = vsel %vm278, %v284, %v288
      %v299 = vunpack.c.l.b16 %v203
      %v300 = vunpack.c.l.b16 %v204
      %v301 = vunpack.c.l.b16 %v205
      %v302 = vunpack.c.l.b16 %v206
      %v303 = vunpack.c.l.b16 %v207
      %v304 = vunpack.c.l.b16 %v208
      %v305 = vunpack.c.l.b16 %v209
      %v306 = vunpack.c.l.b16 %v210
      %v307 = vunpack.c.l.b16 %v211
      %v308 = vpack.c.b16 %v300, %v299
      %v309 = vpack.c.b16 %v302, %v301
      %v310 = vpack.c.b16 %v304, %v303
      %v311 = vpack.c.b16 %v306, %v305
      %v312 = vpack.c.b16 %v307, %v307
      %v318 = vsel %vm253, %v289, 0
      %v321 = vsel %vm257, %v312, 0
      %323 = vmatpush.bf16.msra.mxu0 0
      %324 = vmatpush.bf16.msra.mxu0 0
      %325 = vmatpush.bf16.msra.mxu0 0
      %326 = vmatpush.bf16.msra.mxu0 %v321
      %327 = vmatpush.bf16.msra.mxu0 %v311
      %328 = vmatpush.bf16.msra.mxu0 %v310
      %329 = vmatpush.bf16.msra.mxu0 %v309
      %330 = vmatpush.bf16.msra.mxu0 %v308
      %331 = vmatmul.bf16.gmra.mxu0 %v318
      %v332 = vpop.f32.mrf.mxu0
      %v333 = vadd.f32 %v271, %v332
      %v334 = vpop.f32.mrf.mxu0
      %v335 = vadd.f32 %v273, %v334
      %336 = vdwg.mxu0
      %v337 = vld [vmem:[%s192] sm:$0xe]
      %s338 = scalar_lea.vmem %s1, 72
      %v339 = vld [vmem:[%s338] sm:$0xf]
      %v340 = vld [vmem:[%s338 + $0x4] sm:$0xf]
      %v341 = vld [vmem:[%s338 + $0x8] sm:$0xf]
      %v342 = vld [vmem:[%s338 + $0xc] sm:$0xf]
      %v343 = vld [vmem:[%s338 + $0x10] sm:$0xf]
      %v344 = vld [vmem:[%s338 + $0x14] sm:$0xf]
      %v345 = vld [vmem:[%s338 + $0x18] sm:$0xf]
      %v346 = vld [vmem:[%s338 + $0x1c] sm:$0xf]
      %v347 = vld [vmem:[%s338 + $0x20] sm:$0xf]
      %v349 = vunpack.c.l.b16 %v337
      %v350 = vpack.c.b16 %v224, %v349
      %vm351 = vcmask 1046528
      %v352 = vrot.slane %v350, 1
      %v353 = vrot.slane %v277, 1
      %v354 = vsel %vm351, %v352, %v353
      %v364 = vunpack.c.l.b16 %v339
      %v365 = vunpack.c.l.b16 %v340
      %v366 = vunpack.c.l.b16 %v341
      %v367 = vunpack.c.l.b16 %v342
      %v368 = vunpack.c.l.b16 %v343
      %v369 = vunpack.c.l.b16 %v344
      %v370 = vunpack.c.l.b16 %v345
      %v371 = vunpack.c.l.b16 %v346
      %v372 = vunpack.c.l.b16 %v347
      %v373 = vpack.c.b16 %v365, %v364
      %v374 = vpack.c.b16 %v367, %v366
      %v375 = vpack.c.b16 %v369, %v368
      %v376 = vpack.c.b16 %v371, %v370
      %v377 = vpack.c.b16 %v372, %v372
      %v383 = vsel %vm253, %v354, 0
      %v386 = vsel %vm257, %v377, 0
      %388 = vmatpush.bf16.msra.mxu0 0
      %389 = vmatpush.bf16.msra.mxu0 0
      %390 = vmatpush.bf16.msra.mxu0 0
      %391 = vmatpush.bf16.msra.mxu0 %v386
      %392 = vmatpush.bf16.msra.mxu0 %v376
      %393 = vmatpush.bf16.msra.mxu0 %v375
      %394 = vmatpush.bf16.msra.mxu0 %v374
      %395 = vmatpush.bf16.msra.mxu0 %v373
      %396 = vmatmul.bf16.gmra.mxu0 %v383
      %v397 = vpop.f32.mrf.mxu0
      %v398 = vadd.f32 0.0, %v397
      %v399 = vpop.f32.mrf.mxu0
      %v400 = vadd.f32 0.0, %v399
      %401 = vdwg.mxu0
      %v402 = vadd.f32 %v333, %v398
      %v403 = vadd.f32 %v335, %v400
      %v404 = vmax.f32 %v402, 0.0
      %v405 = vmax.f32 %v403, 0.0
      %v406 = vld [vmem:[%s2] sm:$0xf]
      %v407 = vld [vmem:[%s2 + $0x4] sm:$0xf]
      %v408 = vld [vmem:[%s2 + $0x8] sm:$0xf]
      %v409 = vld [vmem:[%s2 + $0xc] sm:$0xf]
      %v410 = vld [vmem:[%s2 + $0x10] sm:$0xf]
      %v411 = vld [vmem:[%s2 + $0x14] sm:$0xf]
      %v412 = vld [vmem:[%s2 + $0x18] sm:$0xf]
      %v413 = vld [vmem:[%s2 + $0x1c] sm:$0xf]
      %v414 = vld [vmem:[%s2 + $0x20] sm:$0xf]
      %v424 = vunpack.c.l.b16 %v406
      %v425 = vunpack.c.l.b16 %v407
      %v426 = vunpack.c.l.b16 %v408
      %v427 = vunpack.c.l.b16 %v409
      %v428 = vunpack.c.l.b16 %v410
      %v429 = vunpack.c.l.b16 %v411
      %v430 = vunpack.c.l.b16 %v412
      %v431 = vunpack.c.l.b16 %v413
      %v432 = vunpack.c.l.b16 %v414
      %v433 = vpack.c.b16 %v425, %v424
      %v434 = vpack.c.b16 %v427, %v426
      %v435 = vpack.c.b16 %v429, %v428
      %v436 = vpack.c.b16 %v431, %v430
      %v437 = vpack.c.b16 %v432, %v432
      %v443 = vsel %vm257, %v437, 0
      %445 = vmatpush.bf16.msra.mxu0 0
      %446 = vmatpush.bf16.msra.mxu0 0
      %447 = vmatpush.bf16.msra.mxu0 0
      %448 = vmatpush.bf16.msra.mxu0 %v443
      %449 = vmatpush.bf16.msra.mxu0 %v436
      %450 = vmatpush.bf16.msra.mxu0 %v435
      %451 = vmatpush.bf16.msra.mxu0 %v434
      %452 = vmatpush.bf16.msra.mxu0 %v433
      %453 = vmatmul.bf16.gmra.mxu0 %v318
      %v454 = vpop.f32.mrf.mxu0
      %v455 = vadd.f32 0.0, %v454
      %v456 = vpop.f32.mrf.mxu0
      %v457 = vadd.f32 0.0, %v456
      %458 = vdwg.mxu0
      %v459 = vmax.f32 %v455, 0.0
      %v460 = vmax.f32 %v457, 0.0
      %vm461 = vcmask 523264
      %v462 = vsel %vm461, %v459, 0.0
      %v463 = vsel %vm461, %v460, 0.0
      %v464 = vadd.f32 %v462, %v463
      %v465 = vrot.slane %v464, 4
      %v466 = vadd.f32 %v464, %v465
      %v467 = vrot.slane %v466, 2
      %v468 = vadd.f32 %v466, %v467
      %v469 = vrot.slane %v468, 1
      %v470 = vadd.f32 %v468, %v469
      %v471 = vmul.f32 %v470, 0.00390625
      %v472 = vld [vmem:[%s3] sm:$0xff]
      %v473 = vld [vmem:[%s3 + $0x8] sm:$0xff]
      %v474 = vld [vmem:[%s3 + $0x10] sm:$0xff]
      %v475 = vld [vmem:[%s3 + $0x18] sm:$0xff]
      %v476 = vld [vmem:[%s3 + $0x20] sm:$0xff]
      %v477 = vld [vmem:[%s3 + $0x28] sm:$0xff]
      %v478 = vld [vmem:[%s3 + $0x30] sm:$0xff]
      %v479 = vld [vmem:[%s3 + $0x38] sm:$0xff]
      %v481 = vsel %vm461, %v471, 0
      %483 = vmatpush.msra.mxu0 0.0
      %484 = vmatpush.msra.mxu0 0.0
      %485 = vmatpush.msra.mxu0 0.0
      %486 = vmatpush.msra.mxu0 0.0
      %487 = vmatpush.msra.mxu0 0.0
      %488 = vmatpush.msra.mxu0 0.0
      %489 = vmatpush.msra.mxu0 0.0
      %490 = vmatpush.msra.mxu0 0.0
      %491 = vmatpush.msra.mxu0 %v479
      %492 = vmatpush.msra.mxu0 %v478
      %493 = vmatpush.msra.mxu0 %v477
      %494 = vmatpush.msra.mxu0 %v476
      %495 = vmatpush.msra.mxu0 %v475
      %496 = vmatpush.msra.mxu0 %v474
      %497 = vmatpush.msra.mxu0 %v473
      %498 = vmatpush.msra.mxu0 %v472
      %499 = vmatmul.f32.gmra.mxu0 %v481
      %v500 = vpop.f32.mrf.mxu0
      %v501 = vadd.f32 0.0, %v500
      %502 = vdwg.mxu0
      %v503 = vmax.f32 %v501, 0.0
      %v504 = vperm.slane %v503, 0
      %v505 = vadd.f32 %v404, %v504
      %v506 = vadd.f32 %v405, %v504
      %507 = vst.msk [vmem:[%s197] sm:$0xff] %vm461, %v505
      %508 = vst.msk [vmem:[%s197 + $0x8] sm:$0xff] %vm461, %v506
      %p509 = scmp.lt.s32.totalorder %s15, 1
      %s510 = scalar_select %p509, %s15, 1
      %s511 = smul.addr %s510, 2
      %s512 = smul.addr %s511, 8
      %s513 = scalar_lea.vmem %s4, %s512
      // Predicated region
      $region37: #{contextual_cell.1} parent=35 // pred_check
        %p514 = pneg %p122
      $region38: #{contextual_cell.1} parent=35 // pred_check_branch
        %516 = sbr.rel (%p514) target = $region40
      $region39: #{contextual_cell.1} parent=35 // pred_region
        _
      $region40: #{contextual_cell.1} parent=35 // pred_fallthru
        _
    $region36: #{contextual_cell.1} parent=5 // pred_fallthru
      _
    %p517 = scmp.le.s32.totalorder 2, %s10
    // Predicated region
    $region41: #{contextual_cell.1} parent=5 // pred_check
      %p518 = pneg %p517
    $region42: #{contextual_cell.1} parent=5 // pred_check_branch
      %520 = sbr.rel (%p518) target = $region44
    $region43: #{contextual_cell.1} parent=5 // pred_region
      %s521 = ssub.s32 %s10, 2
      // Predicated region
      $region45: #{contextual_cell.1} parent=43 // pred_check
        %p522 = pneg %p128
      $region46: #{contextual_cell.1} parent=43 // pred_check_branch
        %524 = sbr.rel (%p522) target = $region48
      $region47: #{contextual_cell.1} parent=43 // pred_region
        %p525 = scmp.lt.s32.totalorder %s16, 1
        %s526 = scalar_select %p525, %s16, 1
        %s527 = smul.addr %s526, 2
        %s528 = smul.addr %s527, 8
        %s529 = scalar_lea.vmem %s4, %s528
      $region48: #{contextual_cell.1} parent=43 // pred_fallthru
        _
    $region44: #{contextual_cell.1} parent=5 // pred_fallthru
      _
  $region6: #{contextual_cell.1} parent=0 // loop_footer
    %s14 = sadd.s32 1, %s10
  $region7: #{contextual_cell.1} parent=0 // loop_footer_branch
    %9 = sbr.rel target = $region3
  $region8: #{contextual_cell.1} parent=0 // loop_exit
    _

</llo_original>
